<compile_context>
chip_gen: v5e
topology: v5e:2x2
jax: 0.10.0
libtpu: 0.0.40
codegen_flags: <defaults>
</compile_context>

<pallas_src>
import functools

import jax
import jax.numpy as jnp
from jax.experimental import pallas as pl
from jax.experimental.pallas import tpu as pltpu

_VMEM = pl.BlockSpec(memory_space=pltpu.MemorySpace.VMEM)

C1 = 64            # channels after conv1 / through layer1
K1 = 3 * 7 * 7     # conv1 im2col depth (147)
K1P = 152          # padded to a multiple of 8 for an aligned sublane layout


# ---------------------------------------------------------------------------
# Kernel A: conv1 (as matmul) + folded BN + ReLU + MaxPool 3x3/s2/p1, per image
# ---------------------------------------------------------------------------
def _conv1_pool_kernel(p_ref, w_ref, b_ref, o_ref, pad_ref, row_ref):
    # p_ref:   (64, K1P)   bf16  im2col patches for the 8x8 conv1 output positions
    # w_ref:   (K1P, 64)   bf16  conv1 weight (HWIO flattened) with BN scale folded in
    # b_ref:   (1, 64)     f32   folded BN shift
    # o_ref:   (6, 6, 64)  bf16  pooled 4x4 map written inside a zero border
    # pad_ref: (10, 10, 64) f32  scratch: zero-padded conv output (post-ReLU >= 0, so a
    #                            0-pad is equivalent to the -inf pad of MaxPool2d(p=1))
    # row_ref: (10, 64)    f32   scratch for one row-pooled stripe
    y = jnp.dot(p_ref[...], w_ref[...], preferred_element_type=jnp.float32)
    y = jnp.maximum(y + b_ref[...], 0.0)                      # (64, 64) = (8*8, C)

    pad_ref[...] = jnp.zeros_like(pad_ref)
    pad_ref[1:9, 1:9, :] = y.reshape(8, 8, C1)

    o_ref[...] = jnp.zeros_like(o_ref)                        # zero border for next stage
    for r in range(4):                                        # static unroll
        # pool over the 3 rows of the window (leading-axis slab reads, VPU max)
        rm = jnp.maximum(jnp.maximum(pad_ref[2 * r], pad_ref[2 * r + 1]),
                         pad_ref[2 * r + 2])                  # (10, C)
        row_ref[...] = rm
        # pool over the 3 columns via stride-2 sublane reads (strided load)
        cm = jnp.maximum(
            jnp.maximum(row_ref[pl.ds(0, 4, stride=2), :],
                        row_ref[pl.ds(1, 4, stride=2), :]),
            row_ref[pl.ds(2, 4, stride=2), :])                # (4, C)
        o_ref[1 + r, 1:5, :] = cm.astype(o_ref.dtype)


# ---------------------------------------------------------------------------
# Kernel B: resnet18.layer1 (two BasicBlocks) fully fused, per image
# ---------------------------------------------------------------------------
def _layer1_kernel(x_ref, w1a_ref, b1a_ref, w1b_ref, b1b_ref,
                   w2a_ref, b2a_ref, w2b_ref, b2b_ref, o_ref, t1_ref, t2_ref):
    # x_ref / o_ref / t*_ref: (6, 6, 64) zero-border padded NHWC tiles (bf16)
    # w*_ref: (9, 64, 64) bf16 conv weights (k = 3*dr+dc, IC x OC, BN scale folded)
    # b*_ref: (1, 64) f32 folded BN shifts

    def conv3x3(src_ref, w_ref):
        # in-kernel im2col: 9 shifted 4x4 windows of the padded tile, 9 accumulating dots
        acc = jnp.zeros((16, C1), jnp.float32)
        for k in range(9):
            dr, dc = k // 3, k % 3
            patch = src_ref[dr:dr + 4, dc:dc + 4, :].reshape(16, C1)
            acc += jnp.dot(patch, w_ref[k], preferred_element_type=jnp.float32)
        return acc                                            # (16, 64) f32

    def write_tile(dst_ref, val):
        dst_ref[...] = jnp.zeros_like(dst_ref)
        dst_ref[1:5, 1:5, :] = val.reshape(4, 4, C1).astype(dst_ref.dtype)

    def basic_block(src_ref, wa, ba, wb, bb, tmp_ref, dst_ref):
        res = src_ref[1:5, 1:5, :].reshape(16, C1).astype(jnp.float32)
        h = jnp.maximum(conv3x3(src_ref, wa) + ba[...], 0.0)          # conv1+bn1+relu
        write_tile(tmp_ref, h)
        out = jnp.maximum(conv3x3(tmp_ref, wb) + bb[...] + res, 0.0)  # conv2+bn2+res+relu
        write_tile(dst_ref, out)

    basic_block(x_ref, w1a_ref, b1a_ref, w1b_ref, b1b_ref, t1_ref, t2_ref)
    basic_block(t2_ref, w2a_ref, b2a_ref, w2b_ref, b2b_ref, t1_ref, o_ref)


# ---------------------------------------------------------------------------
# Kernel C: global avg pool + MLP head (whole batch, single launch)
# ---------------------------------------------------------------------------
def _head_kernel(x_ref, *rest, n_hidden):
    # x_ref: (N, 6, 6, 64) bf16 padded tiles (zero border => sum == interior sum)
    # rest:  [w_h0, b_h0, ..., w_pred, b_pred, o_ref];  1/16 and BN1d already folded in.
    o_ref = rest[-1]
    wb = rest[:-1]
    x = x_ref[...].astype(jnp.float32)
    s = jnp.sum(x, axis=1)                    # (N, 6, 64)
    s = jnp.sum(s, axis=1)                    # (N, 64) spatial sum (== 16 * mean)
    h = s
    for i in range(n_hidden):
        w = wb[2 * i][...]
        b = wb[2 * i + 1][...]
        h = jnp.maximum(
            jnp.dot(h.astype(jnp.bfloat16), w, preferred_element_type=jnp.float32) + b,
            0.0)
    wp = wb[2 * n_hidden][...]
    bp = wb[2 * n_hidden + 1][...]
    out = jnp.dot(h.astype(jnp.bfloat16), wp, preferred_element_type=jnp.float32) + bp
    o_ref[...] = out.astype(o_ref.dtype)


# ---------------------------------------------------------------------------
# JAX-level glue (layout plumbing + trace-time weight folding, no hot-path compute)
# ---------------------------------------------------------------------------
def _conv1_patches(x_nhwc):
    """im2col for the 7x7/s2/p3 stem conv; feature order (kh, kw, ic); K padded to 152."""
    n = x_nhwc.shape[0]
    xp = jnp.pad(x_nhwc, ((0, 0), (3, 3), (3, 3), (0, 0)))
    cols = []
    for i in range(7):
        for j in range(7):
            cols.append(xp[:, i:i + 16:2, j:j + 16:2, :])     # (N, 8, 8, 3)
    p = jnp.stack(cols, axis=3).reshape(n, 64, K1)            # (N, 64, 147)
    p = jnp.pad(p, ((0, 0), (0, 0), (0, K1P - K1)))
    return p.astype(jnp.bfloat16)


def sresnet_forward(params, x_nchw):
    p = params
    n = x_nchw.shape[0]
    x = jnp.transpose(x_nchw, (0, 2, 3, 1)).astype(jnp.float32)   # NCHW -> NHWC once

    # ---- trace-time folding: BN scale -> weights, avg-pool 1/16 & BN1d -> FC weights ----
    w1 = jnp.transpose(p['conv1_w'], (2, 3, 1, 0)).reshape(K1, C1) * p['bn1_scale'][None, :]
    w1 = jnp.pad(w1, ((0, K1P - K1), (0, 0))).astype(jnp.bfloat16)
    b1 = p['bn1_shift'].reshape(1, C1).astype(jnp.float32)

    blk_w, blk_b = [], []
    for blk in p['blocks']:
        for cw, sc, sh in ((blk['conv1_w'], blk['bn1_scale'], blk['bn1_shift']),
                           (blk['conv2_w'], blk['bn2_scale'], blk['bn2_shift'])):
            wm = jnp.transpose(cw, (2, 3, 1, 0)).reshape(9, C1, C1) * sc[None, None, :]
            blk_w.append(wm.astype(jnp.bfloat16))
            blk_b.append(sh.reshape(1, C1).astype(jnp.float32))

    head_args = []
    pend_scale = jnp.full((C1,), 1.0 / 16.0, jnp.float32)     # 4x4 avg pool
    pend_shift = jnp.zeros((C1,), jnp.float32)
    for layer in p['hidden']:
        w = layer['w'] * pend_scale[:, None]
        b = pend_shift @ layer['w'] + layer['b']
        head_args += [w.astype(jnp.bfloat16), b.reshape(1, -1).astype(jnp.float32)]
        pend_scale, pend_shift = layer['bn_scale'], layer['bn_shift']
    wp = p['pred_w'] * pend_scale[:, None]
    bp = pend_shift @ p['pred_w'] + p['pred_b']
    head_args += [wp.astype(jnp.bfloat16), bp.reshape(1, -1).astype(jnp.float32)]
    n_hidden = len(p['hidden'])
    out_dim = p['pred_w'].shape[1]

    # ---- kernel A: conv1 + BN + ReLU + maxpool ------------------------------------------
    patches = _conv1_patches(x)                               # (N, 64, 152) bf16
    flops_a = 2 * n * 64 * K1P * C1
    bytes_a = patches.size * 2 + w1.size * 2 + b1.size * 4 + n * 6 * 6 * C1 * 2
    tiles = pl.pallas_call(
        _conv1_pool_kernel,
        grid=(n,),
        in_specs=[
            pl.BlockSpec((None, 64, K1P), lambda i: (i, 0, 0)),
            pl.BlockSpec((K1P, C1), lambda i: (0, 0)),
            pl.BlockSpec((1, C1), lambda i: (0, 0)),
        ],
        out_specs=pl.BlockSpec((None, 6, 6, C1), lambda i: (i, 0, 0, 0)),
        out_shape=jax.ShapeDtypeStruct((n, 6, 6, C1), jnp.bfloat16),
        scratch_shapes=[pltpu.VMEM((10, 10, C1), jnp.float32),
                        pltpu.VMEM((10, C1), jnp.float32)],
        compiler_params=pltpu.CompilerParams(
            dimension_semantics=("parallel",),
            vmem_limit_bytes=32 * 1024 * 1024),
        cost_estimate=pl.CostEstimate(flops=flops_a, transcendentals=0,
                                      bytes_accessed=bytes_a),
    )(patches, w1, b1)

    # ---- kernel B: layer1 (2 BasicBlocks) ------------------------------------------------
    flops_b = 2 * n * 4 * 16 * (9 * C1) * C1
    bytes_b = 2 * n * 6 * 6 * C1 * 2 + sum(w.size * 2 for w in blk_w) + 4 * C1 * 4
    w_specs = []
    for _ in range(4):
        w_specs += [pl.BlockSpec((9, C1, C1), lambda i: (0, 0, 0)),
                    pl.BlockSpec((1, C1), lambda i: (0, 0))]
    tiles = pl.pallas_call(
        _layer1_kernel,
        grid=(n,),
        in_specs=[pl.BlockSpec((None, 6, 6, C1), lambda i: (i, 0, 0, 0))] + w_specs,
        out_specs=pl.BlockSpec((None, 6, 6, C1), lambda i: (i, 0, 0, 0)),
        out_shape=jax.ShapeDtypeStruct((n, 6, 6, C1), jnp.bfloat16),
        scratch_shapes=[pltpu.VMEM((6, 6, C1), jnp.bfloat16),
                        pltpu.VMEM((6, 6, C1), jnp.bfloat16)],
        compiler_params=pltpu.CompilerParams(
            dimension_semantics=("parallel",),
            vmem_limit_bytes=32 * 1024 * 1024),
        cost_estimate=pl.CostEstimate(flops=flops_b, transcendentals=0,
                                      bytes_accessed=bytes_b),
    )(tiles, blk_w[0], blk_b[0], blk_w[1], blk_b[1],
      blk_w[2], blk_b[2], blk_w[3], blk_b[3])

    # ---- kernel C: global avg pool + MLP head --------------------------------------------
    out = pl.pallas_call(
        functools.partial(_head_kernel, n_hidden=n_hidden),
        in_specs=[_VMEM] * (1 + len(head_args)),
        out_specs=_VMEM,
        out_shape=jax.ShapeDtypeStruct((n, out_dim), jnp.float32),
    )(tiles, *head_args)
    return out


# ---------------------------------------------------------------------------
# Deterministic synthetic parameter init (no pretrained checkpoint)
# ---------------------------------------------------------------------------
def init_params(key, h_nodes=(32,), out_dim=10):
    keys = iter(jax.random.split(key, 64))
    nk = lambda: next(keys)
    eps = 1e-5

    def conv_w(oc, ic, k):
        fan_in = ic * k * k
        return jax.random.normal(nk(), (oc, ic, k, k), jnp.float32) * (2.0 / fan_in) ** 0.5

    def bn_fold(c):
        gamma = 1.0 + 0.1 * jax.random.normal(nk(), (c,), jnp.float32)
        beta = 0.1 * jax.random.normal(nk(), (c,), jnp.float32)
        mean = 0.1 * jax.random.normal(nk(), (c,), jnp.float32)
        var = jnp.abs(1.0 + 0.1 * jax.random.normal(nk(), (c,), jnp.float32))
        scale = gamma / jnp.sqrt(var + eps)
        shift = beta - mean * scale
        return scale, shift

    def linear(inp, out):
        bound = 1.0 / (inp ** 0.5)
        w = jax.random.uniform(nk(), (inp, out), jnp.float32, -bound, bound)
        b = jax.random.uniform(nk(), (out,), jnp.float32, -bound, bound)
        return w, b

    params = {}
    params['conv1_w'] = conv_w(64, 3, 7)
    params['bn1_scale'], params['bn1_shift'] = bn_fold(64)

    blocks = []
    for _ in range(2):                                        # resnet18 layer1: 2 BasicBlocks
        blk = {}
        blk['conv1_w'] = conv_w(64, 64, 3)
        blk['bn1_scale'], blk['bn1_shift'] = bn_fold(64)
        blk['conv2_w'] = conv_w(64, 64, 3)
        blk['bn2_scale'], blk['bn2_shift'] = bn_fold(64)
        blocks.append(blk)
    params['blocks'] = blocks

    dims = [64] + list(h_nodes)
    hidden = []
    for i in range(len(dims) - 1):
        w, b = linear(dims[i], dims[i + 1])
        bn_s, bn_b = bn_fold(dims[i + 1])
        hidden.append({'w': w, 'b': b, 'bn_scale': bn_s, 'bn_shift': bn_b})
    params['hidden'] = hidden

    params['pred_w'], params['pred_b'] = linear(dims[-1], out_dim)
    return params


# ---------------------------------------------------------------------------
if __name__ == "__main__":
    key = jax.random.PRNGKey(0)
    pkey, xkey = jax.random.split(key)
    params = init_params(pkey, h_nodes=(32,), out_dim=10)
    x = jax.random.normal(xkey, (2, 3, 16, 16), jnp.float32)   # NCHW, like PyTorch

    fwd = jax.jit(sresnet_forward)
    out = jax.block_until_ready(fwd(params, x))
    assert out.shape == (2, 10) and out.dtype == jnp.float32
    assert bool(jnp.all(jnp.isfinite(out)))
    print("KERNEL_OK")
</pallas_src>

<mosaic_0001>
module attributes {stable_mosaic.version = 11 : i64} {
  func.func @_conv1_pool_kernel(%arg0: i32, %arg1: memref<1x64x152xbf16, #tpu.memory_space<vmem>>, %arg2: memref<152x64xbf16, #tpu.memory_space<vmem>>, %arg3: memref<1x64xf32, #tpu.memory_space<vmem>>, %arg4: memref<1x6x6x64xbf16, #tpu.memory_space<vmem>>, %arg5: memref<10x10x64xf32, #tpu.memory_space<vmem>>, %arg6: memref<10x64xf32, #tpu.memory_space<vmem>>) attributes {dimension_semantics = [#tpu.dimension_semantics<parallel>], iteration_bounds = array<i64: 2>, scalar_prefetch = 0 : i64, scratch_operands = 2 : i64, tpu.core_type = #tpu.core_type<tc>, window_params = [{transform_indices = @transform_0, window_bounds = array<i64: 1, 64, 152>}, {pipeline_mode = #tpu.pipeline_mode<synchronous>, transform_indices = @transform_1, window_bounds = array<i64: 152, 64>}, {pipeline_mode = #tpu.pipeline_mode<synchronous>, transform_indices = @transform_2, window_bounds = array<i64: 1, 64>}, {transform_indices = @transform_3, window_bounds = array<i64: 1, 6, 6, 64>}]} {
    %c0 = arith.constant 0 : index
    %c0_0 = arith.constant 0 : index
    %c0_1 = arith.constant 0 : index
    %0 = vector.load %arg1[%c0, %c0_0, %c0_1] : memref<1x64x152xbf16, #tpu.memory_space<vmem>>, vector<1x64x152xbf16>
    %1 = vector.shape_cast %0 : vector<1x64x152xbf16> to vector<64x152xbf16>
    %c0_2 = arith.constant 0 : index
    %c0_3 = arith.constant 0 : index
    %2 = vector.load %arg2[%c0_2, %c0_3] : memref<152x64xbf16, #tpu.memory_space<vmem>>, vector<152x64xbf16>
    %cst = arith.constant dense<0.000000e+00> : vector<64x64xf32>
    %3 = tpu.matmul %1, %2, %cst {dimension_numbers = #tpu.dot_dimension_numbers<[1], [0], [0], [1], [0, 0, 1, 1], [], []>} : vector<64x152xbf16>, vector<152x64xbf16>, vector<64x64xf32> -> vector<64x64xf32>
    %c0_4 = arith.constant 0 : index
    %c0_5 = arith.constant 0 : index
    %4 = vector.load %arg3[%c0_4, %c0_5] : memref<1x64xf32, #tpu.memory_space<vmem>>, vector<1x64xf32>
    %5 = vector.broadcast %4 : vector<1x64xf32> to vector<64x64xf32>
    %6 = arith.addf %3, %5 : vector<64x64xf32>
    %cst_6 = arith.constant 0.000000e+00 : f32
    %7 = vector.broadcast %cst_6 : f32 to vector<64x64xf32>
    %8 = arith.maximumf %6, %7 : vector<64x64xf32>
    %cst_7 = arith.constant 0.000000e+00 : f32
    %9 = vector.broadcast %cst_7 : f32 to vector<10x10x64xf32>
    %c0_8 = arith.constant 0 : index
    %c0_9 = arith.constant 0 : index
    %c0_10 = arith.constant 0 : index
    %10 = vector.load %arg5[%c0_8, %c0_9, %c0_10] : memref<10x10x64xf32, #tpu.memory_space<vmem>>, vector<10x10x64xf32>
    tpu.vector_store %arg5[%c0_8, %c0_9, %c0_10], %9 {strides = array<i32>} : memref<10x10x64xf32, #tpu.memory_space<vmem>>, vector<10x10x64xf32>,
    %11 = vector.shape_cast %8 : vector<64x64xf32> to vector<8x8x64xf32>
    %c1 = arith.constant 1 : index
    %c1_11 = arith.constant 1 : index
    %c0_12 = arith.constant 0 : index
    %12 = vector.load %arg5[%c1, %c1_11, %c0_12] : memref<10x10x64xf32, #tpu.memory_space<vmem>>, vector<8x8x64xf32>
    tpu.vector_store %arg5[%c1, %c1_11, %c0_12], %11 {strides = array<i32>} : memref<10x10x64xf32, #tpu.memory_space<vmem>>, vector<8x8x64xf32>,
    %cst_13 = arith.constant 0.000000e+00 : bf16
    %13 = vector.broadcast %cst_13 : bf16 to vector<6x6x64xbf16>
    %c0_14 = arith.constant 0 : index
    %c0_15 = arith.constant 0 : index
    %c0_16 = arith.constant 0 : index
    %c0_17 = arith.constant 0 : index
    %14 = vector.load %arg4[%c0_14, %c0_15, %c0_16, %c0_17] : memref<1x6x6x64xbf16, #tpu.memory_space<vmem>>, vector<1x6x6x64xbf16>
    %15 = vector.shape_cast %14 : vector<1x6x6x64xbf16> to vector<6x6x64xbf16>
    %16 = vector.shape_cast %13 : vector<6x6x64xbf16> to vector<1x6x6x64xbf16>
    tpu.vector_store %arg4[%c0_14, %c0_15, %c0_16, %c0_17], %16 {strides = array<i32>} : memref<1x6x6x64xbf16, #tpu.memory_space<vmem>>, vector<1x6x6x64xbf16>,
    %c0_18 = arith.constant 0 : index
    %c0_19 = arith.constant 0 : index
    %c0_20 = arith.constant 0 : index
    %17 = vector.load %arg5[%c0_18, %c0_19, %c0_20] : memref<10x10x64xf32, #tpu.memory_space<vmem>>, vector<1x10x64xf32>
    %18 = vector.shape_cast %17 : vector<1x10x64xf32> to vector<10x64xf32>
    %c1_21 = arith.constant 1 : index
    %c0_22 = arith.constant 0 : index
    %c0_23 = arith.constant 0 : index
    %19 = vector.load %arg5[%c1_21, %c0_22, %c0_23] : memref<10x10x64xf32, #tpu.memory_space<vmem>>, vector<1x10x64xf32>
    %20 = vector.shape_cast %19 : vector<1x10x64xf32> to vector<10x64xf32>
    %21 = arith.maximumf %18, %20 : vector<10x64xf32>
    %c2 = arith.constant 2 : index
    %c0_24 = arith.constant 0 : index
    %c0_25 = arith.constant 0 : index
    %22 = vector.load %arg5[%c2, %c0_24, %c0_25] : memref<10x10x64xf32, #tpu.memory_space<vmem>>, vector<1x10x64xf32>
    %23 = vector.shape_cast %22 : vector<1x10x64xf32> to vector<10x64xf32>
    %24 = arith.maximumf %21, %23 : vector<10x64xf32>
    %c0_26 = arith.constant 0 : index
    %c0_27 = arith.constant 0 : index
    %25 = vector.load %arg6[%c0_26, %c0_27] : memref<10x64xf32, #tpu.memory_space<vmem>>, vector<10x64xf32>
    tpu.vector_store %arg6[%c0_26, %c0_27], %24 {strides = array<i32>} : memref<10x64xf32, #tpu.memory_space<vmem>>, vector<10x64xf32>,
    %c0_28 = arith.constant 0 : index
    %c0_29 = arith.constant 0 : index
    %26 = tpu.strided_load %arg6[%c0_28, %c0_29] {strides = array<i32: 2, 1>} : memref<10x64xf32, #tpu.memory_space<vmem>>, vector<4x64xf32>
    %c1_30 = arith.constant 1 : index
    %c0_31 = arith.constant 0 : index
    %27 = tpu.strided_load %arg6[%c1_30, %c0_31] {strides = array<i32: 2, 1>} : memref<10x64xf32, #tpu.memory_space<vmem>>, vector<4x64xf32>
    %28 = arith.maximumf %26, %27 : vector<4x64xf32>
    %c2_32 = arith.constant 2 : index
    %c0_33 = arith.constant 0 : index
    %29 = tpu.strided_load %arg6[%c2_32, %c0_33] {strides = array<i32: 2, 1>} : memref<10x64xf32, #tpu.memory_space<vmem>>, vector<4x64xf32>
    %30 = arith.maximumf %28, %29 : vector<4x64xf32>
    %31 = arith.truncf %30 : vector<4x64xf32> to vector<4x64xbf16>
    %c0_34 = arith.constant 0 : index
    %c1_35 = arith.constant 1 : index
    %c1_36 = arith.constant 1 : index
    %c0_37 = arith.constant 0 : index
    %32 = vector.load %arg4[%c0_34, %c1_35, %c1_36, %c0_37] : memref<1x6x6x64xbf16, #tpu.memory_space<vmem>>, vector<1x1x4x64xbf16>
    %33 = vector.shape_cast %32 : vector<1x1x4x64xbf16> to vector<4x64xbf16>
    %34 = vector.shape_cast %31 : vector<4x64xbf16> to vector<1x1x4x64xbf16>
    tpu.vector_store %arg4[%c0_34, %c1_35, %c1_36, %c0_37], %34 {strides = array<i32>} : memref<1x6x6x64xbf16, #tpu.memory_space<vmem>>, vector<1x1x4x64xbf16>,
    %c2_38 = arith.constant 2 : index
    %c0_39 = arith.constant 0 : index
    %c0_40 = arith.constant 0 : index
    %35 = vector.load %arg5[%c2_38, %c0_39, %c0_40] : memref<10x10x64xf32, #tpu.memory_space<vmem>>, vector<1x10x64xf32>
    %36 = vector.shape_cast %35 : vector<1x10x64xf32> to vector<10x64xf32>
    %c3 = arith.constant 3 : index
    %c0_41 = arith.constant 0 : index
    %c0_42 = arith.constant 0 : index
    %37 = vector.load %arg5[%c3, %c0_41, %c0_42] : memref<10x10x64xf32, #tpu.memory_space<vmem>>, vector<1x10x64xf32>
    %38 = vector.shape_cast %37 : vector<1x10x64xf32> to vector<10x64xf32>
    %39 = arith.maximumf %36, %38 : vector<10x64xf32>
    %c4 = arith.constant 4 : index
    %c0_43 = arith.constant 0 : index
    %c0_44 = arith.constant 0 : index
    %40 = vector.load %arg5[%c4, %c0_43, %c0_44] : memref<10x10x64xf32, #tpu.memory_space<vmem>>, vector<1x10x64xf32>
    %41 = vector.shape_cast %40 : vector<1x10x64xf32> to vector<10x64xf32>
    %42 = arith.maximumf %39, %41 : vector<10x64xf32>
    %c0_45 = arith.constant 0 : index
    %c0_46 = arith.constant 0 : index
    %43 = vector.load %arg6[%c0_45, %c0_46] : memref<10x64xf32, #tpu.memory_space<vmem>>, vector<10x64xf32>
    tpu.vector_store %arg6[%c0_45, %c0_46], %42 {strides = array<i32>} : memref<10x64xf32, #tpu.memory_space<vmem>>, vector<10x64xf32>,
    %c0_47 = arith.constant 0 : index
    %c0_48 = arith.constant 0 : index
    %44 = tpu.strided_load %arg6[%c0_47, %c0_48] {strides = array<i32: 2, 1>} : memref<10x64xf32, #tpu.memory_space<vmem>>, vector<4x64xf32>
    %c1_49 = arith.constant 1 : index
    %c0_50 = arith.constant 0 : index
    %45 = tpu.strided_load %arg6[%c1_49, %c0_50] {strides = array<i32: 2, 1>} : memref<10x64xf32, #tpu.memory_space<vmem>>, vector<4x64xf32>
    %46 = arith.maximumf %44, %45 : vector<4x64xf32>
    %c2_51 = arith.constant 2 : index
    %c0_52 = arith.constant 0 : index
    %47 = tpu.strided_load %arg6[%c2_51, %c0_52] {strides = array<i32: 2, 1>} : memref<10x64xf32, #tpu.memory_space<vmem>>, vector<4x64xf32>
    %48 = arith.maximumf %46, %47 : vector<4x64xf32>
    %49 = arith.truncf %48 : vector<4x64xf32> to vector<4x64xbf16>
    %c0_53 = arith.constant 0 : index
    %c2_54 = arith.constant 2 : index
    %c1_55 = arith.constant 1 : index
    %c0_56 = arith.constant 0 : index
    %50 = vector.load %arg4[%c0_53, %c2_54, %c1_55, %c0_56] : memref<1x6x6x64xbf16, #tpu.memory_space<vmem>>, vector<1x1x4x64xbf16>
    %51 = vector.shape_cast %50 : vector<1x1x4x64xbf16> to vector<4x64xbf16>
    %52 = vector.shape_cast %49 : vector<4x64xbf16> to vector<1x1x4x64xbf16>
    tpu.vector_store %arg4[%c0_53, %c2_54, %c1_55, %c0_56], %52 {strides = array<i32>} : memref<1x6x6x64xbf16, #tpu.memory_space<vmem>>, vector<1x1x4x64xbf16>,
    %c4_57 = arith.constant 4 : index
    %c0_58 = arith.constant 0 : index
    %c0_59 = arith.constant 0 : index
    %53 = vector.load %arg5[%c4_57, %c0_58, %c0_59] : memref<10x10x64xf32, #tpu.memory_space<vmem>>, vector<1x10x64xf32>
    %54 = vector.shape_cast %53 : vector<1x10x64xf32> to vector<10x64xf32>
    %c5 = arith.constant 5 : index
    %c0_60 = arith.constant 0 : index
    %c0_61 = arith.constant 0 : index
    %55 = vector.load %arg5[%c5, %c0_60, %c0_61] : memref<10x10x64xf32, #tpu.memory_space<vmem>>, vector<1x10x64xf32>
    %56 = vector.shape_cast %55 : vector<1x10x64xf32> to vector<10x64xf32>
    %57 = arith.maximumf %54, %56 : vector<10x64xf32>
    %c6 = arith.constant 6 : index
    %c0_62 = arith.constant 0 : index
    %c0_63 = arith.constant 0 : index
    %58 = vector.load %arg5[%c6, %c0_62, %c0_63] : memref<10x10x64xf32, #tpu.memory_space<vmem>>, vector<1x10x64xf32>
    %59 = vector.shape_cast %58 : vector<1x10x64xf32> to vector<10x64xf32>
    %60 = arith.maximumf %57, %59 : vector<10x64xf32>
    %c0_64 = arith.constant 0 : index
    %c0_65 = arith.constant 0 : index
    %61 = vector.load %arg6[%c0_64, %c0_65] : memref<10x64xf32, #tpu.memory_space<vmem>>, vector<10x64xf32>
    tpu.vector_store %arg6[%c0_64, %c0_65], %60 {strides = array<i32>} : memref<10x64xf32, #tpu.memory_space<vmem>>, vector<10x64xf32>,
    %c0_66 = arith.constant 0 : index
    %c0_67 = arith.constant 0 : index
    %62 = tpu.strided_load %arg6[%c0_66, %c0_67] {strides = array<i32: 2, 1>} : memref<10x64xf32, #tpu.memory_space<vmem>>, vector<4x64xf32>
    %c1_68 = arith.constant 1 : index
    %c0_69 = arith.constant 0 : index
    %63 = tpu.strided_load %arg6[%c1_68, %c0_69] {strides = array<i32: 2, 1>} : memref<10x64xf32, #tpu.memory_space<vmem>>, vector<4x64xf32>
    %64 = arith.maximumf %62, %63 : vector<4x64xf32>
    %c2_70 = arith.constant 2 : index
    %c0_71 = arith.constant 0 : index
    %65 = tpu.strided_load %arg6[%c2_70, %c0_71] {strides = array<i32: 2, 1>} : memref<10x64xf32, #tpu.memory_space<vmem>>, vector<4x64xf32>
    %66 = arith.maximumf %64, %65 : vector<4x64xf32>
    %67 = arith.truncf %66 : vector<4x64xf32> to vector<4x64xbf16>
    %c0_72 = arith.constant 0 : index
    %c3_73 = arith.constant 3 : index
    %c1_74 = arith.constant 1 : index
    %c0_75 = arith.constant 0 : index
    %68 = vector.load %arg4[%c0_72, %c3_73, %c1_74, %c0_75] : memref<1x6x6x64xbf16, #tpu.memory_space<vmem>>, vector<1x1x4x64xbf16>
    %69 = vector.shape_cast %68 : vector<1x1x4x64xbf16> to vector<4x64xbf16>
    %70 = vector.shape_cast %67 : vector<4x64xbf16> to vector<1x1x4x64xbf16>
    tpu.vector_store %arg4[%c0_72, %c3_73, %c1_74, %c0_75], %70 {strides = array<i32>} : memref<1x6x6x64xbf16, #tpu.memory_space<vmem>>, vector<1x1x4x64xbf16>,
    %c6_76 = arith.constant 6 : index
    %c0_77 = arith.constant 0 : index
    %c0_78 = arith.constant 0 : index
    %71 = vector.load %arg5[%c6_76, %c0_77, %c0_78] : memref<10x10x64xf32, #tpu.memory_space<vmem>>, vector<1x10x64xf32>
    %72 = vector.shape_cast %71 : vector<1x10x64xf32> to vector<10x64xf32>
    %c7 = arith.constant 7 : index
    %c0_79 = arith.constant 0 : index
    %c0_80 = arith.constant 0 : index
    %73 = vector.load %arg5[%c7, %c0_79, %c0_80] : memref<10x10x64xf32, #tpu.memory_space<vmem>>, vector<1x10x64xf32>
    %74 = vector.shape_cast %73 : vector<1x10x64xf32> to vector<10x64xf32>
    %75 = arith.maximumf %72, %74 : vector<10x64xf32>
    %c8 = arith.constant 8 : index
    %c0_81 = arith.constant 0 : index
    %c0_82 = arith.constant 0 : index
    %76 = vector.load %arg5[%c8, %c0_81, %c0_82] : memref<10x10x64xf32, #tpu.memory_space<vmem>>, vector<1x10x64xf32>
    %77 = vector.shape_cast %76 : vector<1x10x64xf32> to vector<10x64xf32>
    %78 = arith.maximumf %75, %77 : vector<10x64xf32>
    %c0_83 = arith.constant 0 : index
    %c0_84 = arith.constant 0 : index
    %79 = vector.load %arg6[%c0_83, %c0_84] : memref<10x64xf32, #tpu.memory_space<vmem>>, vector<10x64xf32>
    tpu.vector_store %arg6[%c0_83, %c0_84], %78 {strides = array<i32>} : memref<10x64xf32, #tpu.memory_space<vmem>>, vector<10x64xf32>,
    %c0_85 = arith.constant 0 : index
    %c0_86 = arith.constant 0 : index
    %80 = tpu.strided_load %arg6[%c0_85, %c0_86] {strides = array<i32: 2, 1>} : memref<10x64xf32, #tpu.memory_space<vmem>>, vector<4x64xf32>
    %c1_87 = arith.constant 1 : index
    %c0_88 = arith.constant 0 : index
    %81 = tpu.strided_load %arg6[%c1_87, %c0_88] {strides = array<i32: 2, 1>} : memref<10x64xf32, #tpu.memory_space<vmem>>, vector<4x64xf32>
    %82 = arith.maximumf %80, %81 : vector<4x64xf32>
    %c2_89 = arith.constant 2 : index
    %c0_90 = arith.constant 0 : index
    %83 = tpu.strided_load %arg6[%c2_89, %c0_90] {strides = array<i32: 2, 1>} : memref<10x64xf32, #tpu.memory_space<vmem>>, vector<4x64xf32>
    %84 = arith.maximumf %82, %83 : vector<4x64xf32>
    %85 = arith.truncf %84 : vector<4x64xf32> to vector<4x64xbf16>
    %c0_91 = arith.constant 0 : index
    %c4_92 = arith.constant 4 : index
    %c1_93 = arith.constant 1 : index
    %c0_94 = arith.constant 0 : index
    %86 = vector.load %arg4[%c0_91, %c4_92, %c1_93, %c0_94] : memref<1x6x6x64xbf16, #tpu.memory_space<vmem>>, vector<1x1x4x64xbf16>
    %87 = vector.shape_cast %86 : vector<1x1x4x64xbf16> to vector<4x64xbf16>
    %88 = vector.shape_cast %85 : vector<4x64xbf16> to vector<1x1x4x64xbf16>
    tpu.vector_store %arg4[%c0_91, %c4_92, %c1_93, %c0_94], %88 {strides = array<i32>} : memref<1x6x6x64xbf16, #tpu.memory_space<vmem>>, vector<1x1x4x64xbf16>,
    return
  }
  func.func @transform_0(%arg0: i32) -> (i32, i32, i32) {
    %c0_i32 = arith.constant 0 : i32
    %c0_i32_0 = arith.constant 0 : i32
    %c0_i32_1 = arith.constant 0 : i32
    return %arg0, %c0_i32, %c0_i32_0 : i32, i32, i32
  }
  func.func @transform_1(%arg0: i32) -> (i32, i32) {
    %c0_i32 = arith.constant 0 : i32
    %c0_i32_0 = arith.constant 0 : i32
    %c0_i32_1 = arith.constant 0 : i32
    return %c0_i32, %c0_i32_0 : i32, i32
  }
  func.func @transform_2(%arg0: i32) -> (i32, i32) {
    %c0_i32 = arith.constant 0 : i32
    %c0_i32_0 = arith.constant 0 : i32
    %c0_i32_1 = arith.constant 0 : i32
    return %c0_i32, %c0_i32_0 : i32, i32
  }
  func.func @transform_3(%arg0: i32) -> (i32, i32, i32, i32) {
    %c0_i32 = arith.constant 0 : i32
    %c0_i32_0 = arith.constant 0 : i32
    %c0_i32_1 = arith.constant 0 : i32
    %c0_i32_2 = arith.constant 0 : i32
    return %arg0, %c0_i32, %c0_i32_0, %c0_i32_1 : i32, i32, i32, i32
  }
}

module attributes {stable_mosaic.version = 11 : i64} {
  func.func @_layer1_kernel(%arg0: i32, %arg1: memref<1x6x6x64xbf16, #tpu.memory_space<vmem>>, %arg2: memref<9x64x64xbf16, #tpu.memory_space<vmem>>, %arg3: memref<1x64xf32, #tpu.memory_space<vmem>>, %arg4: memref<9x64x64xbf16, #tpu.memory_space<vmem>>, %arg5: memref<1x64xf32, #tpu.memory_space<vmem>>, %arg6: memref<9x64x64xbf16, #tpu.memory_space<vmem>>, %arg7: memref<1x64xf32, #tpu.memory_space<vmem>>, %arg8: memref<9x64x64xbf16, #tpu.memory_space<vmem>>, %arg9: memref<1x64xf32, #tpu.memory_space<vmem>>, %arg10: memref<1x6x6x64xbf16, #tpu.memory_space<vmem>>, %arg11: memref<6x6x64xbf16, #tpu.memory_space<vmem>>, %arg12: memref<6x6x64xbf16, #tpu.memory_space<vmem>>) attributes {dimension_semantics = [#tpu.dimension_semantics<parallel>], iteration_bounds = array<i64: 2>, scalar_prefetch = 0 : i64, scratch_operands = 2 : i64, tpu.core_type = #tpu.core_type<tc>, window_params = [{transform_indices = @transform_0, window_bounds = array<i64: 1, 6, 6, 64>}, {pipeline_mode = #tpu.pipeline_mode<synchronous>, transform_indices = @transform_1, window_bounds = array<i64: 9, 64, 64>}, {pipeline_mode = #tpu.pipeline_mode<synchronous>, transform_indices = @transform_2, window_bounds = array<i64: 1, 64>}, {pipeline_mode = #tpu.pipeline_mode<synchronous>, transform_indices = @transform_3, window_bounds = array<i64: 9, 64, 64>}, {pipeline_mode = #tpu.pipeline_mode<synchronous>, transform_indices = @transform_4, window_bounds = array<i64: 1, 64>}, {pipeline_mode = #tpu.pipeline_mode<synchronous>, transform_indices = @transform_5, window_bounds = array<i64: 9, 64, 64>}, {pipeline_mode = #tpu.pipeline_mode<synchronous>, transform_indices = @transform_6, window_bounds = array<i64: 1, 64>}, {pipeline_mode = #tpu.pipeline_mode<synchronous>, transform_indices = @transform_7, window_bounds = array<i64: 9, 64, 64>}, {pipeline_mode = #tpu.pipeline_mode<synchronous>, transform_indices = @transform_8, window_bounds = array<i64: 1, 64>}, {transform_indices = @transform_9, window_bounds = array<i64: 1, 6, 6, 64>}]} {
    %c0 = arith.constant 0 : index
    %c1 = arith.constant 1 : index
    %c1_0 = arith.constant 1 : index
    %c0_1 = arith.constant 0 : index
    %0 = vector.load %arg1[%c0, %c1, %c1_0, %c0_1] : memref<1x6x6x64xbf16, #tpu.memory_space<vmem>>, vector<1x4x4x64xbf16>
    %1 = vector.shape_cast %0 : vector<1x4x4x64xbf16> to vector<4x4x64xbf16>
    %2 = vector.shape_cast %1 : vector<4x4x64xbf16> to vector<16x64xbf16>
    %3 = arith.extf %2 : vector<16x64xbf16> to vector<16x64xf32>
    %cst = arith.constant 0.000000e+00 : f32
    %4 = vector.broadcast %cst : f32 to vector<16x64xf32>
    %c0_2 = arith.constant 0 : index
    %c0_3 = arith.constant 0 : index
    %c0_4 = arith.constant 0 : index
    %c0_5 = arith.constant 0 : index
    %5 = vector.load %arg1[%c0_2, %c0_3, %c0_4, %c0_5] : memref<1x6x6x64xbf16, #tpu.memory_space<vmem>>, vector<1x4x4x64xbf16>
    %6 = vector.shape_cast %5 : vector<1x4x4x64xbf16> to vector<4x4x64xbf16>
    %7 = vector.shape_cast %6 : vector<4x4x64xbf16> to vector<16x64xbf16>
    %c0_6 = arith.constant 0 : index
    %c0_7 = arith.constant 0 : index
    %c0_8 = arith.constant 0 : index
    %8 = vector.load %arg2[%c0_6, %c0_7, %c0_8] : memref<9x64x64xbf16, #tpu.memory_space<vmem>>, vector<1x64x64xbf16>
    %9 = vector.shape_cast %8 : vector<1x64x64xbf16> to vector<64x64xbf16>
    %cst_9 = arith.constant dense<0.000000e+00> : vector<16x64xf32>
    %10 = tpu.matmul %7, %9, %cst_9 {dimension_numbers = #tpu.dot_dimension_numbers<[1], [0], [0], [1], [0, 0, 1, 1], [], []>} : vector<16x64xbf16>, vector<64x64xbf16>, vector<16x64xf32> -> vector<16x64xf32>
    %11 = arith.addf %4, %10 : vector<16x64xf32>
    %c0_10 = arith.constant 0 : index
    %c0_11 = arith.constant 0 : index
    %c1_12 = arith.constant 1 : index
    %c0_13 = arith.constant 0 : index
    %12 = vector.load %arg1[%c0_10, %c0_11, %c1_12, %c0_13] : memref<1x6x6x64xbf16, #tpu.memory_space<vmem>>, vector<1x4x4x64xbf16>
    %13 = vector.shape_cast %12 : vector<1x4x4x64xbf16> to vector<4x4x64xbf16>
    %14 = vector.shape_cast %13 : vector<4x4x64xbf16> to vector<16x64xbf16>
    %c1_14 = arith.constant 1 : index
    %c0_15 = arith.constant 0 : index
    %c0_16 = arith.constant 0 : index
    %15 = vector.load %arg2[%c1_14, %c0_15, %c0_16] : memref<9x64x64xbf16, #tpu.memory_space<vmem>>, vector<1x64x64xbf16>
    %16 = vector.shape_cast %15 : vector<1x64x64xbf16> to vector<64x64xbf16>
    %cst_17 = arith.constant dense<0.000000e+00> : vector<16x64xf32>
    %17 = tpu.matmul %14, %16, %cst_17 {dimension_numbers = #tpu.dot_dimension_numbers<[1], [0], [0], [1], [0, 0, 1, 1], [], []>} : vector<16x64xbf16>, vector<64x64xbf16>, vector<16x64xf32> -> vector<16x64xf32>
    %18 = arith.addf %11, %17 : vector<16x64xf32>
    %c0_18 = arith.constant 0 : index
    %c0_19 = arith.constant 0 : index
    %c2 = arith.constant 2 : index
    %c0_20 = arith.constant 0 : index
    %19 = vector.load %arg1[%c0_18, %c0_19, %c2, %c0_20] : memref<1x6x6x64xbf16, #tpu.memory_space<vmem>>, vector<1x4x4x64xbf16>
    %20 = vector.shape_cast %19 : vector<1x4x4x64xbf16> to vector<4x4x64xbf16>
    %21 = vector.shape_cast %20 : vector<4x4x64xbf16> to vector<16x64xbf16>
    %c2_21 = arith.constant 2 : index
    %c0_22 = arith.constant 0 : index
    %c0_23 = arith.constant 0 : index
    %22 = vector.load %arg2[%c2_21, %c0_22, %c0_23] : memref<9x64x64xbf16, #tpu.memory_space<vmem>>, vector<1x64x64xbf16>
    %23 = vector.shape_cast %22 : vector<1x64x64xbf16> to vector<64x64xbf16>
    %cst_24 = arith.constant dense<0.000000e+00> : vector<16x64xf32>
    %24 = tpu.matmul %21, %23, %cst_24 {dimension_numbers = #tpu.dot_dimension_numbers<[1], [0], [0], [1], [0, 0, 1, 1], [], []>} : vector<16x64xbf16>, vector<64x64xbf16>, vector<16x64xf32> -> vector<16x64xf32>
    %25 = arith.addf %18, %24 : vector<16x64xf32>
    %c0_25 = arith.constant 0 : index
    %c1_26 = arith.constant 1 : index
    %c0_27 = arith.constant 0 : index
    %c0_28 = arith.constant 0 : index
    %26 = vector.load %arg1[%c0_25, %c1_26, %c0_27, %c0_28] : memref<1x6x6x64xbf16, #tpu.memory_space<vmem>>, vector<1x4x4x64xbf16>
    %27 = vector.shape_cast %26 : vector<1x4x4x64xbf16> to vector<4x4x64xbf16>
    %28 = vector.shape_cast %27 : vector<4x4x64xbf16> to vector<16x64xbf16>
    %c3 = arith.constant 3 : index
    %c0_29 = arith.constant 0 : index
    %c0_30 = arith.constant 0 : index
    %29 = vector.load %arg2[%c3, %c0_29, %c0_30] : memref<9x64x64xbf16, #tpu.memory_space<vmem>>, vector<1x64x64xbf16>
    %30 = vector.shape_cast %29 : vector<1x64x64xbf16> to vector<64x64xbf16>
    %cst_31 = arith.constant dense<0.000000e+00> : vector<16x64xf32>
    %31 = tpu.matmul %28, %30, %cst_31 {dimension_numbers = #tpu.dot_dimension_numbers<[1], [0], [0], [1], [0, 0, 1, 1], [], []>} : vector<16x64xbf16>, vector<64x64xbf16>, vector<16x64xf32> -> vector<16x64xf32>
    %32 = arith.addf %25, %31 : vector<16x64xf32>
    %c0_32 = arith.constant 0 : index
    %c1_33 = arith.constant 1 : index
    %c1_34 = arith.constant 1 : index
    %c0_35 = arith.constant 0 : index
    %33 = vector.load %arg1[%c0_32, %c1_33, %c1_34, %c0_35] : memref<1x6x6x64xbf16, #tpu.memory_space<vmem>>, vector<1x4x4x64xbf16>
    %34 = vector.shape_cast %33 : vector<1x4x4x64xbf16> to vector<4x4x64xbf16>
    %35 = vector.shape_cast %34 : vector<4x4x64xbf16> to vector<16x64xbf16>
    %c4 = arith.constant 4 : index
    %c0_36 = arith.constant 0 : index
    %c0_37 = arith.constant 0 : index
    %36 = vector.load %arg2[%c4, %c0_36, %c0_37] : memref<9x64x64xbf16, #tpu.memory_space<vmem>>, vector<1x64x64xbf16>
    %37 = vector.shape_cast %36 : vector<1x64x64xbf16> to vector<64x64xbf16>
    %cst_38 = arith.constant dense<0.000000e+00> : vector<16x64xf32>
    %38 = tpu.matmul %35, %37, %cst_38 {dimension_numbers = #tpu.dot_dimension_numbers<[1], [0], [0], [1], [0, 0, 1, 1], [], []>} : vector<16x64xbf16>, vector<64x64xbf16>, vector<16x64xf32> -> vector<16x64xf32>
    %39 = arith.addf %32, %38 : vector<16x64xf32>
    %c0_39 = arith.constant 0 : index
    %c1_40 = arith.constant 1 : index
    %c2_41 = arith.constant 2 : index
    %c0_42 = arith.constant 0 : index
    %40 = vector.load %arg1[%c0_39, %c1_40, %c2_41, %c0_42] : memref<1x6x6x64xbf16, #tpu.memory_space<vmem>>, vector<1x4x4x64xbf16>
    %41 = vector.shape_cast %40 : vector<1x4x4x64xbf16> to vector<4x4x64xbf16>
    %42 = vector.shape_cast %41 : vector<4x4x64xbf16> to vector<16x64xbf16>
    %c5 = arith.constant 5 : index
    %c0_43 = arith.constant 0 : index
    %c0_44 = arith.constant 0 : index
    %43 = vector.load %arg2[%c5, %c0_43, %c0_44] : memref<9x64x64xbf16, #tpu.memory_space<vmem>>, vector<1x64x64xbf16>
    %44 = vector.shape_cast %43 : vector<1x64x64xbf16> to vector<64x64xbf16>
    %cst_45 = arith.constant dense<0.000000e+00> : vector<16x64xf32>
    %45 = tpu.matmul %42, %44, %cst_45 {dimension_numbers = #tpu.dot_dimension_numbers<[1], [0], [0], [1], [0, 0, 1, 1], [], []>} : vector<16x64xbf16>, vector<64x64xbf16>, vector<16x64xf32> -> vector<16x64xf32>
    %46 = arith.addf %39, %45 : vector<16x64xf32>
    %c0_46 = arith.constant 0 : index
    %c2_47 = arith.constant 2 : index
    %c0_48 = arith.constant 0 : index
    %c0_49 = arith.constant 0 : index
    %47 = vector.load %arg1[%c0_46, %c2_47, %c0_48, %c0_49] : memref<1x6x6x64xbf16, #tpu.memory_space<vmem>>, vector<1x4x4x64xbf16>
    %48 = vector.shape_cast %47 : vector<1x4x4x64xbf16> to vector<4x4x64xbf16>
    %49 = vector.shape_cast %48 : vector<4x4x64xbf16> to vector<16x64xbf16>
    %c6 = arith.constant 6 : index
    %c0_50 = arith.constant 0 : index
    %c0_51 = arith.constant 0 : index
    %50 = vector.load %arg2[%c6, %c0_50, %c0_51] : memref<9x64x64xbf16, #tpu.memory_space<vmem>>, vector<1x64x64xbf16>
    %51 = vector.shape_cast %50 : vector<1x64x64xbf16> to vector<64x64xbf16>
    %cst_52 = arith.constant dense<0.000000e+00> : vector<16x64xf32>
    %52 = tpu.matmul %49, %51, %cst_52 {dimension_numbers = #tpu.dot_dimension_numbers<[1], [0], [0], [1], [0, 0, 1, 1], [], []>} : vector<16x64xbf16>, vector<64x64xbf16>, vector<16x64xf32> -> vector<16x64xf32>
    %53 = arith.addf %46, %52 : vector<16x64xf32>
    %c0_53 = arith.constant 0 : index
    %c2_54 = arith.constant 2 : index
    %c1_55 = arith.constant 1 : index
    %c0_56 = arith.constant 0 : index
    %54 = vector.load %arg1[%c0_53, %c2_54, %c1_55, %c0_56] : memref<1x6x6x64xbf16, #tpu.memory_space<vmem>>, vector<1x4x4x64xbf16>
    %55 = vector.shape_cast %54 : vector<1x4x4x64xbf16> to vector<4x4x64xbf16>
    %56 = vector.shape_cast %55 : vector<4x4x64xbf16> to vector<16x64xbf16>
    %c7 = arith.constant 7 : index
    %c0_57 = arith.constant 0 : index
    %c0_58 = arith.constant 0 : index
    %57 = vector.load %arg2[%c7, %c0_57, %c0_58] : memref<9x64x64xbf16, #tpu.memory_space<vmem>>, vector<1x64x64xbf16>
    %58 = vector.shape_cast %57 : vector<1x64x64xbf16> to vector<64x64xbf16>
    %cst_59 = arith.constant dense<0.000000e+00> : vector<16x64xf32>
    %59 = tpu.matmul %56, %58, %cst_59 {dimension_numbers = #tpu.dot_dimension_numbers<[1], [0], [0], [1], [0, 0, 1, 1], [], []>} : vector<16x64xbf16>, vector<64x64xbf16>, vector<16x64xf32> -> vector<16x64xf32>
    %60 = arith.addf %53, %59 : vector<16x64xf32>
    %c0_60 = arith.constant 0 : index
    %c2_61 = arith.constant 2 : index
    %c2_62 = arith.constant 2 : index
    %c0_63 = arith.constant 0 : index
    %61 = vector.load %arg1[%c0_60, %c2_61, %c2_62, %c0_63] : memref<1x6x6x64xbf16, #tpu.memory_space<vmem>>, vector<1x4x4x64xbf16>
    %62 = vector.shape_cast %61 : vector<1x4x4x64xbf16> to vector<4x4x64xbf16>
    %63 = vector.shape_cast %62 : vector<4x4x64xbf16> to vector<16x64xbf16>
    %c8 = arith.constant 8 : index
    %c0_64 = arith.constant 0 : index
    %c0_65 = arith.constant 0 : index
    %64 = vector.load %arg2[%c8, %c0_64, %c0_65] : memref<9x64x64xbf16, #tpu.memory_space<vmem>>, vector<1x64x64xbf16>
    %65 = vector.shape_cast %64 : vector<1x64x64xbf16> to vector<64x64xbf16>
    %cst_66 = arith.constant dense<0.000000e+00> : vector<16x64xf32>
    %66 = tpu.matmul %63, %65, %cst_66 {dimension_numbers = #tpu.dot_dimension_numbers<[1], [0], [0], [1], [0, 0, 1, 1], [], []>} : vector<16x64xbf16>, vector<64x64xbf16>, vector<16x64xf32> -> vector<16x64xf32>
    %67 = arith.addf %60, %66 : vector<16x64xf32>
    %c0_67 = arith.constant 0 : index
    %c0_68 = arith.constant 0 : index
    %68 = vector.load %arg3[%c0_67, %c0_68] : memref<1x64xf32, #tpu.memory_space<vmem>>, vector<1x64xf32>
    %69 = vector.broadcast %68 : vector<1x64xf32> to vector<16x64xf32>
    %70 = arith.addf %67, %69 : vector<16x64xf32>
    %cst_69 = arith.constant 0.000000e+00 : f32
    %71 = vector.broadcast %cst_69 : f32 to vector<16x64xf32>
    %72 = arith.maximumf %70, %71 : vector<16x64xf32>
    %cst_70 = arith.constant 0.000000e+00 : bf16
    %73 = vector.broadcast %cst_70 : bf16 to vector<6x6x64xbf16>
    %c0_71 = arith.constant 0 : index
    %c0_72 = arith.constant 0 : index
    %c0_73 = arith.constant 0 : index
    %74 = vector.load %arg11[%c0_71, %c0_72, %c0_73] : memref<6x6x64xbf16, #tpu.memory_space<vmem>>, vector<6x6x64xbf16>
    tpu.vector_store %arg11[%c0_71, %c0_72, %c0_73], %73 {strides = array<i32>} : memref<6x6x64xbf16, #tpu.memory_space<vmem>>, vector<6x6x64xbf16>,
    %75 = vector.shape_cast %72 : vector<16x64xf32> to vector<4x4x64xf32>
    %76 = arith.truncf %75 : vector<4x4x64xf32> to vector<4x4x64xbf16>
    %c1_74 = arith.constant 1 : index
    %c1_75 = arith.constant 1 : index
    %c0_76 = arith.constant 0 : index
    %77 = vector.load %arg11[%c1_74, %c1_75, %c0_76] : memref<6x6x64xbf16, #tpu.memory_space<vmem>>, vector<4x4x64xbf16>
    tpu.vector_store %arg11[%c1_74, %c1_75, %c0_76], %76 {strides = array<i32>} : memref<6x6x64xbf16, #tpu.memory_space<vmem>>, vector<4x4x64xbf16>,
    %cst_77 = arith.constant 0.000000e+00 : f32
    %78 = vector.broadcast %cst_77 : f32 to vector<16x64xf32>
    %c0_78 = arith.constant 0 : index
    %c0_79 = arith.constant 0 : index
    %c0_80 = arith.constant 0 : index
    %79 = vector.load %arg11[%c0_78, %c0_79, %c0_80] : memref<6x6x64xbf16, #tpu.memory_space<vmem>>, vector<4x4x64xbf16>
    %80 = vector.shape_cast %79 : vector<4x4x64xbf16> to vector<16x64xbf16>
    %c0_81 = arith.constant 0 : index
    %c0_82 = arith.constant 0 : index
    %c0_83 = arith.constant 0 : index
    %81 = vector.load %arg4[%c0_81, %c0_82, %c0_83] : memref<9x64x64xbf16, #tpu.memory_space<vmem>>, vector<1x64x64xbf16>
    %82 = vector.shape_cast %81 : vector<1x64x64xbf16> to vector<64x64xbf16>
    %cst_84 = arith.constant dense<0.000000e+00> : vector<16x64xf32>
    %83 = tpu.matmul %80, %82, %cst_84 {dimension_numbers = #tpu.dot_dimension_numbers<[1], [0], [0], [1], [0, 0, 1, 1], [], []>} : vector<16x64xbf16>, vector<64x64xbf16>, vector<16x64xf32> -> vector<16x64xf32>
    %84 = arith.addf %78, %83 : vector<16x64xf32>
    %c0_85 = arith.constant 0 : index
    %c1_86 = arith.constant 1 : index
    %c0_87 = arith.constant 0 : index
    %85 = vector.load %arg11[%c0_85, %c1_86, %c0_87] : memref<6x6x64xbf16, #tpu.memory_space<vmem>>, vector<4x4x64xbf16>
    %86 = vector.shape_cast %85 : vector<4x4x64xbf16> to vector<16x64xbf16>
    %c1_88 = arith.constant 1 : index
    %c0_89 = arith.constant 0 : index
    %c0_90 = arith.constant 0 : index
    %87 = vector.load %arg4[%c1_88, %c0_89, %c0_90] : memref<9x64x64xbf16, #tpu.memory_space<vmem>>, vector<1x64x64xbf16>
    %88 = vector.shape_cast %87 : vector<1x64x64xbf16> to vector<64x64xbf16>
    %cst_91 = arith.constant dense<0.000000e+00> : vector<16x64xf32>
    %89 = tpu.matmul %86, %88, %cst_91 {dimension_numbers = #tpu.dot_dimension_numbers<[1], [0], [0], [1], [0, 0, 1, 1], [], []>} : vector<16x64xbf16>, vector<64x64xbf16>, vector<16x64xf32> -> vector<16x64xf32>
    %90 = arith.addf %84, %89 : vector<16x64xf32>
    %c0_92 = arith.constant 0 : index
    %c2_93 = arith.constant 2 : index
    %c0_94 = arith.constant 0 : index
    %91 = vector.load %arg11[%c0_92, %c2_93, %c0_94] : memref<6x6x64xbf16, #tpu.memory_space<vmem>>, vector<4x4x64xbf16>
    %92 = vector.shape_cast %91 : vector<4x4x64xbf16> to vector<16x64xbf16>
    %c2_95 = arith.constant 2 : index
    %c0_96 = arith.constant 0 : index
    %c0_97 = arith.constant 0 : index
    %93 = vector.load %arg4[%c2_95, %c0_96, %c0_97] : memref<9x64x64xbf16, #tpu.memory_space<vmem>>, vector<1x64x64xbf16>
    %94 = vector.shape_cast %93 : vector<1x64x64xbf16> to vector<64x64xbf16>
    %cst_98 = arith.constant dense<0.000000e+00> : vector<16x64xf32>
    %95 = tpu.matmul %92, %94, %cst_98 {dimension_numbers = #tpu.dot_dimension_numbers<[1], [0], [0], [1], [0, 0, 1, 1], [], []>} : vector<16x64xbf16>, vector<64x64xbf16>, vector<16x64xf32> -> vector<16x64xf32>
    %96 = arith.addf %90, %95 : vector<16x64xf32>
    %c1_99 = arith.constant 1 : index
    %c0_100 = arith.constant 0 : index
    %c0_101 = arith.constant 0 : index
    %97 = vector.load %arg11[%c1_99, %c0_100, %c0_101] : memref<6x6x64xbf16, #tpu.memory_space<vmem>>, vector<4x4x64xbf16>
    %98 = vector.shape_cast %97 : vector<4x4x64xbf16> to vector<16x64xbf16>
    %c3_102 = arith.constant 3 : index
    %c0_103 = arith.constant 0 : index
    %c0_104 = arith.constant 0 : index
    %99 = vector.load %arg4[%c3_102, %c0_103, %c0_104] : memref<9x64x64xbf16, #tpu.memory_space<vmem>>, vector<1x64x64xbf16>
    %100 = vector.shape_cast %99 : vector<1x64x64xbf16> to vector<64x64xbf16>
    %cst_105 = arith.constant dense<0.000000e+00> : vector<16x64xf32>
    %101 = tpu.matmul %98, %100, %cst_105 {dimension_numbers = #tpu.dot_dimension_numbers<[1], [0], [0], [1], [0, 0, 1, 1], [], []>} : vector<16x64xbf16>, vector<64x64xbf16>, vector<16x64xf32> -> vector<16x64xf32>
    %102 = arith.addf %96, %101 : vector<16x64xf32>
    %c1_106 = arith.constant 1 : index
    %c1_107 = arith.constant 1 : index
    %c0_108 = arith.constant 0 : index
    %103 = vector.load %arg11[%c1_106, %c1_107, %c0_108] : memref<6x6x64xbf16, #tpu.memory_space<vmem>>, vector<4x4x64xbf16>
    %104 = vector.shape_cast %103 : vector<4x4x64xbf16> to vector<16x64xbf16>
    %c4_109 = arith.constant 4 : index
    %c0_110 = arith.constant 0 : index
    %c0_111 = arith.constant 0 : index
    %105 = vector.load %arg4[%c4_109, %c0_110, %c0_111] : memref<9x64x64xbf16, #tpu.memory_space<vmem>>, vector<1x64x64xbf16>
    %106 = vector.shape_cast %105 : vector<1x64x64xbf16> to vector<64x64xbf16>
    %cst_112 = arith.constant dense<0.000000e+00> : vector<16x64xf32>
    %107 = tpu.matmul %104, %106, %cst_112 {dimension_numbers = #tpu.dot_dimension_numbers<[1], [0], [0], [1], [0, 0, 1, 1], [], []>} : vector<16x64xbf16>, vector<64x64xbf16>, vector<16x64xf32> -> vector<16x64xf32>
    %108 = arith.addf %102, %107 : vector<16x64xf32>
    %c1_113 = arith.constant 1 : index
    %c2_114 = arith.constant 2 : index
    %c0_115 = arith.constant 0 : index
    %109 = vector.load %arg11[%c1_113, %c2_114, %c0_115] : memref<6x6x64xbf16, #tpu.memory_space<vmem>>, vector<4x4x64xbf16>
    %110 = vector.shape_cast %109 : vector<4x4x64xbf16> to vector<16x64xbf16>
    %c5_116 = arith.constant 5 : index
    %c0_117 = arith.constant 0 : index
    %c0_118 = arith.constant 0 : index
    %111 = vector.load %arg4[%c5_116, %c0_117, %c0_118] : memref<9x64x64xbf16, #tpu.memory_space<vmem>>, vector<1x64x64xbf16>
    %112 = vector.shape_cast %111 : vector<1x64x64xbf16> to vector<64x64xbf16>
    %cst_119 = arith.constant dense<0.000000e+00> : vector<16x64xf32>
    %113 = tpu.matmul %110, %112, %cst_119 {dimension_numbers = #tpu.dot_dimension_numbers<[1], [0], [0], [1], [0, 0, 1, 1], [], []>} : vector<16x64xbf16>, vector<64x64xbf16>, vector<16x64xf32> -> vector<16x64xf32>
    %114 = arith.addf %108, %113 : vector<16x64xf32>
    %c2_120 = arith.constant 2 : index
    %c0_121 = arith.constant 0 : index
    %c0_122 = arith.constant 0 : index
    %115 = vector.load %arg11[%c2_120, %c0_121, %c0_122] : memref<6x6x64xbf16, #tpu.memory_space<vmem>>, vector<4x4x64xbf16>
    %116 = vector.shape_cast %115 : vector<4x4x64xbf16> to vector<16x64xbf16>
    %c6_123 = arith.constant 6 : index
    %c0_124 = arith.constant 0 : index
    %c0_125 = arith.constant 0 : index
    %117 = vector.load %arg4[%c6_123, %c0_124, %c0_125] : memref<9x64x64xbf16, #tpu.memory_space<vmem>>, vector<1x64x64xbf16>
    %118 = vector.shape_cast %117 : vector<1x64x64xbf16> to vector<64x64xbf16>
    %cst_126 = arith.constant dense<0.000000e+00> : vector<16x64xf32>
    %119 = tpu.matmul %116, %118, %cst_126 {dimension_numbers = #tpu.dot_dimension_numbers<[1], [0], [0], [1], [0, 0, 1, 1], [], []>} : vector<16x64xbf16>, vector<64x64xbf16>, vector<16x64xf32> -> vector<16x64xf32>
    %120 = arith.addf %114, %119 : vector<16x64xf32>
    %c2_127 = arith.constant 2 : index
    %c1_128 = arith.constant 1 : index
    %c0_129 = arith.constant 0 : index
    %121 = vector.load %arg11[%c2_127, %c1_128, %c0_129] : memref<6x6x64xbf16, #tpu.memory_space<vmem>>, vector<4x4x64xbf16>
    %122 = vector.shape_cast %121 : vector<4x4x64xbf16> to vector<16x64xbf16>
    %c7_130 = arith.constant 7 : index
    %c0_131 = arith.constant 0 : index
    %c0_132 = arith.constant 0 : index
    %123 = vector.load %arg4[%c7_130, %c0_131, %c0_132] : memref<9x64x64xbf16, #tpu.memory_space<vmem>>, vector<1x64x64xbf16>
    %124 = vector.shape_cast %123 : vector<1x64x64xbf16> to vector<64x64xbf16>
    %cst_133 = arith.constant dense<0.000000e+00> : vector<16x64xf32>
    %125 = tpu.matmul %122, %124, %cst_133 {dimension_numbers = #tpu.dot_dimension_numbers<[1], [0], [0], [1], [0, 0, 1, 1], [], []>} : vector<16x64xbf16>, vector<64x64xbf16>, vector<16x64xf32> -> vector<16x64xf32>
    %126 = arith.addf %120, %125 : vector<16x64xf32>
    %c2_134 = arith.constant 2 : index
    %c2_135 = arith.constant 2 : index
    %c0_136 = arith.constant 0 : index
    %127 = vector.load %arg11[%c2_134, %c2_135, %c0_136] : memref<6x6x64xbf16, #tpu.memory_space<vmem>>, vector<4x4x64xbf16>
    %128 = vector.shape_cast %127 : vector<4x4x64xbf16> to vector<16x64xbf16>
    %c8_137 = arith.constant 8 : index
    %c0_138 = arith.constant 0 : index
    %c0_139 = arith.constant 0 : index
    %129 = vector.load %arg4[%c8_137, %c0_138, %c0_139] : memref<9x64x64xbf16, #tpu.memory_space<vmem>>, vector<1x64x64xbf16>
    %130 = vector.shape_cast %129 : vector<1x64x64xbf16> to vector<64x64xbf16>
    %cst_140 = arith.constant dense<0.000000e+00> : vector<16x64xf32>
    %131 = tpu.matmul %128, %130, %cst_140 {dimension_numbers = #tpu.dot_dimension_numbers<[1], [0], [0], [1], [0, 0, 1, 1], [], []>} : vector<16x64xbf16>, vector<64x64xbf16>, vector<16x64xf32> -> vector<16x64xf32>
    %132 = arith.addf %126, %131 : vector<16x64xf32>
    %c0_141 = arith.constant 0 : index
    %c0_142 = arith.constant 0 : index
    %133 = vector.load %arg5[%c0_141, %c0_142] : memref<1x64xf32, #tpu.memory_space<vmem>>, vector<1x64xf32>
    %134 = vector.broadcast %133 : vector<1x64xf32> to vector<16x64xf32>
    %135 = arith.addf %132, %134 : vector<16x64xf32>
    %136 = arith.addf %135, %3 : vector<16x64xf32>
    %cst_143 = arith.constant 0.000000e+00 : f32
    %137 = vector.broadcast %cst_143 : f32 to vector<16x64xf32>
    %138 = arith.maximumf %136, %137 : vector<16x64xf32>
    %cst_144 = arith.constant 0.000000e+00 : bf16
    %139 = vector.broadcast %cst_144 : bf16 to vector<6x6x64xbf16>
    %c0_145 = arith.constant 0 : index
    %c0_146 = arith.constant 0 : index
    %c0_147 = arith.constant 0 : index
    %140 = vector.load %arg12[%c0_145, %c0_146, %c0_147] : memref<6x6x64xbf16, #tpu.memory_space<vmem>>, vector<6x6x64xbf16>
    tpu.vector_store %arg12[%c0_145, %c0_146, %c0_147], %139 {strides = array<i32>} : memref<6x6x64xbf16, #tpu.memory_space<vmem>>, vector<6x6x64xbf16>,
    %141 = vector.shape_cast %138 : vector<16x64xf32> to vector<4x4x64xf32>
    %142 = arith.truncf %141 : vector<4x4x64xf32> to vector<4x4x64xbf16>
    %c1_148 = arith.constant 1 : index
    %c1_149 = arith.constant 1 : index
    %c0_150 = arith.constant 0 : index
    %143 = vector.load %arg12[%c1_148, %c1_149, %c0_150] : memref<6x6x64xbf16, #tpu.memory_space<vmem>>, vector<4x4x64xbf16>
    tpu.vector_store %arg12[%c1_148, %c1_149, %c0_150], %142 {strides = array<i32>} : memref<6x6x64xbf16, #tpu.memory_space<vmem>>, vector<4x4x64xbf16>,
    %c1_151 = arith.constant 1 : index
    %c1_152 = arith.constant 1 : index
    %c0_153 = arith.constant 0 : index
    %144 = vector.load %arg12[%c1_151, %c1_152, %c0_153] : memref<6x6x64xbf16, #tpu.memory_space<vmem>>, vector<4x4x64xbf16>
    %145 = vector.shape_cast %144 : vector<4x4x64xbf16> to vector<16x64xbf16>
    %146 = arith.extf %145 : vector<16x64xbf16> to vector<16x64xf32>
    %cst_154 = arith.constant 0.000000e+00 : f32
    %147 = vector.broadcast %cst_154 : f32 to vector<16x64xf32>
    %c0_155 = arith.constant 0 : index
    %c0_156 = arith.constant 0 : index
    %c0_157 = arith.constant 0 : index
    %148 = vector.load %arg12[%c0_155, %c0_156, %c0_157] : memref<6x6x64xbf16, #tpu.memory_space<vmem>>, vector<4x4x64xbf16>
    %149 = vector.shape_cast %148 : vector<4x4x64xbf16> to vector<16x64xbf16>
    %c0_158 = arith.constant 0 : index
    %c0_159 = arith.constant 0 : index
    %c0_160 = arith.constant 0 : index
    %150 = vector.load %arg6[%c0_158, %c0_159, %c0_160] : memref<9x64x64xbf16, #tpu.memory_space<vmem>>, vector<1x64x64xbf16>
    %151 = vector.shape_cast %150 : vector<1x64x64xbf16> to vector<64x64xbf16>
    %cst_161 = arith.constant dense<0.000000e+00> : vector<16x64xf32>
    %152 = tpu.matmul %149, %151, %cst_161 {dimension_numbers = #tpu.dot_dimension_numbers<[1], [0], [0], [1], [0, 0, 1, 1], [], []>} : vector<16x64xbf16>, vector<64x64xbf16>, vector<16x64xf32> -> vector<16x64xf32>
    %153 = arith.addf %147, %152 : vector<16x64xf32>
    %c0_162 = arith.constant 0 : index
    %c1_163 = arith.constant 1 : index
    %c0_164 = arith.constant 0 : index
    %154 = vector.load %arg12[%c0_162, %c1_163, %c0_164] : memref<6x6x64xbf16, #tpu.memory_space<vmem>>, vector<4x4x64xbf16>
    %155 = vector.shape_cast %154 : vector<4x4x64xbf16> to vector<16x64xbf16>
    %c1_165 = arith.constant 1 : index
    %c0_166 = arith.constant 0 : index
    %c0_167 = arith.constant 0 : index
    %156 = vector.load %arg6[%c1_165, %c0_166, %c0_167] : memref<9x64x64xbf16, #tpu.memory_space<vmem>>, vector<1x64x64xbf16>
    %157 = vector.shape_cast %156 : vector<1x64x64xbf16> to vector<64x64xbf16>
    %cst_168 = arith.constant dense<0.000000e+00> : vector<16x64xf32>
    %158 = tpu.matmul %155, %157, %cst_168 {dimension_numbers = #tpu.dot_dimension_numbers<[1], [0], [0], [1], [0, 0, 1, 1], [], []>} : vector<16x64xbf16>, vector<64x64xbf16>, vector<16x64xf32> -> vector<16x64xf32>
    %159 = arith.addf %153, %158 : vector<16x64xf32>
    %c0_169 = arith.constant 0 : index
    %c2_170 = arith.constant 2 : index
    %c0_171 = arith.constant 0 : index
    %160 = vector.load %arg12[%c0_169, %c2_170, %c0_171] : memref<6x6x64xbf16, #tpu.memory_space<vmem>>, vector<4x4x64xbf16>
    %161 = vector.shape_cast %160 : vector<4x4x64xbf16> to vector<16x64xbf16>
    %c2_172 = arith.constant 2 : index
    %c0_173 = arith.constant 0 : index
    %c0_174 = arith.constant 0 : index
    %162 = vector.load %arg6[%c2_172, %c0_173, %c0_174] : memref<9x64x64xbf16, #tpu.memory_space<vmem>>, vector<1x64x64xbf16>
    %163 = vector.shape_cast %162 : vector<1x64x64xbf16> to vector<64x64xbf16>
    %cst_175 = arith.constant dense<0.000000e+00> : vector<16x64xf32>
    %164 = tpu.matmul %161, %163, %cst_175 {dimension_numbers = #tpu.dot_dimension_numbers<[1], [0], [0], [1], [0, 0, 1, 1], [], []>} : vector<16x64xbf16>, vector<64x64xbf16>, vector<16x64xf32> -> vector<16x64xf32>
    %165 = arith.addf %159, %164 : vector<16x64xf32>
    %c1_176 = arith.constant 1 : index
    %c0_177 = arith.constant 0 : index
    %c0_178 = arith.constant 0 : index
    %166 = vector.load %arg12[%c1_176, %c0_177, %c0_178] : memref<6x6x64xbf16, #tpu.memory_space<vmem>>, vector<4x4x64xbf16>
    %167 = vector.shape_cast %166 : vector<4x4x64xbf16> to vector<16x64xbf16>
    %c3_179 = arith.constant 3 : index
    %c0_180 = arith.constant 0 : index
    %c0_181 = arith.constant 0 : index
    %168 = vector.load %arg6[%c3_179, %c0_180, %c0_181] : memref<9x64x64xbf16, #tpu.memory_space<vmem>>, vector<1x64x64xbf16>
    %169 = vector.shape_cast %168 : vector<1x64x64xbf16> to vector<64x64xbf16>
    %cst_182 = arith.constant dense<0.000000e+00> : vector<16x64xf32>
    %170 = tpu.matmul %167, %169, %cst_182 {dimension_numbers = #tpu.dot_dimension_numbers<[1], [0], [0], [1], [0, 0, 1, 1], [], []>} : vector<16x64xbf16>, vector<64x64xbf16>, vector<16x64xf32> -> vector<16x64xf32>
    %171 = arith.addf %165, %170 : vector<16x64xf32>
    %c1_183 = arith.constant 1 : index
    %c1_184 = arith.constant 1 : index
    %c0_185 = arith.constant 0 : index
    %172 = vector.load %arg12[%c1_183, %c1_184, %c0_185] : memref<6x6x64xbf16, #tpu.memory_space<vmem>>, vector<4x4x64xbf16>
    %173 = vector.shape_cast %172 : vector<4x4x64xbf16> to vector<16x64xbf16>
    %c4_186 = arith.constant 4 : index
    %c0_187 = arith.constant 0 : index
    %c0_188 = arith.constant 0 : index
    %174 = vector.load %arg6[%c4_186, %c0_187, %c0_188] : memref<9x64x64xbf16, #tpu.memory_space<vmem>>, vector<1x64x64xbf16>
    %175 = vector.shape_cast %174 : vector<1x64x64xbf16> to vector<64x64xbf16>
    %cst_189 = arith.constant dense<0.000000e+00> : vector<16x64xf32>
    %176 = tpu.matmul %173, %175, %cst_189 {dimension_numbers = #tpu.dot_dimension_numbers<[1], [0], [0], [1], [0, 0, 1, 1], [], []>} : vector<16x64xbf16>, vector<64x64xbf16>, vector<16x64xf32> -> vector<16x64xf32>
    %177 = arith.addf %171, %176 : vector<16x64xf32>
    %c1_190 = arith.constant 1 : index
    %c2_191 = arith.constant 2 : index
    %c0_192 = arith.constant 0 : index
    %178 = vector.load %arg12[%c1_190, %c2_191, %c0_192] : memref<6x6x64xbf16, #tpu.memory_space<vmem>>, vector<4x4x64xbf16>
    %179 = vector.shape_cast %178 : vector<4x4x64xbf16> to vector<16x64xbf16>
    %c5_193 = arith.constant 5 : index
    %c0_194 = arith.constant 0 : index
    %c0_195 = arith.constant 0 : index
    %180 = vector.load %arg6[%c5_193, %c0_194, %c0_195] : memref<9x64x64xbf16, #tpu.memory_space<vmem>>, vector<1x64x64xbf16>
    %181 = vector.shape_cast %180 : vector<1x64x64xbf16> to vector<64x64xbf16>
    %cst_196 = arith.constant dense<0.000000e+00> : vector<16x64xf32>
    %182 = tpu.matmul %179, %181, %cst_196 {dimension_numbers = #tpu.dot_dimension_numbers<[1], [0], [0], [1], [0, 0, 1, 1], [], []>} : vector<16x64xbf16>, vector<64x64xbf16>, vector<16x64xf32> -> vector<16x64xf32>
    %183 = arith.addf %177, %182 : vector<16x64xf32>
    %c2_197 = arith.constant 2 : index
    %c0_198 = arith.constant 0 : index
    %c0_199 = arith.constant 0 : index
    %184 = vector.load %arg12[%c2_197, %c0_198, %c0_199] : memref<6x6x64xbf16, #tpu.memory_space<vmem>>, vector<4x4x64xbf16>
    %185 = vector.shape_cast %184 : vector<4x4x64xbf16> to vector<16x64xbf16>
    %c6_200 = arith.constant 6 : index
    %c0_201 = arith.constant 0 : index
    %c0_202 = arith.constant 0 : index
    %186 = vector.load %arg6[%c6_200, %c0_201, %c0_202] : memref<9x64x64xbf16, #tpu.memory_space<vmem>>, vector<1x64x64xbf16>
    %187 = vector.shape_cast %186 : vector<1x64x64xbf16> to vector<64x64xbf16>
    %cst_203 = arith.constant dense<0.000000e+00> : vector<16x64xf32>
    %188 = tpu.matmul %185, %187, %cst_203 {dimension_numbers = #tpu.dot_dimension_numbers<[1], [0], [0], [1], [0, 0, 1, 1], [], []>} : vector<16x64xbf16>, vector<64x64xbf16>, vector<16x64xf32> -> vector<16x64xf32>
    %189 = arith.addf %183, %188 : vector<16x64xf32>
    %c2_204 = arith.constant 2 : index
    %c1_205 = arith.constant 1 : index
    %c0_206 = arith.constant 0 : index
    %190 = vector.load %arg12[%c2_204, %c1_205, %c0_206] : memref<6x6x64xbf16, #tpu.memory_space<vmem>>, vector<4x4x64xbf16>
    %191 = vector.shape_cast %190 : vector<4x4x64xbf16> to vector<16x64xbf16>
    %c7_207 = arith.constant 7 : index
    %c0_208 = arith.constant 0 : index
    %c0_209 = arith.constant 0 : index
    %192 = vector.load %arg6[%c7_207, %c0_208, %c0_209] : memref<9x64x64xbf16, #tpu.memory_space<vmem>>, vector<1x64x64xbf16>
    %193 = vector.shape_cast %192 : vector<1x64x64xbf16> to vector<64x64xbf16>
    %cst_210 = arith.constant dense<0.000000e+00> : vector<16x64xf32>
    %194 = tpu.matmul %191, %193, %cst_210 {dimension_numbers = #tpu.dot_dimension_numbers<[1], [0], [0], [1], [0, 0, 1, 1], [], []>} : vector<16x64xbf16>, vector<64x64xbf16>, vector<16x64xf32> -> vector<16x64xf32>
    %195 = arith.addf %189, %194 : vector<16x64xf32>
    %c2_211 = arith.constant 2 : index
    %c2_212 = arith.constant 2 : index
    %c0_213 = arith.constant 0 : index
    %196 = vector.load %arg12[%c2_211, %c2_212, %c0_213] : memref<6x6x64xbf16, #tpu.memory_space<vmem>>, vector<4x4x64xbf16>
    %197 = vector.shape_cast %196 : vector<4x4x64xbf16> to vector<16x64xbf16>
    %c8_214 = arith.constant 8 : index
    %c0_215 = arith.constant 0 : index
    %c0_216 = arith.constant 0 : index
    %198 = vector.load %arg6[%c8_214, %c0_215, %c0_216] : memref<9x64x64xbf16, #tpu.memory_space<vmem>>, vector<1x64x64xbf16>
    %199 = vector.shape_cast %198 : vector<1x64x64xbf16> to vector<64x64xbf16>
    %cst_217 = arith.constant dense<0.000000e+00> : vector<16x64xf32>
    %200 = tpu.matmul %197, %199, %cst_217 {dimension_numbers = #tpu.dot_dimension_numbers<[1], [0], [0], [1], [0, 0, 1, 1], [], []>} : vector<16x64xbf16>, vector<64x64xbf16>, vector<16x64xf32> -> vector<16x64xf32>
    %201 = arith.addf %195, %200 : vector<16x64xf32>
    %c0_218 = arith.constant 0 : index
    %c0_219 = arith.constant 0 : index
    %202 = vector.load %arg7[%c0_218, %c0_219] : memref<1x64xf32, #tpu.memory_space<vmem>>, vector<1x64xf32>
    %203 = vector.broadcast %202 : vector<1x64xf32> to vector<16x64xf32>
    %204 = arith.addf %201, %203 : vector<16x64xf32>
    %cst_220 = arith.constant 0.000000e+00 : f32
    %205 = vector.broadcast %cst_220 : f32 to vector<16x64xf32>
    %206 = arith.maximumf %204, %205 : vector<16x64xf32>
    %cst_221 = arith.constant 0.000000e+00 : bf16
    %207 = vector.broadcast %cst_221 : bf16 to vector<6x6x64xbf16>
    %c0_222 = arith.constant 0 : index
    %c0_223 = arith.constant 0 : index
    %c0_224 = arith.constant 0 : index
    %208 = vector.load %arg11[%c0_222, %c0_223, %c0_224] : memref<6x6x64xbf16, #tpu.memory_space<vmem>>, vector<6x6x64xbf16>
    tpu.vector_store %arg11[%c0_222, %c0_223, %c0_224], %207 {strides = array<i32>} : memref<6x6x64xbf16, #tpu.memory_space<vmem>>, vector<6x6x64xbf16>,
    %209 = vector.shape_cast %206 : vector<16x64xf32> to vector<4x4x64xf32>
    %210 = arith.truncf %209 : vector<4x4x64xf32> to vector<4x4x64xbf16>
    %c1_225 = arith.constant 1 : index
    %c1_226 = arith.constant 1 : index
    %c0_227 = arith.constant 0 : index
    %211 = vector.load %arg11[%c1_225, %c1_226, %c0_227] : memref<6x6x64xbf16, #tpu.memory_space<vmem>>, vector<4x4x64xbf16>
    tpu.vector_store %arg11[%c1_225, %c1_226, %c0_227], %210 {strides = array<i32>} : memref<6x6x64xbf16, #tpu.memory_space<vmem>>, vector<4x4x64xbf16>,
    %cst_228 = arith.constant 0.000000e+00 : f32
    %212 = vector.broadcast %cst_228 : f32 to vector<16x64xf32>
    %c0_229 = arith.constant 0 : index
    %c0_230 = arith.constant 0 : index
    %c0_231 = arith.constant 0 : index
    %213 = vector.load %arg11[%c0_229, %c0_230, %c0_231] : memref<6x6x64xbf16, #tpu.memory_space<vmem>>, vector<4x4x64xbf16>
    %214 = vector.shape_cast %213 : vector<4x4x64xbf16> to vector<16x64xbf16>
    %c0_232 = arith.constant 0 : index
    %c0_233 = arith.constant 0 : index
    %c0_234 = arith.constant 0 : index
    %215 = vector.load %arg8[%c0_232, %c0_233, %c0_234] : memref<9x64x64xbf16, #tpu.memory_space<vmem>>, vector<1x64x64xbf16>
    %216 = vector.shape_cast %215 : vector<1x64x64xbf16> to vector<64x64xbf16>
    %cst_235 = arith.constant dense<0.000000e+00> : vector<16x64xf32>
    %217 = tpu.matmul %214, %216, %cst_235 {dimension_numbers = #tpu.dot_dimension_numbers<[1], [0], [0], [1], [0, 0, 1, 1], [], []>} : vector<16x64xbf16>, vector<64x64xbf16>, vector<16x64xf32> -> vector<16x64xf32>
    %218 = arith.addf %212, %217 : vector<16x64xf32>
    %c0_236 = arith.constant 0 : index
    %c1_237 = arith.constant 1 : index
    %c0_238 = arith.constant 0 : index
    %219 = vector.load %arg11[%c0_236, %c1_237, %c0_238] : memref<6x6x64xbf16, #tpu.memory_space<vmem>>, vector<4x4x64xbf16>
    %220 = vector.shape_cast %219 : vector<4x4x64xbf16> to vector<16x64xbf16>
    %c1_239 = arith.constant 1 : index
    %c0_240 = arith.constant 0 : index
    %c0_241 = arith.constant 0 : index
    %221 = vector.load %arg8[%c1_239, %c0_240, %c0_241] : memref<9x64x64xbf16, #tpu.memory_space<vmem>>, vector<1x64x64xbf16>
    %222 = vector.shape_cast %221 : vector<1x64x64xbf16> to vector<64x64xbf16>
    %cst_242 = arith.constant dense<0.000000e+00> : vector<16x64xf32>
    %223 = tpu.matmul %220, %222, %cst_242 {dimension_numbers = #tpu.dot_dimension_numbers<[1], [0], [0], [1], [0, 0, 1, 1], [], []>} : vector<16x64xbf16>, vector<64x64xbf16>, vector<16x64xf32> -> vector<16x64xf32>
    %224 = arith.addf %218, %223 : vector<16x64xf32>
    %c0_243 = arith.constant 0 : index
    %c2_244 = arith.constant 2 : index
    %c0_245 = arith.constant 0 : index
    %225 = vector.load %arg11[%c0_243, %c2_244, %c0_245] : memref<6x6x64xbf16, #tpu.memory_space<vmem>>, vector<4x4x64xbf16>
    %226 = vector.shape_cast %225 : vector<4x4x64xbf16> to vector<16x64xbf16>
    %c2_246 = arith.constant 2 : index
    %c0_247 = arith.constant 0 : index
    %c0_248 = arith.constant 0 : index
    %227 = vector.load %arg8[%c2_246, %c0_247, %c0_248] : memref<9x64x64xbf16, #tpu.memory_space<vmem>>, vector<1x64x64xbf16>
    %228 = vector.shape_cast %227 : vector<1x64x64xbf16> to vector<64x64xbf16>
    %cst_249 = arith.constant dense<0.000000e+00> : vector<16x64xf32>
    %229 = tpu.matmul %226, %228, %cst_249 {dimension_numbers = #tpu.dot_dimension_numbers<[1], [0], [0], [1], [0, 0, 1, 1], [], []>} : vector<16x64xbf16>, vector<64x64xbf16>, vector<16x64xf32> -> vector<16x64xf32>
    %230 = arith.addf %224, %229 : vector<16x64xf32>
    %c1_250 = arith.constant 1 : index
    %c0_251 = arith.constant 0 : index
    %c0_252 = arith.constant 0 : index
    %231 = vector.load %arg11[%c1_250, %c0_251, %c0_252] : memref<6x6x64xbf16, #tpu.memory_space<vmem>>, vector<4x4x64xbf16>
    %232 = vector.shape_cast %231 : vector<4x4x64xbf16> to vector<16x64xbf16>
    %c3_253 = arith.constant 3 : index
    %c0_254 = arith.constant 0 : index
    %c0_255 = arith.constant 0 : index
    %233 = vector.load %arg8[%c3_253, %c0_254, %c0_255] : memref<9x64x64xbf16, #tpu.memory_space<vmem>>, vector<1x64x64xbf16>
    %234 = vector.shape_cast %233 : vector<1x64x64xbf16> to vector<64x64xbf16>
    %cst_256 = arith.constant dense<0.000000e+00> : vector<16x64xf32>
    %235 = tpu.matmul %232, %234, %cst_256 {dimension_numbers = #tpu.dot_dimension_numbers<[1], [0], [0], [1], [0, 0, 1, 1], [], []>} : vector<16x64xbf16>, vector<64x64xbf16>, vector<16x64xf32> -> vector<16x64xf32>
    %236 = arith.addf %230, %235 : vector<16x64xf32>
    %c1_257 = arith.constant 1 : index
    %c1_258 = arith.constant 1 : index
    %c0_259 = arith.constant 0 : index
    %237 = vector.load %arg11[%c1_257, %c1_258, %c0_259] : memref<6x6x64xbf16, #tpu.memory_space<vmem>>, vector<4x4x64xbf16>
    %238 = vector.shape_cast %237 : vector<4x4x64xbf16> to vector<16x64xbf16>
    %c4_260 = arith.constant 4 : index
    %c0_261 = arith.constant 0 : index
    %c0_262 = arith.constant 0 : index
    %239 = vector.load %arg8[%c4_260, %c0_261, %c0_262] : memref<9x64x64xbf16, #tpu.memory_space<vmem>>, vector<1x64x64xbf16>
    %240 = vector.shape_cast %239 : vector<1x64x64xbf16> to vector<64x64xbf16>
    %cst_263 = arith.constant dense<0.000000e+00> : vector<16x64xf32>
    %241 = tpu.matmul %238, %240, %cst_263 {dimension_numbers = #tpu.dot_dimension_numbers<[1], [0], [0], [1], [0, 0, 1, 1], [], []>} : vector<16x64xbf16>, vector<64x64xbf16>, vector<16x64xf32> -> vector<16x64xf32>
    %242 = arith.addf %236, %241 : vector<16x64xf32>
    %c1_264 = arith.constant 1 : index
    %c2_265 = arith.constant 2 : index
    %c0_266 = arith.constant 0 : index
    %243 = vector.load %arg11[%c1_264, %c2_265, %c0_266] : memref<6x6x64xbf16, #tpu.memory_space<vmem>>, vector<4x4x64xbf16>
    %244 = vector.shape_cast %243 : vector<4x4x64xbf16> to vector<16x64xbf16>
    %c5_267 = arith.constant 5 : index
    %c0_268 = arith.constant 0 : index
    %c0_269 = arith.constant 0 : index
    %245 = vector.load %arg8[%c5_267, %c0_268, %c0_269] : memref<9x64x64xbf16, #tpu.memory_space<vmem>>, vector<1x64x64xbf16>
    %246 = vector.shape_cast %245 : vector<1x64x64xbf16> to vector<64x64xbf16>
    %cst_270 = arith.constant dense<0.000000e+00> : vector<16x64xf32>
    %247 = tpu.matmul %244, %246, %cst_270 {dimension_numbers = #tpu.dot_dimension_numbers<[1], [0], [0], [1], [0, 0, 1, 1], [], []>} : vector<16x64xbf16>, vector<64x64xbf16>, vector<16x64xf32> -> vector<16x64xf32>
    %248 = arith.addf %242, %247 : vector<16x64xf32>
    %c2_271 = arith.constant 2 : index
    %c0_272 = arith.constant 0 : index
    %c0_273 = arith.constant 0 : index
    %249 = vector.load %arg11[%c2_271, %c0_272, %c0_273] : memref<6x6x64xbf16, #tpu.memory_space<vmem>>, vector<4x4x64xbf16>
    %250 = vector.shape_cast %249 : vector<4x4x64xbf16> to vector<16x64xbf16>
    %c6_274 = arith.constant 6 : index
    %c0_275 = arith.constant 0 : index
    %c0_276 = arith.constant 0 : index
    %251 = vector.load %arg8[%c6_274, %c0_275, %c0_276] : memref<9x64x64xbf16, #tpu.memory_space<vmem>>, vector<1x64x64xbf16>
    %252 = vector.shape_cast %251 : vector<1x64x64xbf16> to vector<64x64xbf16>
    %cst_277 = arith.constant dense<0.000000e+00> : vector<16x64xf32>
    %253 = tpu.matmul %250, %252, %cst_277 {dimension_numbers = #tpu.dot_dimension_numbers<[1], [0], [0], [1], [0, 0, 1, 1], [], []>} : vector<16x64xbf16>, vector<64x64xbf16>, vector<16x64xf32> -> vector<16x64xf32>
    %254 = arith.addf %248, %253 : vector<16x64xf32>
    %c2_278 = arith.constant 2 : index
    %c1_279 = arith.constant 1 : index
    %c0_280 = arith.constant 0 : index
    %255 = vector.load %arg11[%c2_278, %c1_279, %c0_280] : memref<6x6x64xbf16, #tpu.memory_space<vmem>>, vector<4x4x64xbf16>
    %256 = vector.shape_cast %255 : vector<4x4x64xbf16> to vector<16x64xbf16>
    %c7_281 = arith.constant 7 : index
    %c0_282 = arith.constant 0 : index
    %c0_283 = arith.constant 0 : index
    %257 = vector.load %arg8[%c7_281, %c0_282, %c0_283] : memref<9x64x64xbf16, #tpu.memory_space<vmem>>, vector<1x64x64xbf16>
    %258 = vector.shape_cast %257 : vector<1x64x64xbf16> to vector<64x64xbf16>
    %cst_284 = arith.constant dense<0.000000e+00> : vector<16x64xf32>
    %259 = tpu.matmul %256, %258, %cst_284 {dimension_numbers = #tpu.dot_dimension_numbers<[1], [0], [0], [1], [0, 0, 1, 1], [], []>} : vector<16x64xbf16>, vector<64x64xbf16>, vector<16x64xf32> -> vector<16x64xf32>
    %260 = arith.addf %254, %259 : vector<16x64xf32>
    %c2_285 = arith.constant 2 : index
    %c2_286 = arith.constant 2 : index
    %c0_287 = arith.constant 0 : index
    %261 = vector.load %arg11[%c2_285, %c2_286, %c0_287] : memref<6x6x64xbf16, #tpu.memory_space<vmem>>, vector<4x4x64xbf16>
    %262 = vector.shape_cast %261 : vector<4x4x64xbf16> to vector<16x64xbf16>
    %c8_288 = arith.constant 8 : index
    %c0_289 = arith.constant 0 : index
    %c0_290 = arith.constant 0 : index
    %263 = vector.load %arg8[%c8_288, %c0_289, %c0_290] : memref<9x64x64xbf16, #tpu.memory_space<vmem>>, vector<1x64x64xbf16>
    %264 = vector.shape_cast %263 : vector<1x64x64xbf16> to vector<64x64xbf16>
    %cst_291 = arith.constant dense<0.000000e+00> : vector<16x64xf32>
    %265 = tpu.matmul %262, %264, %cst_291 {dimension_numbers = #tpu.dot_dimension_numbers<[1], [0], [0], [1], [0, 0, 1, 1], [], []>} : vector<16x64xbf16>, vector<64x64xbf16>, vector<16x64xf32> -> vector<16x64xf32>
    %266 = arith.addf %260, %265 : vector<16x64xf32>
    %c0_292 = arith.constant 0 : index
    %c0_293 = arith.constant 0 : index
    %267 = vector.load %arg9[%c0_292, %c0_293] : memref<1x64xf32, #tpu.memory_space<vmem>>, vector<1x64xf32>
    %268 = vector.broadcast %267 : vector<1x64xf32> to vector<16x64xf32>
    %269 = arith.addf %266, %268 : vector<16x64xf32>
    %270 = arith.addf %269, %146 : vector<16x64xf32>
    %cst_294 = arith.constant 0.000000e+00 : f32
    %271 = vector.broadcast %cst_294 : f32 to vector<16x64xf32>
    %272 = arith.maximumf %270, %271 : vector<16x64xf32>
    %cst_295 = arith.constant 0.000000e+00 : bf16
    %273 = vector.broadcast %cst_295 : bf16 to vector<6x6x64xbf16>
    %c0_296 = arith.constant 0 : index
    %c0_297 = arith.constant 0 : index
    %c0_298 = arith.constant 0 : index
    %c0_299 = arith.constant 0 : index
    %274 = vector.load %arg10[%c0_296, %c0_297, %c0_298, %c0_299] : memref<1x6x6x64xbf16, #tpu.memory_space<vmem>>, vector<1x6x6x64xbf16>
    %275 = vector.shape_cast %274 : vector<1x6x6x64xbf16> to vector<6x6x64xbf16>
    %276 = vector.shape_cast %273 : vector<6x6x64xbf16> to vector<1x6x6x64xbf16>
    tpu.vector_store %arg10[%c0_296, %c0_297, %c0_298, %c0_299], %276 {strides = array<i32>} : memref<1x6x6x64xbf16, #tpu.memory_space<vmem>>, vector<1x6x6x64xbf16>,
    %277 = vector.shape_cast %272 : vector<16x64xf32> to vector<4x4x64xf32>
    %278 = arith.truncf %277 : vector<4x4x64xf32> to vector<4x4x64xbf16>
    %c0_300 = arith.constant 0 : index
    %c1_301 = arith.constant 1 : index
    %c1_302 = arith.constant 1 : index
    %c0_303 = arith.constant 0 : index
    %279 = vector.load %arg10[%c0_300, %c1_301, %c1_302, %c0_303] : memref<1x6x6x64xbf16, #tpu.memory_space<vmem>>, vector<1x4x4x64xbf16>
    %280 = vector.shape_cast %279 : vector<1x4x4x64xbf16> to vector<4x4x64xbf16>
    %281 = vector.shape_cast %278 : vector<4x4x64xbf16> to vector<1x4x4x64xbf16>
    tpu.vector_store %arg10[%c0_300, %c1_301, %c1_302, %c0_303], %281 {strides = array<i32>} : memref<1x6x6x64xbf16, #tpu.memory_space<vmem>>, vector<1x4x4x64xbf16>,
    return
  }
  func.func @transform_0(%arg0: i32) -> (i32, i32, i32, i32) {
    %c0_i32 = arith.constant 0 : i32
    %c0_i32_0 = arith.constant 0 : i32
    %c0_i32_1 = arith.constant 0 : i32
    %c0_i32_2 = arith.constant 0 : i32
    return %arg0, %c0_i32, %c0_i32_0, %c0_i32_1 : i32, i32, i32, i32
  }
  func.func @transform_1(%arg0: i32) -> (i32, i32, i32) {
    %c0_i32 = arith.constant 0 : i32
    %c0_i32_0 = arith.constant 0 : i32
    %c0_i32_1 = arith.constant 0 : i32
    %c0_i32_2 = arith.constant 0 : i32
    return %c0_i32, %c0_i32_0, %c0_i32_1 : i32, i32, i32
  }
  func.func @transform_2(%arg0: i32) -> (i32, i32) {
    %c0_i32 = arith.constant 0 : i32
    %c0_i32_0 = arith.constant 0 : i32
    %c0_i32_1 = arith.constant 0 : i32
    return %c0_i32, %c0_i32_0 : i32, i32
  }
  func.func @transform_3(%arg0: i32) -> (i32, i32, i32) {
    %c0_i32 = arith.constant 0 : i32
    %c0_i32_0 = arith.constant 0 : i32
    %c0_i32_1 = arith.constant 0 : i32
    %c0_i32_2 = arith.constant 0 : i32
    return %c0_i32, %c0_i32_0, %c0_i32_1 : i32, i32, i32
  }
  func.func @transform_4(%arg0: i32) -> (i32, i32) {
    %c0_i32 = arith.constant 0 : i32
    %c0_i32_0 = arith.constant 0 : i32
    %c0_i32_1 = arith.constant 0 : i32
    return %c0_i32, %c0_i32_0 : i32, i32
  }
  func.func @transform_5(%arg0: i32) -> (i32, i32, i32) {
    %c0_i32 = arith.constant 0 : i32
    %c0_i32_0 = arith.constant 0 : i32
    %c0_i32_1 = arith.constant 0 : i32
    %c0_i32_2 = arith.constant 0 : i32
    return %c0_i32, %c0_i32_0, %c0_i32_1 : i32, i32, i32
  }
  func.func @transform_6(%arg0: i32) -> (i32, i32) {
    %c0_i32 = arith.constant 0 : i32
    %c0_i32_0 = arith.constant 0 : i32
    %c0_i32_1 = arith.constant 0 : i32
    return %c0_i32, %c0_i32_0 : i32, i32
  }
  func.func @transform_7(%arg0: i32) -> (i32, i32, i32) {
    %c0_i32 = arith.constant 0 : i32
    %c0_i32_0 = arith.constant 0 : i32
    %c0_i32_1 = arith.constant 0 : i32
    %c0_i32_2 = arith.constant 0 : i32
    return %c0_i32, %c0_i32_0, %c0_i32_1 : i32, i32, i32
  }
  func.func @transform_8(%arg0: i32) -> (i32, i32) {
    %c0_i32 = arith.constant 0 : i32
    %c0_i32_0 = arith.constant 0 : i32
    %c0_i32_1 = arith.constant 0 : i32
    return %c0_i32, %c0_i32_0 : i32, i32
  }
  func.func @transform_9(%arg0: i32) -> (i32, i32, i32, i32) {
    %c0_i32 = arith.constant 0 : i32
    %c0_i32_0 = arith.constant 0 : i32
    %c0_i32_1 = arith.constant 0 : i32
    %c0_i32_2 = arith.constant 0 : i32
    return %arg0, %c0_i32, %c0_i32_0, %c0_i32_1 : i32, i32, i32, i32
  }
}

module attributes {stable_mosaic.version = 11 : i64} {
  func.func @_head_kernel(%arg0: memref<2x6x6x64xbf16, #tpu.memory_space<vmem>>, %arg1: memref<64x32xbf16, #tpu.memory_space<vmem>>, %arg2: memref<1x32xf32, #tpu.memory_space<vmem>>, %arg3: memref<32x10xbf16, #tpu.memory_space<vmem>>, %arg4: memref<1x10xf32, #tpu.memory_space<vmem>>, %arg5: memref<2x10xf32, #tpu.memory_space<vmem>>) attributes {dimension_semantics = [], scalar_prefetch = 0 : i64, scratch_operands = 0 : i64, tpu.core_type = #tpu.core_type<tc>} {
    %c0 = arith.constant 0 : index
    %c0_0 = arith.constant 0 : index
    %c0_1 = arith.constant 0 : index
    %c0_2 = arith.constant 0 : index
    %0 = vector.load %arg0[%c0, %c0_0, %c0_1, %c0_2] : memref<2x6x6x64xbf16, #tpu.memory_space<vmem>>, vector<2x6x6x64xbf16>
    %1 = arith.extf %0 : vector<2x6x6x64xbf16> to vector<2x6x6x64xf32>
    %cst = arith.constant dense<0.000000e+00> : vector<2x6x64xf32>
    %2 = vector.multi_reduction <add>, %1, %cst [1] : vector<2x6x6x64xf32> to vector<2x6x64xf32>
    %cst_3 = arith.constant dense<0.000000e+00> : vector<2x64xf32>
    %3 = vector.multi_reduction <add>, %2, %cst_3 [1] : vector<2x6x64xf32> to vector<2x64xf32>
    %c0_4 = arith.constant 0 : index
    %c0_5 = arith.constant 0 : index
    %4 = vector.load %arg1[%c0_4, %c0_5] : memref<64x32xbf16, #tpu.memory_space<vmem>>, vector<64x32xbf16>
    %c0_6 = arith.constant 0 : index
    %c0_7 = arith.constant 0 : index
    %5 = vector.load %arg2[%c0_6, %c0_7] : memref<1x32xf32, #tpu.memory_space<vmem>>, vector<1x32xf32>
    %6 = arith.truncf %3 : vector<2x64xf32> to vector<2x64xbf16>
    %cst_8 = arith.constant dense<0.000000e+00> : vector<2x32xf32>
    %7 = tpu.matmul %6, %4, %cst_8 {dimension_numbers = #tpu.dot_dimension_numbers<[1], [0], [0], [1], [0, 0, 1, 1], [], []>} : vector<2x64xbf16>, vector<64x32xbf16>, vector<2x32xf32> -> vector<2x32xf32>
    %8 = vector.broadcast %5 : vector<1x32xf32> to vector<2x32xf32>
    %9 = arith.addf %7, %8 : vector<2x32xf32>
    %cst_9 = arith.constant 0.000000e+00 : f32
    %10 = vector.broadcast %cst_9 : f32 to vector<2x32xf32>
    %11 = arith.maximumf %9, %10 : vector<2x32xf32>
    %c0_10 = arith.constant 0 : index
    %c0_11 = arith.constant 0 : index
    %12 = vector.load %arg3[%c0_10, %c0_11] : memref<32x10xbf16, #tpu.memory_space<vmem>>, vector<32x10xbf16>
    %c0_12 = arith.constant 0 : index
    %c0_13 = arith.constant 0 : index
    %13 = vector.load %arg4[%c0_12, %c0_13] : memref<1x10xf32, #tpu.memory_space<vmem>>, vector<1x10xf32>
    %14 = arith.truncf %11 : vector<2x32xf32> to vector<2x32xbf16>
    %cst_14 = arith.constant dense<0.000000e+00> : vector<2x10xf32>
    %15 = tpu.matmul %14, %12, %cst_14 {dimension_numbers = #tpu.dot_dimension_numbers<[1], [0], [0], [1], [0, 0, 1, 1], [], []>} : vector<2x32xbf16>, vector<32x10xbf16>, vector<2x10xf32> -> vector<2x10xf32>
    %16 = vector.broadcast %13 : vector<1x10xf32> to vector<2x10xf32>
    %17 = arith.addf %15, %16 : vector<2x10xf32>
    %c0_15 = arith.constant 0 : index
    %c0_16 = arith.constant 0 : index
    %18 = vector.load %arg5[%c0_15, %c0_16] : memref<2x10xf32, #tpu.memory_space<vmem>>, vector<2x10xf32>
    tpu.vector_store %arg5[%c0_15, %c0_16], %17 {strides = array<i32>} : memref<2x10xf32, #tpu.memory_space<vmem>>, vector<2x10xf32>,
    return
  }
}

</mosaic_0001>

<llo_original>
// kernel: sresnet_forward.3
$region0: #{sresnet_forward.3}
  #allocation0 [shape = 'u32[]', space=smem, size = 0x4, offset = 0x4, fixed_abs, tag = 'smem constant byte address 0x4 - core index']
  #allocation1 [shape = 'u32[72,128]{1,0:T(1,128)}', space=vmem, size = 0x9000, scoped, tag = 'internal scratch']
  #allocation2 [shape = 'f32[10,10,64]{2,1,0:T(8,128)}', space=vmem, size = 0x14000, scoped, tag = 'scratch operand']
  #allocation3 [shape = 'f32[10,64]{1,0:T(8,128)}', space=vmem, size = 0x2000, scoped, tag = 'scratch operand']
  %s0 = inlined_call_operand.vmem [shape: bf16[2,64,152], index: 0, kind: input, shape index: {}]
  %s1 = inlined_call_operand.vmem [shape: bf16[152,64], index: 1, kind: input, shape index: {}]
  %s2 = inlined_call_operand.vmem [shape: f32[1,64], index: 2, kind: input, shape index: {}]
  %s3 = inlined_call_operand.vmem [shape: bf16[2,6,6,64], index: 3, kind: output, shape index: {}]
  %s4 = sld [smem:[#allocation0]]
  $region45: #{sresnet_forward.3} parent=0
    _
  %s6 = ssub.s32 1, %s4
  %s7 = scalar_select 0, %s6, %s4
  loop: start=0, step=1, limit=4
  $region2: #{sresnet_forward.3} parent=0 // loop_pre_header
    _
  $region3: #{sresnet_forward.3} parent=0 // loop_header
    %s9 = sphi 0, %s13
    %p10 = scmp.ge.s32.totalorder %s9, 4
    %s19 = sphi 0, %s21
    %s22 = sphi 0, %s19
    %s23 = sphi 0, %s22
    %s39 = sphi 0, %s23
    %s43 = sphi 0, %s43
    %s45 = sphi 0, %s43
    %s46 = sphi 0, %s45
    %s60 = sphi 0, %s46
    %s64 = sphi 0, %s64
    %s66 = sphi 0, %s64
    %s67 = sphi 0, %s66
    %s81 = sphi 0, %s67
    %s87 = sphi 0, %s89
    %s90 = sphi 0, %s87
    %s91 = sphi 0, %s90
    %s107 = sphi 0, %s91
  $region4: #{sresnet_forward.3} parent=0 // loop_header_branch
    %12 = sbr.rel (%p10) target = $region8
  $region5: #{sresnet_forward.3} parent=0 // loop_body
    %s14 = ssub.s32 %s9, 1
    %s15 = ssub.s32 %s9, 2
    %s16 = sadd.s32 %s9, 1
    %s17 = ssub.s32 %s9, %s16
    %p18 = scmp.eq.s32.totalorder %s17, 0
    %s20 = sadd.s32 %s19, 1
    %s21 = scalar_select %p18, %s19, %s20
    %p24 = pneg %p18
    %p25 = scmp.eq.s32.totalorder %s9, 1
    %p26 = por %p24, %p25
    %p27 = scmp.ne.s32.totalorder %s19, %s22
    %p28 = scmp.eq.s32.totalorder %s9, 0
    %p29 = por %p27, %p28
    %p30 = scmp.ne.s32.totalorder %s19, %s22
    %p31 = scmp.eq.s32.totalorder %s14, 1
    %p32 = por %p30, %p31
    %p33 = scmp.ne.s32.totalorder %s22, %s23
    %p34 = scmp.eq.s32.totalorder %s14, 0
    %p35 = por %p33, %p34
    %p36 = scmp.ne.s32.totalorder %s22, %s23
    %p37 = scmp.eq.s32.totalorder %s15, 1
    %p38 = por %p36, %p37
    %p40 = scmp.ne.s32.totalorder %s23, %s39
    %p41 = scmp.eq.s32.totalorder %s15, 0
    %p42 = por %p40, %p41
    %s44 = sadd.s32 %s43, 1
    %p47 = scmp.eq.s32.totalorder %s9, 1
    %p48 = scmp.ne.s32.totalorder %s43, %s45
    %p49 = scmp.eq.s32.totalorder %s9, 0
    %p50 = por %p48, %p49
    %p51 = scmp.ne.s32.totalorder %s43, %s45
    %p52 = scmp.eq.s32.totalorder %s14, 1
    %p53 = por %p51, %p52
    %p54 = scmp.ne.s32.totalorder %s45, %s46
    %p55 = scmp.eq.s32.totalorder %s14, 0
    %p56 = por %p54, %p55
    %p57 = scmp.ne.s32.totalorder %s45, %s46
    %p58 = scmp.eq.s32.totalorder %s15, 1
    %p59 = por %p57, %p58
    %p61 = scmp.ne.s32.totalorder %s46, %s60
    %p62 = scmp.eq.s32.totalorder %s15, 0
    %p63 = por %p61, %p62
    %s65 = sadd.s32 %s64, 1
    %p68 = scmp.eq.s32.totalorder %s9, 1
    %p69 = scmp.ne.s32.totalorder %s64, %s66
    %p70 = scmp.eq.s32.totalorder %s9, 0
    %p71 = por %p69, %p70
    %p72 = scmp.ne.s32.totalorder %s64, %s66
    %p73 = scmp.eq.s32.totalorder %s14, 1
    %p74 = por %p72, %p73
    %p75 = scmp.ne.s32.totalorder %s66, %s67
    %p76 = scmp.eq.s32.totalorder %s14, 0
    %p77 = por %p75, %p76
    %p78 = scmp.ne.s32.totalorder %s66, %s67
    %p79 = scmp.eq.s32.totalorder %s15, 1
    %p80 = por %p78, %p79
    %p82 = scmp.ne.s32.totalorder %s67, %s81
    %p83 = scmp.eq.s32.totalorder %s15, 0
    %p84 = por %p82, %p83
    %s85 = ssub.s32 %s9, %s16
    %p86 = scmp.eq.s32.totalorder %s85, 0
    %s88 = sadd.s32 %s87, 1
    %s89 = scalar_select %p86, %s87, %s88
    %p92 = pneg %p86
    %p93 = scmp.eq.s32.totalorder %s9, 1
    %p94 = por %p92, %p93
    %p95 = scmp.ne.s32.totalorder %s87, %s90
    %p96 = scmp.eq.s32.totalorder %s9, 0
    %p97 = por %p95, %p96
    %p98 = scmp.ne.s32.totalorder %s87, %s90
    %p99 = scmp.eq.s32.totalorder %s14, 1
    %p100 = por %p98, %p99
    %p101 = scmp.ne.s32.totalorder %s90, %s91
    %p102 = scmp.eq.s32.totalorder %s14, 0
    %p103 = por %p101, %p102
    %p104 = scmp.ne.s32.totalorder %s90, %s91
    %p105 = scmp.eq.s32.totalorder %s15, 1
    %p106 = por %p104, %p105
    %p108 = scmp.ne.s32.totalorder %s91, %s107
    %p109 = scmp.eq.s32.totalorder %s15, 0
    %p110 = por %p108, %p109
    %p111 = scmp.le.s32.totalorder 1, %s9
    %p112 = scmp.lt.s32.totalorder %s9, 3
    %p113 = pnand %p111, %p112
    %p114 = pneg %p113
    // Predicated region
    $region9: #{sresnet_forward.3} parent=5 // pred_check
      _
    $region10: #{sresnet_forward.3} parent=5 // pred_check_branch
      %116 = sbr.rel (%p113) target = $region12
    $region11: #{sresnet_forward.3} parent=5 // pred_region
      %s117 = ssub.s32 %s9, 1
      // Predicated region
      $region13: #{sresnet_forward.3} parent=11 // pred_check
        %p118 = pneg %p56
      $region14: #{sresnet_forward.3} parent=11 // pred_check_branch
        %120 = sbr.rel (%p118) target = $region16
      $region15: #{sresnet_forward.3} parent=11 // pred_region
        _
      $region16: #{sresnet_forward.3} parent=11 // pred_fallthru
        _
      // Predicated region
      $region17: #{sresnet_forward.3} parent=11 // pred_check
        %p121 = pneg %p77
      $region18: #{sresnet_forward.3} parent=11 // pred_check_branch
        %123 = sbr.rel (%p121) target = $region20
      $region19: #{sresnet_forward.3} parent=11 // pred_region
        _
      $region20: #{sresnet_forward.3} parent=11 // pred_fallthru
        _
    $region12: #{sresnet_forward.3} parent=5 // pred_fallthru
      _
    %p124 = scmp.lt.s32.totalorder %s9, 2
    // Predicated region
    $region21: #{sresnet_forward.3} parent=5 // pred_check
      %p125 = pneg %p124
    $region22: #{sresnet_forward.3} parent=5 // pred_check_branch
      %127 = sbr.rel (%p125) target = $region24
    $region23: #{sresnet_forward.3} parent=5 // pred_region
      // Predicated region
      $region25: #{sresnet_forward.3} parent=23 // pred_check
        %p128 = pneg %p29
      $region26: #{sresnet_forward.3} parent=23 // pred_check_branch
        %130 = sbr.rel (%p128) target = $region28
      $region27: #{sresnet_forward.3} parent=23 // pred_region
        %p131 = scmp.lt.s32.totalorder %s9, 1
        %s132 = scalar_select %p131, %s9, 1
        %s133 = smul.addr %s132, 16
        %s134 = smul.addr %s133, 4
        %s135 = scalar_lea.vmem %s0, %s134
      $region28: #{sresnet_forward.3} parent=23 // pred_fallthru
        _
    $region24: #{sresnet_forward.3} parent=5 // pred_fallthru
      _
    %p136 = scmp.le.s32.totalorder 1, %s9
    %p137 = scmp.lt.s32.totalorder %s9, 3
    %p138 = pnand %p136, %p137
    %p139 = pneg %p138
    // Predicated region
    $region29: #{sresnet_forward.3} parent=5 // pred_check
      _
    $region30: #{sresnet_forward.3} parent=5 // pred_check_branch
      %141 = sbr.rel (%p138) target = $region32
    $region31: #{sresnet_forward.3} parent=5 // pred_region
      %s142 = ssub.s32 %s9, 1
      %p143 = scmp.lt.s32.totalorder %s14, 1
      %s144 = scalar_select %p143, %s14, 1
      %s145 = smul.addr %s144, 16
      %s146 = smul.addr %s145, 4
      %s147 = scalar_lea.vmem %s0, %s146
      %p148 = pneg %p35
      %p149 = pneg %p32
      %p150 = pneg %p56
      %p151 = pneg %p53
      %p152 = pneg %p77
      %p153 = pneg %p74
      %p154 = pneg %p103
      %p155 = pneg %p100
      %p156 = scmp.lt.s32.totalorder %s14, 1
      %s157 = scalar_select %p156, %s14, 1
      %s158 = smul.addr %s157, 6
      %s159 = smul.addr %s158, 4
      %s160 = scalar_lea.vmem %s3, %s159
      %p161 = scmp.lt.s32.totalorder %s14, 1
      %s162 = scalar_select %p161, %s14, 1
      %s163 = smul.addr %s162, 16
      %s164 = smul.addr %s163, 4
      %s165 = scalar_lea.vmem %s0, %s164
      %p166 = scmp.lt.s32.totalorder %s14, 1
      %s167 = scalar_select %p166, %s14, 1
      %s168 = smul.addr %s167, 6
      %s169 = smul.addr %s168, 4
      %s170 = scalar_lea.vmem %s3, %s169
      %v172 = vld [vmem:[%s165] sm:$0xff]
      %v173 = vld [vmem:[%s165 + $0x8] sm:$0xff]
      %v174 = vld [vmem:[%s165 + $0x10] sm:$0xff]
      %v175 = vld [vmem:[%s165 + $0x18] sm:$0xff]
      %v176 = vld [vmem:[%s165 + $0x20] sm:$0xff]
      %v177 = vld [vmem:[%s165 + $0x28] sm:$0xff]
      %v178 = vld [vmem:[%s165 + $0x30] sm:$0xff]
      %v179 = vld [vmem:[%s165 + $0x38] sm:$0xff]
      %v180 = vld [vmem:[%s1] sm:$0xf]
      %v181 = vld [vmem:[%s1 + $0x4] sm:$0xf]
      %v182 = vld [vmem:[%s1 + $0x8] sm:$0xf]
      %v183 = vld [vmem:[%s1 + $0xc] sm:$0xf]
      %v184 = vld [vmem:[%s1 + $0x10] sm:$0xf]
      %v185 = vld [vmem:[%s1 + $0x14] sm:$0xf]
      %v186 = vld [vmem:[%s1 + $0x18] sm:$0xf]
      %v187 = vld [vmem:[%s1 + $0x1c] sm:$0xf]
      %v188 = vld [vmem:[%s1 + $0x20] sm:$0xf]
      %v189 = vld [vmem:[%s1 + $0x24] sm:$0xf]
      %v190 = vld [vmem:[%s1 + $0x28] sm:$0xf]
      %v191 = vld [vmem:[%s1 + $0x2c] sm:$0xf]
      %v192 = vld [vmem:[%s1 + $0x30] sm:$0xf]
      %v193 = vld [vmem:[%s1 + $0x34] sm:$0xf]
      %v194 = vld [vmem:[%s1 + $0x38] sm:$0xf]
      %v195 = vld [vmem:[%s1 + $0x3c] sm:$0xf]
      %v196 = vld [vmem:[%s1 + $0x40] sm:$0xf]
      %v197 = vld [vmem:[%s1 + $0x44] sm:$0xf]
      %v198 = vld [vmem:[%s1 + $0x48] sm:$0xf]
      %v199 = vld [vmem:[%s2] sm:$0x1]
      %v201 = vperm.slane %v199, 0
      %v211 = vunpack.c.l.b16 %v172
      %v212 = vunpack.c.h.b16 %v172
      %v213 = vunpack.c.l.b16 %v173
      %v214 = vunpack.c.h.b16 %v173
      %v215 = vunpack.c.l.b16 %v174
      %v216 = vunpack.c.h.b16 %v174
      %v217 = vunpack.c.l.b16 %v175
      %v218 = vunpack.c.h.b16 %v175
      %v219 = vunpack.c.l.b16 %v176
      %v220 = vunpack.c.h.b16 %v176
      %v221 = vunpack.c.l.b16 %v177
      %v222 = vunpack.c.h.b16 %v177
      %v223 = vunpack.c.l.b16 %v178
      %v224 = vunpack.c.h.b16 %v178
      %v225 = vunpack.c.l.b16 %v179
      %v226 = vunpack.c.h.b16 %v179
      %v227 = vpack.c.b16 %v213, %v211
      %v228 = vpack.c.b16 %v214, %v212
      %v229 = vpack.c.b16 %v217, %v215
      %v230 = vpack.c.b16 %v218, %v216
      %v231 = vpack.c.b16 %v221, %v219
      %v232 = vpack.c.b16 %v222, %v220
      %v233 = vpack.c.b16 %v225, %v223
      %v234 = vpack.c.b16 %v226, %v224
      %v258 = vunpack.c.l.b16 %v180
      %v259 = vunpack.c.l.b16 %v181
      %v260 = vunpack.c.l.b16 %v182
      %v261 = vunpack.c.l.b16 %v183
      %v262 = vunpack.c.l.b16 %v184
      %v263 = vunpack.c.l.b16 %v185
      %v264 = vunpack.c.l.b16 %v186
      %v265 = vunpack.c.l.b16 %v187
      %v266 = vunpack.c.l.b16 %v188
      %v267 = vunpack.c.l.b16 %v189
      %v268 = vunpack.c.l.b16 %v190
      %v269 = vunpack.c.l.b16 %v191
      %v270 = vunpack.c.l.b16 %v192
      %v271 = vunpack.c.l.b16 %v193
      %v272 = vunpack.c.l.b16 %v194
      %v273 = vunpack.c.l.b16 %v195
      %v274 = vunpack.c.l.b16 %v196
      %v275 = vunpack.c.l.b16 %v197
      %v276 = vunpack.c.l.b16 %v198
      %v277 = vpack.c.b16 %v259, %v258
      %v278 = vpack.c.b16 %v261, %v260
      %v279 = vpack.c.b16 %v263, %v262
      %v280 = vpack.c.b16 %v265, %v264
      %v281 = vpack.c.b16 %v267, %v266
      %v282 = vpack.c.b16 %v269, %v268
      %v283 = vpack.c.b16 %v271, %v270
      %v284 = vpack.c.b16 %v273, %v272
      %v285 = vpack.c.b16 %v275, %v274
      %v286 = vpack.c.b16 %v276, %v276
      %vm296 = vcmask 195584
      %v298 = vsel %vm296, %v228, 0
      %v301 = vsel %vm296, %v230, 0
      %v304 = vsel %vm296, %v232, 0
      %v307 = vsel %vm296, %v234, 0
      %vm309 = vcmask 1043456
      %v311 = vsel %vm309, %v286, 0
      %313 = vmatpush.bf16.msra.mxu0 %v284
      %314 = vmatpush.bf16.msra.mxu0 %v283
      %315 = vmatpush.bf16.msra.mxu0 %v282
      %316 = vmatpush.bf16.msra.mxu0 %v281
      %317 = vmatpush.bf16.msra.mxu0 %v280
      %318 = vmatpush.bf16.msra.mxu0 %v279
      %319 = vmatpush.bf16.msra.mxu0 %v278
      %320 = vmatpush.bf16.msra.mxu0 %v277
      %321 = vmatmul.bf16.gmra.mxu0 %v227
      %v322 = vpop.f32.mrf.mxu0
      %v323 = vadd.f32 %v201, %v322
      %v324 = vpop.f32.mrf.mxu0
      %v325 = vadd.f32 %v201, %v324
      %326 = vmatmul.bf16.gmra.mxu0 %v229
      %v327 = vpop.f32.mrf.mxu0
      %v328 = vadd.f32 %v201, %v327
      %v329 = vpop.f32.mrf.mxu0
      %v330 = vadd.f32 %v201, %v329
      %331 = vmatmul.bf16.gmra.mxu0 %v231
      %v332 = vpop.f32.mrf.mxu0
      %v333 = vadd.f32 %v201, %v332
      %v334 = vpop.f32.mrf.mxu0
      %v335 = vadd.f32 %v201, %v334
      %336 = vmatmul.bf16.gmra.mxu0 %v233
      %v337 = vpop.f32.mrf.mxu0
      %v338 = vadd.f32 %v201, %v337
      %v339 = vpop.f32.mrf.mxu0
      %v340 = vadd.f32 %v201, %v339
      %341 = vdwg.mxu0
      %342 = vmatpush.bf16.msra.mxu0 0
      %343 = vmatpush.bf16.msra.mxu0 0
      %344 = vmatpush.bf16.msra.mxu0 0
      %345 = vmatpush.bf16.msra.mxu0 0
      %346 = vmatpush.bf16.msra.mxu0 0
      %347 = vmatpush.bf16.msra.mxu0 0
      %348 = vmatpush.bf16.msra.mxu0 %v311
      %349 = vmatpush.bf16.msra.mxu0 %v285
      %350 = vmatmul.bf16.gmra.mxu0 %v298
      %v351 = vpop.f32.mrf.mxu0
      %v352 = vadd.f32 %v323, %v351
      %v353 = vpop.f32.mrf.mxu0
      %v354 = vadd.f32 %v325, %v353
      %355 = vmatmul.bf16.gmra.mxu0 %v301
      %v356 = vpop.f32.mrf.mxu0
      %v357 = vadd.f32 %v328, %v356
      %v358 = vpop.f32.mrf.mxu0
      %v359 = vadd.f32 %v330, %v358
      %360 = vmatmul.bf16.gmra.mxu0 %v304
      %v361 = vpop.f32.mrf.mxu0
      %v362 = vadd.f32 %v333, %v361
      %v363 = vpop.f32.mrf.mxu0
      %v364 = vadd.f32 %v335, %v363
      %365 = vmatmul.bf16.gmra.mxu0 %v307
      %v366 = vpop.f32.mrf.mxu0
      %v367 = vadd.f32 %v338, %v366
      %v368 = vpop.f32.mrf.mxu0
      %v369 = vadd.f32 %v340, %v368
      %370 = vdwg.mxu0
      %v371 = vmax.f32 %v352, 0.0
      %v372 = vmax.f32 %v354, 0.0
      %v373 = vmax.f32 %v357, 0.0
      %v374 = vmax.f32 %v359, 0.0
      %v375 = vmax.f32 %v362, 0.0
      %v376 = vmax.f32 %v364, 0.0
      %v377 = vmax.f32 %v367, 0.0
      %v378 = vmax.f32 %v369, 0.0
      %vm379 = vcmask 523264
      %380 = vst.msk [vmem:[#allocation2] sm:$0xff] %vm379, 0.0
      %vm381 = vcmask 517120
      %382 = vst.msk [vmem:[#allocation2 + $0x8] sm:$0x3] %vm381, 0.0
      %383 = vst.msk [vmem:[#allocation2 + $0x10] sm:$0xff] %vm379, 0.0
      %384 = vst.msk [vmem:[#allocation2 + $0x18] sm:$0x3] %vm381, 0.0
      %385 = vst.msk [vmem:[#allocation2 + $0x20] sm:$0xff] %vm379, 0.0
      %386 = vst.msk [vmem:[#allocation2 + $0x28] sm:$0x3] %vm381, 0.0
      %387 = vst.msk [vmem:[#allocation2 + $0x30] sm:$0xff] %vm379, 0.0
      %388 = vst.msk [vmem:[#allocation2 + $0x38] sm:$0x3] %vm381, 0.0
      %389 = vst.msk [vmem:[#allocation2 + $0x40] sm:$0xff] %vm379, 0.0
      %390 = vst.msk [vmem:[#allocation2 + $0x48] sm:$0x3] %vm381, 0.0
      %391 = vst.msk [vmem:[#allocation2 + $0x50] sm:$0xff] %vm379, 0.0
      %392 = vst.msk [vmem:[#allocation2 + $0x58] sm:$0x3] %vm381, 0.0
      %393 = vst.msk [vmem:[#allocation2 + $0x60] sm:$0xff] %vm379, 0.0
      %394 = vst.msk [vmem:[#allocation2 + $0x68] sm:$0x3] %vm381, 0.0
      %395 = vst.msk [vmem:[#allocation2 + $0x70] sm:$0xff] %vm379, 0.0
      %396 = vst.msk [vmem:[#allocation2 + $0x78] sm:$0x3] %vm381, 0.0
      %397 = vst.msk [vmem:[#allocation2 + $0x80] sm:$0xff] %vm379, 0.0
      %398 = vst.msk [vmem:[#allocation2 + $0x88] sm:$0x3] %vm381, 0.0
      %399 = vst.msk [vmem:[#allocation2 + $0x90] sm:$0xff] %vm379, 0.0
      %400 = vst.msk [vmem:[#allocation2 + $0x98] sm:$0x3] %vm381, 0.0
      %s401 = scalar_lea.vmem [#allocation2], 16
      %402 = vst.msk [vmem:[%s401 + $0x1] sm:$0xff] %vm379, %v371
      %403 = vst.msk [vmem:[%s401 + $0x11] sm:$0xff] %vm379, %v372
      %404 = vst.msk [vmem:[%s401 + $0x21] sm:$0xff] %vm379, %v373
      %405 = vst.msk [vmem:[%s401 + $0x31] sm:$0xff] %vm379, %v374
      %406 = vst.msk [vmem:[%s401 + $0x41] sm:$0xff] %vm379, %v375
      %407 = vst.msk [vmem:[%s401 + $0x51] sm:$0xff] %vm379, %v376
      %408 = vst.msk [vmem:[%s401 + $0x61] sm:$0xff] %vm379, %v377
      %409 = vst.msk [vmem:[%s401 + $0x71] sm:$0xff] %vm379, %v378
      %vm410 = vcmask 518144
      %411 = vst.msk [vmem:[%s170] sm:$0x7] %vm410, 0
      %412 = vst.msk [vmem:[%s170 + $0x4] sm:$0x7] %vm410, 0
      %413 = vst.msk [vmem:[%s170 + $0x8] sm:$0x7] %vm410, 0
      %414 = vst.msk [vmem:[%s170 + $0xc] sm:$0x7] %vm410, 0
      %415 = vst.msk [vmem:[%s170 + $0x10] sm:$0x7] %vm410, 0
      %416 = vst.msk [vmem:[%s170 + $0x14] sm:$0x7] %vm410, 0
      %v417 = vld [vmem:[#allocation2] sm:$0xff]
      %v418 = vld [vmem:[#allocation2 + $0x8] sm:$0x3]
      %v419 = vld [vmem:[%s401] sm:$0xff]
      %v420 = vld [vmem:[%s401 + $0x8] sm:$0x3]
      %v421 = vmax.f32 %v417, %v419
      %v422 = vmax.f32 %v418, %v420
      %s423 = scalar_lea.vmem [#allocation2], 32
      %v424 = vld [vmem:[%s423] sm:$0xff]
      %v425 = vld [vmem:[%s423 + $0x8] sm:$0x3]
      %v426 = vmax.f32 %v421, %v424
      %v427 = vmax.f32 %v422, %v425
      %428 = vst.msk [vmem:[#allocation3] sm:$0xff] %vm379, %v426
      %429 = vst.msk [vmem:[#allocation3 + $0x8] sm:$0x3] %vm381, %v427
      %v430 = vld [vmem:[#allocation3] ss:$2 sm:$0xf]
      %s431 = scalar_lea.vmem [#allocation3], 1
      %v432 = vld [vmem:[%s431] ss:$2 sm:$0xf]
      %v433 = vmax.f32 %v430, %v432
      %s434 = scalar_lea.vmem [#allocation3], 2
      %v435 = vld [vmem:[%s434] ss:$2 sm:$0xf]
      %v436 = vmax.f32 %v433, %v435
      %v437 = vpack.c.bf16 %v436, %v436
      %v439 = vshrl.u32 %v437, 16
      %v441 = vrot.slane %v439, 7
      %v442 = vshll.u32 %v437, 16
      %v444 = vor.u32 %v441, %v442
      %s446 = scalar_lea.vmem %s170, 4
      %vm447 = vcmask 518144
      %vm448 = vsmask.f32 2306
      %vm449 = vmand %vm447, %vm448
      %v450 = vld [vmem:[%s446] sm:$0x7]
      %v451 = vsel %vm449, %v444, %v450
      %452 = vst [vmem:[%s446] sm:$0x7] %v451
      %v453 = vld [vmem:[%s423] sm:$0xff]
      %v454 = vld [vmem:[%s423 + $0x8] sm:$0x3]
      %s455 = scalar_lea.vmem [#allocation2], 48
      %v456 = vld [vmem:[%s455] sm:$0xff]
      %v457 = vld [vmem:[%s455 + $0x8] sm:$0x3]
      %v458 = vmax.f32 %v453, %v456
      %v459 = vmax.f32 %v454, %v457
      %s460 = scalar_lea.vmem [#allocation2], 64
      %v461 = vld [vmem:[%s460] sm:$0xff]
      %v462 = vld [vmem:[%s460 + $0x8] sm:$0x3]
      %v463 = vmax.f32 %v458, %v461
      %v464 = vmax.f32 %v459, %v462
      %465 = vst.msk [vmem:[#allocation3] sm:$0xff] %vm379, %v463
      %466 = vst.msk [vmem:[#allocation3 + $0x8] sm:$0x3] %vm381, %v464
      %v467 = vld [vmem:[#allocation3] ss:$2 sm:$0xf]
      %v468 = vld [vmem:[%s431] ss:$2 sm:$0xf]
      %v469 = vmax.f32 %v467, %v468
      %v470 = vld [vmem:[%s434] ss:$2 sm:$0xf]
      %v471 = vmax.f32 %v469, %v470
      %v472 = vpack.c.bf16 %v471, %v471
      %v474 = vshrl.u32 %v472, 16
      %v476 = vrot.slane %v474, 7
      %v477 = vshll.u32 %v472, 16
      %v479 = vor.u32 %v476, %v477
      %s481 = scalar_lea.vmem %s170, 8
      %v482 = vld [vmem:[%s481] sm:$0x7]
      %v483 = vsel %vm449, %v479, %v482
      %484 = vst [vmem:[%s481] sm:$0x7] %v483
      %v485 = vld [vmem:[%s460] sm:$0xff]
      %v486 = vld [vmem:[%s460 + $0x8] sm:$0x3]
      %s487 = scalar_lea.vmem [#allocation2], 80
      %v488 = vld [vmem:[%s487] sm:$0xff]
      %v489 = vld [vmem:[%s487 + $0x8] sm:$0x3]
      %v490 = vmax.f32 %v485, %v488
      %v491 = vmax.f32 %v486, %v489
      %s492 = scalar_lea.vmem [#allocation2], 96
      %v493 = vld [vmem:[%s492] sm:$0xff]
      %v494 = vld [vmem:[%s492 + $0x8] sm:$0x3]
      %v495 = vmax.f32 %v490, %v493
      %v496 = vmax.f32 %v491, %v494
      %497 = vst.msk [vmem:[#allocation3] sm:$0xff] %vm379, %v495
      %498 = vst.msk [vmem:[#allocation3 + $0x8] sm:$0x3] %vm381, %v496
      %v499 = vld [vmem:[#allocation3] ss:$2 sm:$0xf]
      %v500 = vld [vmem:[%s431] ss:$2 sm:$0xf]
      %v501 = vmax.f32 %v499, %v500
      %v502 = vld [vmem:[%s434] ss:$2 sm:$0xf]
      %v503 = vmax.f32 %v501, %v502
      %v504 = vpack.c.bf16 %v503, %v503
      %v506 = vshrl.u32 %v504, 16
      %v508 = vrot.slane %v506, 7
      %v509 = vshll.u32 %v504, 16
      %v511 = vor.u32 %v508, %v509
      %s513 = scalar_lea.vmem %s170, 12
      %v514 = vld [vmem:[%s513] sm:$0x7]
      %v515 = vsel %vm449, %v511, %v514
      %516 = vst [vmem:[%s513] sm:$0x7] %v515
      %v517 = vld [vmem:[%s492] sm:$0xff]
      %v518 = vld [vmem:[%s492 + $0x8] sm:$0x3]
      %s519 = scalar_lea.vmem [#allocation2], 112
      %v520 = vld [vmem:[%s519] sm:$0xff]
      %v521 = vld [vmem:[%s519 + $0x8] sm:$0x3]
      %v522 = vmax.f32 %v517, %v520
      %v523 = vmax.f32 %v518, %v521
      %s524 = scalar_lea.vmem [#allocation2], 128
      %v525 = vld [vmem:[%s524] sm:$0xff]
      %v526 = vld [vmem:[%s524 + $0x8] sm:$0x3]
      %v527 = vmax.f32 %v522, %v525
      %v528 = vmax.f32 %v523, %v526
      %529 = vst.msk [vmem:[#allocation3] sm:$0xff] %vm379, %v527
      %530 = vst.msk [vmem:[#allocation3 + $0x8] sm:$0x3] %vm381, %v528
      %v531 = vld [vmem:[#allocation3] ss:$2 sm:$0xf]
      %v532 = vld [vmem:[%s431] ss:$2 sm:$0xf]
      %v533 = vmax.f32 %v531, %v532
      %v534 = vld [vmem:[%s434] ss:$2 sm:$0xf]
      %v535 = vmax.f32 %v533, %v534
      %v536 = vpack.c.bf16 %v535, %v535
      %v538 = vshrl.u32 %v536, 16
      %v540 = vrot.slane %v538, 7
      %v541 = vshll.u32 %v536, 16
      %v543 = vor.u32 %v540, %v541
      %s545 = scalar_lea.vmem %s170, 16
      %v546 = vld [vmem:[%s545] sm:$0x7]
      %v547 = vsel %vm449, %v543, %v546
      %548 = vst [vmem:[%s545] sm:$0x7] %v547
      %p549 = scmp.lt.s32.totalorder %s14, 1
      %s550 = scalar_select %p549, %s14, 1
      %s551 = smul.addr %s550, 6
      %s552 = smul.addr %s551, 4
      %s553 = scalar_lea.vmem %s3, %s552
      // Predicated region
      $region33: #{sresnet_forward.3} parent=31 // pred_check
        %p554 = pneg %p100
      $region34: #{sresnet_forward.3} parent=31 // pred_check_branch
        %556 = sbr.rel (%p554) target = $region36
      $region35: #{sresnet_forward.3} parent=31 // pred_region
        _
      $region36: #{sresnet_forward.3} parent=31 // pred_fallthru
        _
    $region32: #{sresnet_forward.3} parent=5 // pred_fallthru
      _
    %p557 = scmp.le.s32.totalorder 2, %s9
    // Predicated region
    $region37: #{sresnet_forward.3} parent=5 // pred_check
      %p558 = pneg %p557
    $region38: #{sresnet_forward.3} parent=5 // pred_check_branch
      %560 = sbr.rel (%p558) target = $region40
    $region39: #{sresnet_forward.3} parent=5 // pred_region
      %s561 = ssub.s32 %s9, 2
      // Predicated region
      $region41: #{sresnet_forward.3} parent=39 // pred_check
        %p562 = pneg %p106
      $region42: #{sresnet_forward.3} parent=39 // pred_check_branch
        %564 = sbr.rel (%p562) target = $region44
      $region43: #{sresnet_forward.3} parent=39 // pred_region
        %p565 = scmp.lt.s32.totalorder %s15, 1
        %s566 = scalar_select %p565, %s15, 1
        %s567 = smul.addr %s566, 6
        %s568 = smul.addr %s567, 4
        %s569 = scalar_lea.vmem %s3, %s568
      $region44: #{sresnet_forward.3} parent=39 // pred_fallthru
        _
    $region40: #{sresnet_forward.3} parent=5 // pred_fallthru
      _
  $region6: #{sresnet_forward.3} parent=0 // loop_footer
    %s13 = sadd.s32 1, %s9
  $region7: #{sresnet_forward.3} parent=0 // loop_footer_branch
    %8 = sbr.rel target = $region3
  $region8: #{sresnet_forward.3} parent=0 // loop_exit
    _

// kernel: sresnet_forward.5
$region0: #{sresnet_forward.5}
  #allocation0 [shape = 'u32[]', space=smem, size = 0x4, offset = 0x4, fixed_abs, tag = 'smem constant byte address 0x4 - core index']
  #allocation1 [shape = 'u32[72,128]{1,0:T(1,128)}', space=vmem, size = 0x9000, scoped, tag = 'internal scratch']
  %s0 = inlined_call_operand.vmem [shape: bf16[2,6,6,64], index: 0, kind: input, shape index: {}]
  %s1 = inlined_call_operand.vmem [shape: bf16[64,32], index: 1, kind: input, shape index: {}]
  %s2 = inlined_call_operand.vmem [shape: f32[1,32], index: 2, kind: input, shape index: {}]
  %s3 = inlined_call_operand.vmem [shape: bf16[32,10], index: 3, kind: input, shape index: {}]
  %s4 = inlined_call_operand.vmem [shape: f32[1,10], index: 4, kind: input, shape index: {}]
  %s5 = inlined_call_operand.hbm [shape: f32[2,10], index: 5, kind: output, shape index: {}]
  %s6 = sld [smem:[#allocation0]]
  $region30: #{sresnet_forward.5} parent=0
    _
  %s8 = ssub.s32 1, %s6
  %s9 = scalar_select 0, %s8, %s6
  $region1: #{sresnet_forward.5} parent=0
    #allocation2 [shape = 'u8[1024]{0}', space=vmem, size = 0x400, scoped, tag = 'output window, operand 0, single buffered']
    #allocation3 [shape = 's32[1]{0}', space=sflag, size = 0x4, scoped, tag = 'scoped memory for sresnet_forward.5']
    %10 = vsyncpa [#allocation3], 0
    // Predicated region
    $region2: #{sresnet_forward.5} parent=1 // pred_check
      _
    $region3: #{sresnet_forward.5} parent=1 // pred_check_branch
      %12 = sbr.rel (0) target = $region5
    $region4: #{sresnet_forward.5} parent=1 // pred_region
      _
    $region5: #{sresnet_forward.5} parent=1 // pred_fallthru
      _
    // Predicated region
    $region6: #{sresnet_forward.5} parent=1 // pred_check
      _
    $region7: #{sresnet_forward.5} parent=1 // pred_check_branch
      %14 = sbr.rel (0) target = $region9
    $region8: #{sresnet_forward.5} parent=1 // pred_region
      _
    $region9: #{sresnet_forward.5} parent=1 // pred_fallthru
      _
    // Predicated region
    $region10: #{sresnet_forward.5} parent=1 // pred_check
      _
    $region11: #{sresnet_forward.5} parent=1 // pred_check_branch
      %16 = sbr.rel (0) target = $region13
    $region12: #{sresnet_forward.5} parent=1 // pred_region
      _
    $region13: #{sresnet_forward.5} parent=1 // pred_fallthru
      _
    // Predicated region
    $region14: #{sresnet_forward.5} parent=1 // pred_check
      _
    $region15: #{sresnet_forward.5} parent=1 // pred_check_branch
      %18 = sbr.rel (0) target = $region17
    $region16: #{sresnet_forward.5} parent=1 // pred_region
      _
    $region17: #{sresnet_forward.5} parent=1 // pred_fallthru
      _
    // Predicated region
    $region18: #{sresnet_forward.5} parent=1 // pred_check
      _
    $region19: #{sresnet_forward.5} parent=1 // pred_check_branch
      %20 = sbr.rel (0) target = $region21
    $region20: #{sresnet_forward.5} parent=1 // pred_region
      _
    $region21: #{sresnet_forward.5} parent=1 // pred_fallthru
      _
    %v22 = vld [vmem:[%s0] sm:$0x7]
    %v23 = vld [vmem:[%s0 + $0x4] sm:$0x7]
    %v24 = vld [vmem:[%s0 + $0x8] sm:$0x7]
    %v25 = vld [vmem:[%s0 + $0xc] sm:$0x7]
    %v26 = vld [vmem:[%s0 + $0x10] sm:$0x7]
    %v27 = vld [vmem:[%s0 + $0x14] sm:$0x7]
    %v28 = vld [vmem:[%s0 + $0x18] sm:$0x7]
    %v29 = vld [vmem:[%s0 + $0x1c] sm:$0x7]
    %v30 = vld [vmem:[%s0 + $0x20] sm:$0x7]
    %v31 = vld [vmem:[%s0 + $0x24] sm:$0x7]
    %v32 = vld [vmem:[%s0 + $0x28] sm:$0x7]
    %v33 = vld [vmem:[%s0 + $0x2c] sm:$0x7]
    %v34 = vunpack.c.l.bf16 %v22
    %v35 = vunpack.c.l.bf16 %v23
    %v36 = vunpack.c.l.bf16 %v24
    %v37 = vunpack.c.l.bf16 %v25
    %v38 = vunpack.c.l.bf16 %v26
    %v39 = vunpack.c.l.bf16 %v27
    %v40 = vunpack.c.l.bf16 %v28
    %v41 = vunpack.c.l.bf16 %v29
    %v42 = vunpack.c.l.bf16 %v30
    %v43 = vunpack.c.l.bf16 %v31
    %v44 = vunpack.c.l.bf16 %v32
    %v45 = vunpack.c.l.bf16 %v33
    %vm46 = vcmask 521216
    %v47 = vsel %vm46, %v34, 0.0
    %v48 = vsel %vm46, %v35, 0.0
    %v49 = vadd.f32 %v47, %v48
    %v50 = vsel %vm46, %v36, 0.0
    %v51 = vadd.f32 %v49, %v50
    %v52 = vsel %vm46, %v37, 0.0
    %v53 = vadd.f32 %v51, %v52
    %v54 = vsel %vm46, %v38, 0.0
    %v55 = vadd.f32 %v53, %v54
    %v56 = vsel %vm46, %v39, 0.0
    %v57 = vadd.f32 %v55, %v56
    %v58 = vsel %vm46, %v40, 0.0
    %v59 = vsel %vm46, %v41, 0.0
    %v60 = vadd.f32 %v58, %v59
    %v61 = vsel %vm46, %v42, 0.0
    %v62 = vadd.f32 %v60, %v61
    %v63 = vsel %vm46, %v43, 0.0
    %v64 = vadd.f32 %v62, %v63
    %v65 = vsel %vm46, %v44, 0.0
    %v66 = vadd.f32 %v64, %v65
    %v67 = vsel %vm46, %v45, 0.0
    %v68 = vadd.f32 %v66, %v67
    %v69 = vsel %vm46, %v57, 0.0
    %v70 = vrot.slane %v69, 4
    %v71 = vadd.f32 %v69, %v70
    %v72 = vrot.slane %v71, 2
    %v73 = vadd.f32 %v71, %v72
    %v74 = vrot.slane %v73, 1
    %v75 = vadd.f32 %v73, %v74
    %v76 = vsel %vm46, %v68, 0.0
    %v77 = vrot.slane %v76, 4
    %v78 = vadd.f32 %v76, %v77
    %v79 = vrot.slane %v78, 2
    %v80 = vadd.f32 %v78, %v79
    %v81 = vrot.slane %v80, 1
    %v82 = vadd.f32 %v80, %v81
    %v83 = vld [vmem:[%s1] sm:$0xf]
    %v84 = vld [vmem:[%s1 + $0x4] sm:$0xf]
    %v85 = vld [vmem:[%s1 + $0x8] sm:$0xf]
    %v86 = vld [vmem:[%s1 + $0xc] sm:$0xf]
    %v87 = vld [vmem:[%s1 + $0x10] sm:$0xf]
    %v88 = vld [vmem:[%s1 + $0x14] sm:$0xf]
    %v89 = vld [vmem:[%s1 + $0x18] sm:$0xf]
    %v90 = vld [vmem:[%s1 + $0x1c] sm:$0xf]
    %v91 = vld [vmem:[%s2] sm:$0x1]
    %v92 = vpack.c.bf16 %v75, %v75
    %v93 = vpack.c.bf16 %v82, %v82
    %v95 = vperm.slane %v91, 0
    %v99 = vunpack.c.l.b16 %v92
    %v100 = vunpack.c.l.b16 %v93
    %vm101 = vcmask 1041409
    %v102 = vsel %vm101, %v100, %v99
    %v103 = vpack.c.b16 %v102, %v102
    %v112 = vunpack.c.l.b16 %v83
    %v113 = vunpack.c.l.b16 %v84
    %v114 = vunpack.c.l.b16 %v85
    %v115 = vunpack.c.l.b16 %v86
    %v116 = vunpack.c.l.b16 %v87
    %v117 = vunpack.c.l.b16 %v88
    %v118 = vunpack.c.l.b16 %v89
    %v119 = vunpack.c.l.b16 %v90
    %v120 = vpack.c.b16 %v113, %v112
    %v121 = vpack.c.b16 %v115, %v114
    %v122 = vpack.c.b16 %v117, %v116
    %v123 = vpack.c.b16 %v119, %v118
    %vm128 = vcmask 523264
    %v130 = vsel %vm128, %v103, 0
    %132 = vmatpush.bf16.msra.mxu0 0
    %133 = vmatpush.bf16.msra.mxu0 0
    %134 = vmatpush.bf16.msra.mxu0 0
    %135 = vmatpush.bf16.msra.mxu0 0
    %136 = vmatpush.bf16.msra.mxu0 %v123
    %137 = vmatpush.bf16.msra.mxu0 %v122
    %138 = vmatpush.bf16.msra.mxu0 %v121
    %139 = vmatpush.bf16.msra.mxu0 %v120
    %140 = vmatmul.bf16.gmra.mxu0 %v130
    %v141 = vpop.f32.mrf.mxu0
    %v142 = vadd.f32 %v95, %v141
    %v143 = vpop.f32.mrf.mxu0
    %144 = vdwg.mxu0
    %v145 = vmax.f32 %v142, 0.0
    %v146 = vld [vmem:[%s3] sm:$0xf]
    %v147 = vld [vmem:[%s3 + $0x4] sm:$0xf]
    %v148 = vld [vmem:[%s3 + $0x8] sm:$0xf]
    %v149 = vld [vmem:[%s3 + $0xc] sm:$0xf]
    %v150 = vld [vmem:[%s4] sm:$0x1]
    %v151 = vpack.c.bf16 %v145, %v145
    %v153 = vperm.slane %v150, 0
    %v159 = vunpack.c.l.b16 %v146
    %v160 = vunpack.c.l.b16 %v147
    %v161 = vunpack.c.l.b16 %v148
    %v162 = vunpack.c.l.b16 %v149
    %v163 = vpack.c.b16 %v160, %v159
    %v164 = vpack.c.b16 %v162, %v161
    %vm167 = vcmask 261120
    %v169 = vsel %vm167, %v151, 0
    %171 = vmatpush.bf16.msra.mxu0 0
    %172 = vmatpush.bf16.msra.mxu0 0
    %173 = vmatpush.bf16.msra.mxu0 0
    %174 = vmatpush.bf16.msra.mxu0 0
    %175 = vmatpush.bf16.msra.mxu0 0
    %176 = vmatpush.bf16.msra.mxu0 0
    %177 = vmatpush.bf16.msra.mxu0 %v164
    %178 = vmatpush.bf16.msra.mxu0 %v163
    %179 = vmatmul.bf16.gmra.mxu0 %v169
    %v180 = vpop.f32.mrf.mxu0
    %v181 = vadd.f32 %v153, %v180
    %v182 = vpop.f32.mrf.mxu0
    %183 = vdwg.mxu0
    %vm184 = vcmask 74752
    %185 = vst.msk [vmem:[#allocation2] sm:$0x3] %vm184, %v181
    // Predicated region
    $region22: #{sresnet_forward.5} parent=1 // pred_check
      _
    $region23: #{sresnet_forward.5} parent=1 // pred_check_branch
      %187 = sbr.rel (0) target = $region25
    $region24: #{sresnet_forward.5} parent=1 // pred_region
      %189 = vsyncadd [#allocation3], 0
      %s191 = sshll.u32 [#allocation2], 4
      %s192 = int_to_ptr.vmem [resolvable:$true] %s191
      %s193 = sshll.u32 %s5, 4
      %s194 = int_to_ptr.hbm [resolvable:$true] %s193
      %196 = dma.vmem_to_hbm [thread:$0]  %s192, 32, %s194, [#allocation3]
    $region25: #{sresnet_forward.5} parent=1 // pred_fallthru
      _
    // Predicated region
    $region26: #{sresnet_forward.5} parent=1 // pred_check
      _
    $region27: #{sresnet_forward.5} parent=1 // pred_check_branch
      %198 = sbr.rel (0) target = $region29
    $region28: #{sresnet_forward.5} parent=1 // pred_region
      %200 = dma.done [#allocation3], 32
    $region29: #{sresnet_forward.5} parent=1 // pred_fallthru
      _
    %201 = vsyncpa [#allocation3], 1

// kernel: sresnet_forward.4
$region0: #{sresnet_forward.4}
  #allocation0 [shape = 'u32[]', space=smem, size = 0x4, offset = 0x4, fixed_abs, tag = 'smem constant byte address 0x4 - core index']
  #allocation1 [shape = 'u32[72,128]{1,0:T(1,128)}', space=vmem, size = 0x9000, scoped, tag = 'internal scratch']
  #allocation2 [shape = 'bf16[6,6,64]{2,1,0:T(8,128)(2,1)}', space=vmem, size = 0x3000, scoped, tag = 'scratch operand']
  #allocation3 [shape = 'bf16[6,6,64]{2,1,0:T(8,128)(2,1)}', space=vmem, size = 0x3000, scoped, tag = 'scratch operand']
  %s0 = inlined_call_operand.vmem [shape: bf16[2,6,6,64], index: 0, kind: input, shape index: {}]
  %s1 = inlined_call_operand.vmem [shape: bf16[9,64,64], index: 1, kind: input, shape index: {}]
  %s2 = inlined_call_operand.vmem [shape: f32[1,64], index: 2, kind: input, shape index: {}]
  %s3 = inlined_call_operand.vmem [shape: bf16[9,64,64], index: 3, kind: input, shape index: {}]
  %s4 = inlined_call_operand.vmem [shape: f32[1,64], index: 4, kind: input, shape index: {}]
  %s5 = inlined_call_operand.vmem [shape: bf16[9,64,64], index: 5, kind: input, shape index: {}]
  %s6 = inlined_call_operand.vmem [shape: f32[1,64], index: 6, kind: input, shape index: {}]
  %s7 = inlined_call_operand.vmem [shape: bf16[9,64,64], index: 7, kind: input, shape index: {}]
  %s8 = inlined_call_operand.vmem [shape: f32[1,64], index: 8, kind: input, shape index: {}]
  %s9 = inlined_call_operand.vmem [shape: bf16[2,6,6,64], index: 9, kind: output, shape index: {}]
  %s10 = sld [smem:[#allocation0]]
  $region69: #{sresnet_forward.4} parent=0
    _
  %s12 = ssub.s32 1, %s10
  %s13 = scalar_select 0, %s12, %s10
  loop: start=0, step=1, limit=4
  $region2: #{sresnet_forward.4} parent=0 // loop_pre_header
    _
  $region3: #{sresnet_forward.4} parent=0 // loop_header
    %s15 = sphi 0, %s19
    %p16 = scmp.ge.s32.totalorder %s15, 4
    %s25 = sphi 0, %s27
    %s28 = sphi 0, %s25
    %s29 = sphi 0, %s28
    %s45 = sphi 0, %s29
    %s49 = sphi 0, %s49
    %s51 = sphi 0, %s49
    %s52 = sphi 0, %s51
    %s66 = sphi 0, %s52
    %s70 = sphi 0, %s70
    %s72 = sphi 0, %s70
    %s73 = sphi 0, %s72
    %s87 = sphi 0, %s73
    %s91 = sphi 0, %s91
    %s93 = sphi 0, %s91
    %s94 = sphi 0, %s93
    %s108 = sphi 0, %s94
    %s112 = sphi 0, %s112
    %s114 = sphi 0, %s112
    %s115 = sphi 0, %s114
    %s129 = sphi 0, %s115
    %s133 = sphi 0, %s133
    %s135 = sphi 0, %s133
    %s136 = sphi 0, %s135
    %s150 = sphi 0, %s136
    %s154 = sphi 0, %s154
    %s156 = sphi 0, %s154
    %s157 = sphi 0, %s156
    %s171 = sphi 0, %s157
    %s175 = sphi 0, %s175
    %s177 = sphi 0, %s175
    %s178 = sphi 0, %s177
    %s192 = sphi 0, %s178
    %s196 = sphi 0, %s196
    %s198 = sphi 0, %s196
    %s199 = sphi 0, %s198
    %s213 = sphi 0, %s199
    %s219 = sphi 0, %s221
    %s222 = sphi 0, %s219
    %s223 = sphi 0, %s222
    %s239 = sphi 0, %s223
  $region4: #{sresnet_forward.4} parent=0 // loop_header_branch
    %18 = sbr.rel (%p16) target = $region8
  $region5: #{sresnet_forward.4} parent=0 // loop_body
    %s20 = ssub.s32 %s15, 1
    %s21 = ssub.s32 %s15, 2
    %s22 = sadd.s32 %s15, 1
    %s23 = ssub.s32 %s15, %s22
    %p24 = scmp.eq.s32.totalorder %s23, 0
    %s26 = sadd.s32 %s25, 1
    %s27 = scalar_select %p24, %s25, %s26
    %p30 = pneg %p24
    %p31 = scmp.eq.s32.totalorder %s15, 1
    %p32 = por %p30, %p31
    %p33 = scmp.ne.s32.totalorder %s25, %s28
    %p34 = scmp.eq.s32.totalorder %s15, 0
    %p35 = por %p33, %p34
    %p36 = scmp.ne.s32.totalorder %s25, %s28
    %p37 = scmp.eq.s32.totalorder %s20, 1
    %p38 = por %p36, %p37
    %p39 = scmp.ne.s32.totalorder %s28, %s29
    %p40 = scmp.eq.s32.totalorder %s20, 0
    %p41 = por %p39, %p40
    %p42 = scmp.ne.s32.totalorder %s28, %s29
    %p43 = scmp.eq.s32.totalorder %s21, 1
    %p44 = por %p42, %p43
    %p46 = scmp.ne.s32.totalorder %s29, %s45
    %p47 = scmp.eq.s32.totalorder %s21, 0
    %p48 = por %p46, %p47
    %s50 = sadd.s32 %s49, 1
    %p53 = scmp.eq.s32.totalorder %s15, 1
    %p54 = scmp.ne.s32.totalorder %s49, %s51
    %p55 = scmp.eq.s32.totalorder %s15, 0
    %p56 = por %p54, %p55
    %p57 = scmp.ne.s32.totalorder %s49, %s51
    %p58 = scmp.eq.s32.totalorder %s20, 1
    %p59 = por %p57, %p58
    %p60 = scmp.ne.s32.totalorder %s51, %s52
    %p61 = scmp.eq.s32.totalorder %s20, 0
    %p62 = por %p60, %p61
    %p63 = scmp.ne.s32.totalorder %s51, %s52
    %p64 = scmp.eq.s32.totalorder %s21, 1
    %p65 = por %p63, %p64
    %p67 = scmp.ne.s32.totalorder %s52, %s66
    %p68 = scmp.eq.s32.totalorder %s21, 0
    %p69 = por %p67, %p68
    %s71 = sadd.s32 %s70, 1
    %p74 = scmp.eq.s32.totalorder %s15, 1
    %p75 = scmp.ne.s32.totalorder %s70, %s72
    %p76 = scmp.eq.s32.totalorder %s15, 0
    %p77 = por %p75, %p76
    %p78 = scmp.ne.s32.totalorder %s70, %s72
    %p79 = scmp.eq.s32.totalorder %s20, 1
    %p80 = por %p78, %p79
    %p81 = scmp.ne.s32.totalorder %s72, %s73
    %p82 = scmp.eq.s32.totalorder %s20, 0
    %p83 = por %p81, %p82
    %p84 = scmp.ne.s32.totalorder %s72, %s73
    %p85 = scmp.eq.s32.totalorder %s21, 1
    %p86 = por %p84, %p85
    %p88 = scmp.ne.s32.totalorder %s73, %s87
    %p89 = scmp.eq.s32.totalorder %s21, 0
    %p90 = por %p88, %p89
    %s92 = sadd.s32 %s91, 1
    %p95 = scmp.eq.s32.totalorder %s15, 1
    %p96 = scmp.ne.s32.totalorder %s91, %s93
    %p97 = scmp.eq.s32.totalorder %s15, 0
    %p98 = por %p96, %p97
    %p99 = scmp.ne.s32.totalorder %s91, %s93
    %p100 = scmp.eq.s32.totalorder %s20, 1
    %p101 = por %p99, %p100
    %p102 = scmp.ne.s32.totalorder %s93, %s94
    %p103 = scmp.eq.s32.totalorder %s20, 0
    %p104 = por %p102, %p103
    %p105 = scmp.ne.s32.totalorder %s93, %s94
    %p106 = scmp.eq.s32.totalorder %s21, 1
    %p107 = por %p105, %p106
    %p109 = scmp.ne.s32.totalorder %s94, %s108
    %p110 = scmp.eq.s32.totalorder %s21, 0
    %p111 = por %p109, %p110
    %s113 = sadd.s32 %s112, 1
    %p116 = scmp.eq.s32.totalorder %s15, 1
    %p117 = scmp.ne.s32.totalorder %s112, %s114
    %p118 = scmp.eq.s32.totalorder %s15, 0
    %p119 = por %p117, %p118
    %p120 = scmp.ne.s32.totalorder %s112, %s114
    %p121 = scmp.eq.s32.totalorder %s20, 1
    %p122 = por %p120, %p121
    %p123 = scmp.ne.s32.totalorder %s114, %s115
    %p124 = scmp.eq.s32.totalorder %s20, 0
    %p125 = por %p123, %p124
    %p126 = scmp.ne.s32.totalorder %s114, %s115
    %p127 = scmp.eq.s32.totalorder %s21, 1
    %p128 = por %p126, %p127
    %p130 = scmp.ne.s32.totalorder %s115, %s129
    %p131 = scmp.eq.s32.totalorder %s21, 0
    %p132 = por %p130, %p131
    %s134 = sadd.s32 %s133, 1
    %p137 = scmp.eq.s32.totalorder %s15, 1
    %p138 = scmp.ne.s32.totalorder %s133, %s135
    %p139 = scmp.eq.s32.totalorder %s15, 0
    %p140 = por %p138, %p139
    %p141 = scmp.ne.s32.totalorder %s133, %s135
    %p142 = scmp.eq.s32.totalorder %s20, 1
    %p143 = por %p141, %p142
    %p144 = scmp.ne.s32.totalorder %s135, %s136
    %p145 = scmp.eq.s32.totalorder %s20, 0
    %p146 = por %p144, %p145
    %p147 = scmp.ne.s32.totalorder %s135, %s136
    %p148 = scmp.eq.s32.totalorder %s21, 1
    %p149 = por %p147, %p148
    %p151 = scmp.ne.s32.totalorder %s136, %s150
    %p152 = scmp.eq.s32.totalorder %s21, 0
    %p153 = por %p151, %p152
    %s155 = sadd.s32 %s154, 1
    %p158 = scmp.eq.s32.totalorder %s15, 1
    %p159 = scmp.ne.s32.totalorder %s154, %s156
    %p160 = scmp.eq.s32.totalorder %s15, 0
    %p161 = por %p159, %p160
    %p162 = scmp.ne.s32.totalorder %s154, %s156
    %p163 = scmp.eq.s32.totalorder %s20, 1
    %p164 = por %p162, %p163
    %p165 = scmp.ne.s32.totalorder %s156, %s157
    %p166 = scmp.eq.s32.totalorder %s20, 0
    %p167 = por %p165, %p166
    %p168 = scmp.ne.s32.totalorder %s156, %s157
    %p169 = scmp.eq.s32.totalorder %s21, 1
    %p170 = por %p168, %p169
    %p172 = scmp.ne.s32.totalorder %s157, %s171
    %p173 = scmp.eq.s32.totalorder %s21, 0
    %p174 = por %p172, %p173
    %s176 = sadd.s32 %s175, 1
    %p179 = scmp.eq.s32.totalorder %s15, 1
    %p180 = scmp.ne.s32.totalorder %s175, %s177
    %p181 = scmp.eq.s32.totalorder %s15, 0
    %p182 = por %p180, %p181
    %p183 = scmp.ne.s32.totalorder %s175, %s177
    %p184 = scmp.eq.s32.totalorder %s20, 1
    %p185 = por %p183, %p184
    %p186 = scmp.ne.s32.totalorder %s177, %s178
    %p187 = scmp.eq.s32.totalorder %s20, 0
    %p188 = por %p186, %p187
    %p189 = scmp.ne.s32.totalorder %s177, %s178
    %p190 = scmp.eq.s32.totalorder %s21, 1
    %p191 = por %p189, %p190
    %p193 = scmp.ne.s32.totalorder %s178, %s192
    %p194 = scmp.eq.s32.totalorder %s21, 0
    %p195 = por %p193, %p194
    %s197 = sadd.s32 %s196, 1
    %p200 = scmp.eq.s32.totalorder %s15, 1
    %p201 = scmp.ne.s32.totalorder %s196, %s198
    %p202 = scmp.eq.s32.totalorder %s15, 0
    %p203 = por %p201, %p202
    %p204 = scmp.ne.s32.totalorder %s196, %s198
    %p205 = scmp.eq.s32.totalorder %s20, 1
    %p206 = por %p204, %p205
    %p207 = scmp.ne.s32.totalorder %s198, %s199
    %p208 = scmp.eq.s32.totalorder %s20, 0
    %p209 = por %p207, %p208
    %p210 = scmp.ne.s32.totalorder %s198, %s199
    %p211 = scmp.eq.s32.totalorder %s21, 1
    %p212 = por %p210, %p211
    %p214 = scmp.ne.s32.totalorder %s199, %s213
    %p215 = scmp.eq.s32.totalorder %s21, 0
    %p216 = por %p214, %p215
    %s217 = ssub.s32 %s15, %s22
    %p218 = scmp.eq.s32.totalorder %s217, 0
    %s220 = sadd.s32 %s219, 1
    %s221 = scalar_select %p218, %s219, %s220
    %p224 = pneg %p218
    %p225 = scmp.eq.s32.totalorder %s15, 1
    %p226 = por %p224, %p225
    %p227 = scmp.ne.s32.totalorder %s219, %s222
    %p228 = scmp.eq.s32.totalorder %s15, 0
    %p229 = por %p227, %p228
    %p230 = scmp.ne.s32.totalorder %s219, %s222
    %p231 = scmp.eq.s32.totalorder %s20, 1
    %p232 = por %p230, %p231
    %p233 = scmp.ne.s32.totalorder %s222, %s223
    %p234 = scmp.eq.s32.totalorder %s20, 0
    %p235 = por %p233, %p234
    %p236 = scmp.ne.s32.totalorder %s222, %s223
    %p237 = scmp.eq.s32.totalorder %s21, 1
    %p238 = por %p236, %p237
    %p240 = scmp.ne.s32.totalorder %s223, %s239
    %p241 = scmp.eq.s32.totalorder %s21, 0
    %p242 = por %p240, %p241
    %p243 = scmp.le.s32.totalorder 1, %s15
    %p244 = scmp.lt.s32.totalorder %s15, 3
    %p245 = pnand %p243, %p244
    %p246 = pneg %p245
    // Predicated region
    $region9: #{sresnet_forward.4} parent=5 // pred_check
      _
    $region10: #{sresnet_forward.4} parent=5 // pred_check_branch
      %248 = sbr.rel (%p245) target = $region12
    $region11: #{sresnet_forward.4} parent=5 // pred_region
      %s249 = ssub.s32 %s15, 1
      // Predicated region
      $region13: #{sresnet_forward.4} parent=11 // pred_check
        %p250 = pneg %p62
      $region14: #{sresnet_forward.4} parent=11 // pred_check_branch
        %252 = sbr.rel (%p250) target = $region16
      $region15: #{sresnet_forward.4} parent=11 // pred_region
        _
      $region16: #{sresnet_forward.4} parent=11 // pred_fallthru
        _
      // Predicated region
      $region17: #{sresnet_forward.4} parent=11 // pred_check
        %p253 = pneg %p83
      $region18: #{sresnet_forward.4} parent=11 // pred_check_branch
        %255 = sbr.rel (%p253) target = $region20
      $region19: #{sresnet_forward.4} parent=11 // pred_region
        _
      $region20: #{sresnet_forward.4} parent=11 // pred_fallthru
        _
      // Predicated region
      $region21: #{sresnet_forward.4} parent=11 // pred_check
        %p256 = pneg %p104
      $region22: #{sresnet_forward.4} parent=11 // pred_check_branch
        %258 = sbr.rel (%p256) target = $region24
      $region23: #{sresnet_forward.4} parent=11 // pred_region
        _
      $region24: #{sresnet_forward.4} parent=11 // pred_fallthru
        _
      // Predicated region
      $region25: #{sresnet_forward.4} parent=11 // pred_check
        %p259 = pneg %p125
      $region26: #{sresnet_forward.4} parent=11 // pred_check_branch
        %261 = sbr.rel (%p259) target = $region28
      $region27: #{sresnet_forward.4} parent=11 // pred_region
        _
      $region28: #{sresnet_forward.4} parent=11 // pred_fallthru
        _
      // Predicated region
      $region29: #{sresnet_forward.4} parent=11 // pred_check
        %p262 = pneg %p146
      $region30: #{sresnet_forward.4} parent=11 // pred_check_branch
        %264 = sbr.rel (%p262) target = $region32
      $region31: #{sresnet_forward.4} parent=11 // pred_region
        _
      $region32: #{sresnet_forward.4} parent=11 // pred_fallthru
        _
      // Predicated region
      $region33: #{sresnet_forward.4} parent=11 // pred_check
        %p265 = pneg %p167
      $region34: #{sresnet_forward.4} parent=11 // pred_check_branch
        %267 = sbr.rel (%p265) target = $region36
      $region35: #{sresnet_forward.4} parent=11 // pred_region
        _
      $region36: #{sresnet_forward.4} parent=11 // pred_fallthru
        _
      // Predicated region
      $region37: #{sresnet_forward.4} parent=11 // pred_check
        %p268 = pneg %p188
      $region38: #{sresnet_forward.4} parent=11 // pred_check_branch
        %270 = sbr.rel (%p268) target = $region40
      $region39: #{sresnet_forward.4} parent=11 // pred_region
        _
      $region40: #{sresnet_forward.4} parent=11 // pred_fallthru
        _
      // Predicated region
      $region41: #{sresnet_forward.4} parent=11 // pred_check
        %p271 = pneg %p209
      $region42: #{sresnet_forward.4} parent=11 // pred_check_branch
        %273 = sbr.rel (%p271) target = $region44
      $region43: #{sresnet_forward.4} parent=11 // pred_region
        _
      $region44: #{sresnet_forward.4} parent=11 // pred_fallthru
        _
    $region12: #{sresnet_forward.4} parent=5 // pred_fallthru
      _
    %p274 = scmp.lt.s32.totalorder %s15, 2
    // Predicated region
    $region45: #{sresnet_forward.4} parent=5 // pred_check
      %p275 = pneg %p274
    $region46: #{sresnet_forward.4} parent=5 // pred_check_branch
      %277 = sbr.rel (%p275) target = $region48
    $region47: #{sresnet_forward.4} parent=5 // pred_region
      // Predicated region
      $region49: #{sresnet_forward.4} parent=47 // pred_check
        %p278 = pneg %p35
      $region50: #{sresnet_forward.4} parent=47 // pred_check_branch
        %280 = sbr.rel (%p278) target = $region52
      $region51: #{sresnet_forward.4} parent=47 // pred_region
        %p281 = scmp.lt.s32.totalorder %s15, 1
        %s282 = scalar_select %p281, %s15, 1
        %s283 = smul.addr %s282, 6
        %s284 = smul.addr %s283, 4
        %s285 = scalar_lea.vmem %s0, %s284
      $region52: #{sresnet_forward.4} parent=47 // pred_fallthru
        _
    $region48: #{sresnet_forward.4} parent=5 // pred_fallthru
      _
    %p286 = scmp.le.s32.totalorder 1, %s15
    %p287 = scmp.lt.s32.totalorder %s15, 3
    %p288 = pnand %p286, %p287
    %p289 = pneg %p288
    // Predicated region
    $region53: #{sresnet_forward.4} parent=5 // pred_check
      _
    $region54: #{sresnet_forward.4} parent=5 // pred_check_branch
      %291 = sbr.rel (%p288) target = $region56
    $region55: #{sresnet_forward.4} parent=5 // pred_region
      %s292 = ssub.s32 %s15, 1
      %p293 = scmp.lt.s32.totalorder %s20, 1
      %s294 = scalar_select %p293, %s20, 1
      %s295 = smul.addr %s294, 6
      %s296 = smul.addr %s295, 4
      %s297 = scalar_lea.vmem %s0, %s296
      %p298 = pneg %p41
      %p299 = pneg %p38
      %p300 = pneg %p62
      %p301 = pneg %p59
      %p302 = pneg %p83
      %p303 = pneg %p80
      %p304 = pneg %p104
      %p305 = pneg %p101
      %p306 = pneg %p125
      %p307 = pneg %p122
      %p308 = pneg %p146
      %p309 = pneg %p143
      %p310 = pneg %p167
      %p311 = pneg %p164
      %p312 = pneg %p188
      %p313 = pneg %p185
      %p314 = pneg %p209
      %p315 = pneg %p206
      %p316 = pneg %p235
      %p317 = pneg %p232
      %p318 = scmp.lt.s32.totalorder %s20, 1
      %s319 = scalar_select %p318, %s20, 1
      %s320 = smul.addr %s319, 6
      %s321 = smul.addr %s320, 4
      %s322 = scalar_lea.vmem %s9, %s321
      %p323 = scmp.lt.s32.totalorder %s20, 1
      %s324 = scalar_select %p323, %s20, 1
      %s325 = smul.addr %s324, 6
      %s326 = smul.addr %s325, 4
      %s327 = scalar_lea.vmem %s0, %s326
      %p328 = scmp.lt.s32.totalorder %s20, 1
      %s329 = scalar_select %p328, %s20, 1
      %s330 = smul.addr %s329, 6
      %s331 = smul.addr %s330, 4
      %s332 = scalar_lea.vmem %s9, %s331
      %s334 = scalar_lea.vmem %s327, 4
      %v335 = vld [vmem:[%s334] sm:$0x7]
      %v336 = vld [vmem:[%s334 + $0x4] sm:$0x7]
      %v337 = vld [vmem:[%s334 + $0x8] sm:$0x7]
      %v338 = vld [vmem:[%s334 + $0xc] sm:$0x7]
      %v343 = vrot.slane %v335, 2
      %v344 = vrot.slane %v336, 2
      %v345 = vrot.slane %v337, 2
      %v346 = vrot.slane %v338, 2
      %vm347 = vcmask 1041408
      %v350 = vsel %vm347, %v335, %v343
      %vm351 = vcmask 1043458
      %v352 = vsel %vm351, %v335, %v343
      %v354 = vrot.slane %v352, 2
      %v357 = vsel %vm347, %v336, %v344
      %v358 = vsel %vm351, %v336, %v344
      %v360 = vrot.slane %v358, 2
      %v363 = vsel %vm347, %v337, %v345
      %v364 = vsel %vm351, %v337, %v345
      %v366 = vrot.slane %v364, 2
      %v369 = vsel %vm347, %v338, %v346
      %v370 = vsel %vm351, %v338, %v346
      %v372 = vrot.slane %v370, 2
      %vm373 = vsmask.f32 1280
      %vm374 = vsmask.f32 3336
      %vm375 = vmor %vm373, %vm374
      %vm376 = vsmask.f32 5392
      %vm377 = vmor %vm375, %vm376
      %vm378 = vsmask.f32 7448
      %vm379 = vmor %vm377, %vm378
      %v380 = vshrl.u32 %v350, 16
      %v382 = vrot.slane %v380, 6
      %v383 = vshll.u32 %v350, 16
      %v385 = vrot.slane %v383, 7
      %v386 = vor.u32 %v382, %v385
      %v387 = vrot.slane %v386, 2
      %v389 = vshll.u32 %v354, 16
      %v391 = vrot.slane %v389, 7
      %v392 = vsel %vm379, %v387, %v391
      %v393 = vshrl.u32 %v357, 16
      %v395 = vrot.slane %v393, 6
      %v396 = vshll.u32 %v357, 16
      %v398 = vrot.slane %v396, 7
      %v399 = vor.u32 %v395, %v398
      %v400 = vrot.slane %v399, 2
      %v402 = vshll.u32 %v360, 16
      %v404 = vrot.slane %v402, 7
      %v405 = vsel %vm379, %v400, %v404
      %v406 = vshrl.u32 %v363, 16
      %v408 = vrot.slane %v406, 6
      %v409 = vshll.u32 %v363, 16
      %v411 = vrot.slane %v409, 7
      %v412 = vor.u32 %v408, %v411
      %v413 = vrot.slane %v412, 2
      %v415 = vshll.u32 %v366, 16
      %v417 = vrot.slane %v415, 7
      %v418 = vsel %vm379, %v413, %v417
      %v419 = vshrl.u32 %v369, 16
      %v421 = vrot.slane %v419, 6
      %v422 = vshll.u32 %v369, 16
      %v424 = vrot.slane %v422, 7
      %v425 = vor.u32 %v421, %v424
      %v426 = vrot.slane %v425, 2
      %v428 = vshll.u32 %v372, 16
      %v430 = vrot.slane %v428, 7
      %v431 = vsel %vm379, %v426, %v430
      %v436 = vunpack.c.l.bf16 %v392
      %v437 = vunpack.c.l.bf16 %v405
      %v438 = vunpack.c.l.bf16 %v418
      %v439 = vunpack.c.l.bf16 %v431
      %v440 = vld [vmem:[%s327] sm:$0x3]
      %v441 = vld [vmem:[%s327 + $0x4] sm:$0x3]
      %v442 = vld [vmem:[%s327 + $0x8] sm:$0x3]
      %v443 = vld [vmem:[%s327 + $0xc] sm:$0x3]
      %v444 = vld [vmem:[%s1] sm:$0xf]
      %v445 = vld [vmem:[%s1 + $0x4] sm:$0xf]
      %v446 = vld [vmem:[%s1 + $0x8] sm:$0xf]
      %v447 = vld [vmem:[%s1 + $0xc] sm:$0xf]
      %v448 = vld [vmem:[%s1 + $0x10] sm:$0xf]
      %v449 = vld [vmem:[%s1 + $0x14] sm:$0xf]
      %v450 = vld [vmem:[%s1 + $0x18] sm:$0xf]
      %v451 = vld [vmem:[%s1 + $0x1c] sm:$0xf]
      %v452 = vld [vmem:[%s327] sm:$0x7]
      %v453 = vld [vmem:[%s327 + $0x4] sm:$0x7]
      %v454 = vld [vmem:[%s327 + $0x8] sm:$0x7]
      %v455 = vld [vmem:[%s327 + $0xc] sm:$0x7]
      %v460 = vrot.slane %v452, 2
      %v461 = vrot.slane %v453, 2
      %v462 = vrot.slane %v454, 2
      %v463 = vrot.slane %v455, 2
      %v466 = vsel %vm347, %v452, %v460
      %v467 = vsel %vm351, %v452, %v460
      %v469 = vrot.slane %v467, 2
      %v472 = vsel %vm347, %v453, %v461
      %v473 = vsel %vm351, %v453, %v461
      %v475 = vrot.slane %v473, 2
      %v478 = vsel %vm347, %v454, %v462
      %v479 = vsel %vm351, %v454, %v462
      %v481 = vrot.slane %v479, 2
      %v484 = vsel %vm347, %v455, %v463
      %v485 = vsel %vm351, %v455, %v463
      %v487 = vrot.slane %v485, 2
      %v488 = vshrl.u32 %v466, 16
      %v490 = vrot.slane %v488, 6
      %v491 = vshll.u32 %v466, 16
      %v493 = vrot.slane %v491, 7
      %v494 = vor.u32 %v490, %v493
      %v495 = vrot.slane %v494, 2
      %v497 = vshll.u32 %v469, 16
      %v499 = vrot.slane %v497, 7
      %v500 = vsel %vm379, %v495, %v499
      %v501 = vshrl.u32 %v472, 16
      %v503 = vrot.slane %v501, 6
      %v504 = vshll.u32 %v472, 16
      %v506 = vrot.slane %v504, 7
      %v507 = vor.u32 %v503, %v506
      %v508 = vrot.slane %v507, 2
      %v510 = vshll.u32 %v475, 16
      %v512 = vrot.slane %v510, 7
      %v513 = vsel %vm379, %v508, %v512
      %v514 = vshrl.u32 %v478, 16
      %v516 = vrot.slane %v514, 6
      %v517 = vshll.u32 %v478, 16
      %v519 = vrot.slane %v517, 7
      %v520 = vor.u32 %v516, %v519
      %v521 = vrot.slane %v520, 2
      %v523 = vshll.u32 %v481, 16
      %v525 = vrot.slane %v523, 7
      %v526 = vsel %vm379, %v521, %v525
      %v527 = vshrl.u32 %v484, 16
      %v529 = vrot.slane %v527, 6
      %v530 = vshll.u32 %v484, 16
      %v532 = vrot.slane %v530, 7
      %v533 = vor.u32 %v529, %v532
      %v534 = vrot.slane %v533, 2
      %v536 = vshll.u32 %v487, 16
      %v538 = vrot.slane %v536, 7
      %v539 = vsel %vm379, %v534, %v538
      %s540 = scalar_lea.vmem %s1, 32
      %v541 = vld [vmem:[%s540] sm:$0xf]
      %v542 = vld [vmem:[%s540 + $0x4] sm:$0xf]
      %v543 = vld [vmem:[%s540 + $0x8] sm:$0xf]
      %v544 = vld [vmem:[%s540 + $0xc] sm:$0xf]
      %v545 = vld [vmem:[%s540 + $0x10] sm:$0xf]
      %v546 = vld [vmem:[%s540 + $0x14] sm:$0xf]
      %v547 = vld [vmem:[%s540 + $0x18] sm:$0xf]
      %v548 = vld [vmem:[%s540 + $0x1c] sm:$0xf]
      %550 = vst [vmem:[#allocation1] ss:$4 sm:$0xff] %v500
      %s552 = scalar_lea.vmem [#allocation1], 1
      %553 = vst [vmem:[%s552] ss:$4 sm:$0xff] %v513
      %s555 = scalar_lea.vmem [#allocation1], 2
      %556 = vst [vmem:[%s555] ss:$4 sm:$0xff] %v526
      %s558 = scalar_lea.vmem [#allocation1], 3
      %559 = vst [vmem:[%s558] ss:$4 sm:$0xff] %v539
      %v560 = vld.sshfl [vmem:[#allocation1] sm:$0xff pattern:$0x73625140]
      %v569 = vunpack.c.l.b16 %v541
      %v570 = vunpack.c.l.b16 %v542
      %v571 = vunpack.c.l.b16 %v543
      %v572 = vunpack.c.l.b16 %v544
      %v573 = vunpack.c.l.b16 %v545
      %v574 = vunpack.c.l.b16 %v546
      %v575 = vunpack.c.l.b16 %v547
      %v576 = vunpack.c.l.b16 %v548
      %v577 = vpack.c.b16 %v570, %v569
      %v578 = vpack.c.b16 %v572, %v571
      %v579 = vpack.c.b16 %v574, %v573
      %v580 = vpack.c.b16 %v576, %v575
      %vm585 = vcmask 523264
      %v586 = vsel %vm585, %v560, 0
      %588 = vmatpush.bf16.msra.mxu0 0
      %589 = vmatpush.bf16.msra.mxu0 0
      %590 = vmatpush.bf16.msra.mxu0 0
      %591 = vmatpush.bf16.msra.mxu0 0
      %592 = vmatpush.bf16.msra.mxu0 %v580
      %593 = vmatpush.bf16.msra.mxu0 %v579
      %594 = vmatpush.bf16.msra.mxu0 %v578
      %595 = vmatpush.bf16.msra.mxu0 %v577
      %596 = vmatmul.bf16.gmra.mxu0 %v586
      %v597 = vpop.f32.mrf.mxu0
      %v598 = vadd.f32 0.0, %v597
      %v599 = vpop.f32.mrf.mxu0
      %v600 = vadd.f32 0.0, %v599
      %601 = vdwg.mxu0
      %603 = vst [vmem:[#allocation1] ss:$4 sm:$0xff] %v440
      %s605 = scalar_lea.vmem [#allocation1], 1
      %606 = vst [vmem:[%s605] ss:$4 sm:$0xff] %v441
      %s608 = scalar_lea.vmem [#allocation1], 2
      %609 = vst [vmem:[%s608] ss:$4 sm:$0xff] %v442
      %s611 = scalar_lea.vmem [#allocation1], 3
      %612 = vst [vmem:[%s611] ss:$4 sm:$0xff] %v443
      %v613 = vld.sshfl [vmem:[#allocation1] sm:$0xff pattern:$0x73625140]
      %v622 = vunpack.c.l.b16 %v444
      %v623 = vunpack.c.l.b16 %v445
      %v624 = vunpack.c.l.b16 %v446
      %v625 = vunpack.c.l.b16 %v447
      %v626 = vunpack.c.l.b16 %v448
      %v627 = vunpack.c.l.b16 %v449
      %v628 = vunpack.c.l.b16 %v450
      %v629 = vunpack.c.l.b16 %v451
      %v630 = vpack.c.b16 %v623, %v622
      %v631 = vpack.c.b16 %v625, %v624
      %v632 = vpack.c.b16 %v627, %v626
      %v633 = vpack.c.b16 %v629, %v628
      %v638 = vsel %vm585, %v613, 0
      %640 = vmatpush.bf16.msra.mxu0 0
      %641 = vmatpush.bf16.msra.mxu0 0
      %642 = vmatpush.bf16.msra.mxu0 0
      %643 = vmatpush.bf16.msra.mxu0 0
      %644 = vmatpush.bf16.msra.mxu0 %v633
      %645 = vmatpush.bf16.msra.mxu0 %v632
      %646 = vmatpush.bf16.msra.mxu0 %v631
      %647 = vmatpush.bf16.msra.mxu0 %v630
      %648 = vmatmul.bf16.gmra.mxu0 %v638
      %v649 = vpop.f32.mrf.mxu0
      %v650 = vadd.f32 %v598, %v649
      %v651 = vpop.f32.mrf.mxu0
      %v652 = vadd.f32 %v600, %v651
      %653 = vdwg.mxu0
      %v654 = vld [vmem:[%s327] sm:$0x6]
      %v655 = vld [vmem:[%s327 + $0x4] sm:$0x6]
      %v656 = vld [vmem:[%s327 + $0x8] sm:$0x6]
      %v657 = vld [vmem:[%s327 + $0xc] sm:$0x6]
      %v662 = vrot.slane %v654, 2
      %v663 = vrot.slane %v655, 2
      %v664 = vrot.slane %v656, 2
      %v665 = vrot.slane %v657, 2
      %v668 = vsel %vm347, %v654, %v662
      %v670 = vsel %vm351, %v654, %v662
      %v672 = vrot.slane %v670, 2
      %v675 = vsel %vm347, %v655, %v663
      %v677 = vsel %vm351, %v655, %v663
      %v679 = vrot.slane %v677, 2
      %v682 = vsel %vm347, %v656, %v664
      %v684 = vsel %vm351, %v656, %v664
      %v686 = vrot.slane %v684, 2
      %v689 = vsel %vm347, %v657, %v665
      %v691 = vsel %vm351, %v657, %v665
      %v693 = vrot.slane %v691, 2
      %vm694 = vcmask 1040384
      %vm695 = vcmask 1042434
      %vm696 = vmor %vm694, %vm695
      %vm697 = vcmask 1044484
      %vm698 = vmor %vm696, %vm697
      %vm699 = vcmask 1046534
      %vm700 = vmor %vm698, %vm699
      %v701 = vrot.slane %v668, 7
      %v702 = vrot.slane %v701, 2
      %v703 = vrot.slane %v672, 7
      %v704 = vsel %vm700, %v702, %v703
      %v705 = vrot.slane %v675, 7
      %v706 = vrot.slane %v705, 2
      %v707 = vrot.slane %v679, 7
      %v708 = vsel %vm700, %v706, %v707
      %v709 = vrot.slane %v682, 7
      %v710 = vrot.slane %v709, 2
      %v711 = vrot.slane %v686, 7
      %v712 = vsel %vm700, %v710, %v711
      %v713 = vrot.slane %v689, 7
      %v714 = vrot.slane %v713, 2
      %v715 = vrot.slane %v693, 7
      %v716 = vsel %vm700, %v714, %v715
      %s717 = scalar_lea.vmem %s1, 64
      %v718 = vld [vmem:[%s717] sm:$0xf]
      %v719 = vld [vmem:[%s717 + $0x4] sm:$0xf]
      %v720 = vld [vmem:[%s717 + $0x8] sm:$0xf]
      %v721 = vld [vmem:[%s717 + $0xc] sm:$0xf]
      %v722 = vld [vmem:[%s717 + $0x10] sm:$0xf]
      %v723 = vld [vmem:[%s717 + $0x14] sm:$0xf]
      %v724 = vld [vmem:[%s717 + $0x18] sm:$0xf]
      %v725 = vld [vmem:[%s717 + $0x1c] sm:$0xf]
      %727 = vst [vmem:[#allocation1] ss:$4 sm:$0xff] %v704
      %s729 = scalar_lea.vmem [#allocation1], 1
      %730 = vst [vmem:[%s729] ss:$4 sm:$0xff] %v708
      %s732 = scalar_lea.vmem [#allocation1], 2
      %733 = vst [vmem:[%s732] ss:$4 sm:$0xff] %v712
      %s735 = scalar_lea.vmem [#allocation1], 3
      %736 = vst [vmem:[%s735] ss:$4 sm:$0xff] %v716
      %v737 = vld.sshfl [vmem:[#allocation1] sm:$0xff pattern:$0x73625140]
      %v746 = vunpack.c.l.b16 %v718
      %v747 = vunpack.c.l.b16 %v719
      %v748 = vunpack.c.l.b16 %v720
      %v749 = vunpack.c.l.b16 %v721
      %v750 = vunpack.c.l.b16 %v722
      %v751 = vunpack.c.l.b16 %v723
      %v752 = vunpack.c.l.b16 %v724
      %v753 = vunpack.c.l.b16 %v725
      %v754 = vpack.c.b16 %v747, %v746
      %v755 = vpack.c.b16 %v749, %v748
      %v756 = vpack.c.b16 %v751, %v750
      %v757 = vpack.c.b16 %v753, %v752
      %v762 = vsel %vm585, %v737, 0
      %764 = vmatpush.bf16.msra.mxu0 0
      %765 = vmatpush.bf16.msra.mxu0 0
      %766 = vmatpush.bf16.msra.mxu0 0
      %767 = vmatpush.bf16.msra.mxu0 0
      %768 = vmatpush.bf16.msra.mxu0 %v757
      %769 = vmatpush.bf16.msra.mxu0 %v756
      %770 = vmatpush.bf16.msra.mxu0 %v755
      %771 = vmatpush.bf16.msra.mxu0 %v754
      %772 = vmatmul.bf16.gmra.mxu0 %v762
      %v773 = vpop.f32.mrf.mxu0
      %v774 = vadd.f32 0.0, %v773
      %v775 = vpop.f32.mrf.mxu0
      %v776 = vadd.f32 0.0, %v775
      %777 = vdwg.mxu0
      %v778 = vadd.f32 %v650, %v774
      %v779 = vadd.f32 %v652, %v776
      %v780 = vld [vmem:[%s334] sm:$0x3]
      %v781 = vld [vmem:[%s334 + $0x4] sm:$0x3]
      %v782 = vld [vmem:[%s334 + $0x8] sm:$0x3]
      %v783 = vld [vmem:[%s334 + $0xc] sm:$0x3]
      %s784 = scalar_lea.vmem %s1, 96
      %v785 = vld [vmem:[%s784] sm:$0xf]
      %v786 = vld [vmem:[%s784 + $0x4] sm:$0xf]
      %v787 = vld [vmem:[%s784 + $0x8] sm:$0xf]
      %v788 = vld [vmem:[%s784 + $0xc] sm:$0xf]
      %v789 = vld [vmem:[%s784 + $0x10] sm:$0xf]
      %v790 = vld [vmem:[%s784 + $0x14] sm:$0xf]
      %v791 = vld [vmem:[%s784 + $0x18] sm:$0xf]
      %v792 = vld [vmem:[%s784 + $0x1c] sm:$0xf]
      %794 = vst [vmem:[#allocation1] ss:$4 sm:$0xff] %v780
      %s796 = scalar_lea.vmem [#allocation1], 1
      %797 = vst [vmem:[%s796] ss:$4 sm:$0xff] %v781
      %s799 = scalar_lea.vmem [#allocation1], 2
      %800 = vst [vmem:[%s799] ss:$4 sm:$0xff] %v782
      %s802 = scalar_lea.vmem [#allocation1], 3
      %803 = vst [vmem:[%s802] ss:$4 sm:$0xff] %v783
      %v804 = vld.sshfl [vmem:[#allocation1] sm:$0xff pattern:$0x73625140]
      %v813 = vunpack.c.l.b16 %v785
      %v814 = vunpack.c.l.b16 %v786
      %v815 = vunpack.c.l.b16 %v787
      %v816 = vunpack.c.l.b16 %v788
      %v817 = vunpack.c.l.b16 %v789
      %v818 = vunpack.c.l.b16 %v790
      %v819 = vunpack.c.l.b16 %v791
      %v820 = vunpack.c.l.b16 %v792
      %v821 = vpack.c.b16 %v814, %v813
      %v822 = vpack.c.b16 %v816, %v815
      %v823 = vpack.c.b16 %v818, %v817
      %v824 = vpack.c.b16 %v820, %v819
      %v829 = vsel %vm585, %v804, 0
      %831 = vmatpush.bf16.msra.mxu0 0
      %832 = vmatpush.bf16.msra.mxu0 0
      %833 = vmatpush.bf16.msra.mxu0 0
      %834 = vmatpush.bf16.msra.mxu0 0
      %835 = vmatpush.bf16.msra.mxu0 %v824
      %836 = vmatpush.bf16.msra.mxu0 %v823
      %837 = vmatpush.bf16.msra.mxu0 %v822
      %838 = vmatpush.bf16.msra.mxu0 %v821
      %839 = vmatmul.bf16.gmra.mxu0 %v829
      %v840 = vpop.f32.mrf.mxu0
      %v841 = vadd.f32 0.0, %v840
      %v842 = vpop.f32.mrf.mxu0
      %v843 = vadd.f32 0.0, %v842
      %844 = vdwg.mxu0
      %v845 = vadd.f32 %v778, %v841
      %v846 = vadd.f32 %v779, %v843
      %s847 = scalar_lea.vmem %s1, 128
      %v848 = vld [vmem:[%s847] sm:$0xf]
      %v849 = vld [vmem:[%s847 + $0x4] sm:$0xf]
      %v850 = vld [vmem:[%s847 + $0x8] sm:$0xf]
      %v851 = vld [vmem:[%s847 + $0xc] sm:$0xf]
      %v852 = vld [vmem:[%s847 + $0x10] sm:$0xf]
      %v853 = vld [vmem:[%s847 + $0x14] sm:$0xf]
      %v854 = vld [vmem:[%s847 + $0x18] sm:$0xf]
      %v855 = vld [vmem:[%s847 + $0x1c] sm:$0xf]
      %857 = vst [vmem:[#allocation1] ss:$4 sm:$0xff] %v392
      %s859 = scalar_lea.vmem [#allocation1], 1
      %860 = vst [vmem:[%s859] ss:$4 sm:$0xff] %v405
      %s862 = scalar_lea.vmem [#allocation1], 2
      %863 = vst [vmem:[%s862] ss:$4 sm:$0xff] %v418
      %s865 = scalar_lea.vmem [#allocation1], 3
      %866 = vst [vmem:[%s865] ss:$4 sm:$0xff] %v431
      %v867 = vld.sshfl [vmem:[#allocation1] sm:$0xff pattern:$0x73625140]
      %v876 = vunpack.c.l.b16 %v848
      %v877 = vunpack.c.l.b16 %v849
      %v878 = vunpack.c.l.b16 %v850
      %v879 = vunpack.c.l.b16 %v851
      %v880 = vunpack.c.l.b16 %v852
      %v881 = vunpack.c.l.b16 %v853
      %v882 = vunpack.c.l.b16 %v854
      %v883 = vunpack.c.l.b16 %v855
      %v884 = vpack.c.b16 %v877, %v876
      %v885 = vpack.c.b16 %v879, %v878
      %v886 = vpack.c.b16 %v881, %v880
      %v887 = vpack.c.b16 %v883, %v882
      %v892 = vsel %vm585, %v867, 0
      %894 = vmatpush.bf16.msra.mxu0 0
      %895 = vmatpush.bf16.msra.mxu0 0
      %896 = vmatpush.bf16.msra.mxu0 0
      %897 = vmatpush.bf16.msra.mxu0 0
      %898 = vmatpush.bf16.msra.mxu0 %v887
      %899 = vmatpush.bf16.msra.mxu0 %v886
      %900 = vmatpush.bf16.msra.mxu0 %v885
      %901 = vmatpush.bf16.msra.mxu0 %v884
      %902 = vmatmul.bf16.gmra.mxu0 %v892
      %v903 = vpop.f32.mrf.mxu0
      %v904 = vadd.f32 0.0, %v903
      %v905 = vpop.f32.mrf.mxu0
      %v906 = vadd.f32 0.0, %v905
      %907 = vdwg.mxu0
      %v908 = vadd.f32 %v845, %v904
      %v909 = vadd.f32 %v846, %v906
      %v910 = vld [vmem:[%s334] sm:$0x6]
      %v911 = vld [vmem:[%s334 + $0x4] sm:$0x6]
      %v912 = vld [vmem:[%s334 + $0x8] sm:$0x6]
      %v913 = vld [vmem:[%s334 + $0xc] sm:$0x6]
      %v918 = vrot.slane %v910, 2
      %v919 = vrot.slane %v911, 2
      %v920 = vrot.slane %v912, 2
      %v921 = vrot.slane %v913, 2
      %v924 = vsel %vm347, %v910, %v918
      %v926 = vsel %vm351, %v910, %v918
      %v928 = vrot.slane %v926, 2
      %v931 = vsel %vm347, %v911, %v919
      %v933 = vsel %vm351, %v911, %v919
      %v935 = vrot.slane %v933, 2
      %v938 = vsel %vm347, %v912, %v920
      %v940 = vsel %vm351, %v912, %v920
      %v942 = vrot.slane %v940, 2
      %v945 = vsel %vm347, %v913, %v921
      %v947 = vsel %vm351, %v913, %v921
      %v949 = vrot.slane %v947, 2
      %v950 = vrot.slane %v924, 7
      %v951 = vrot.slane %v950, 2
      %v952 = vrot.slane %v928, 7
      %v953 = vsel %vm700, %v951, %v952
      %v954 = vrot.slane %v931, 7
      %v955 = vrot.slane %v954, 2
      %v956 = vrot.slane %v935, 7
      %v957 = vsel %vm700, %v955, %v956
      %v958 = vrot.slane %v938, 7
      %v959 = vrot.slane %v958, 2
      %v960 = vrot.slane %v942, 7
      %v961 = vsel %vm700, %v959, %v960
      %v962 = vrot.slane %v945, 7
      %v963 = vrot.slane %v962, 2
      %v964 = vrot.slane %v949, 7
      %v965 = vsel %vm700, %v963, %v964
      %s966 = scalar_lea.vmem %s1, 160
      %v967 = vld [vmem:[%s966] sm:$0xf]
      %v968 = vld [vmem:[%s966 + $0x4] sm:$0xf]
      %v969 = vld [vmem:[%s966 + $0x8] sm:$0xf]
      %v970 = vld [vmem:[%s966 + $0xc] sm:$0xf]
      %v971 = vld [vmem:[%s966 + $0x10] sm:$0xf]
      %v972 = vld [vmem:[%s966 + $0x14] sm:$0xf]
      %v973 = vld [vmem:[%s966 + $0x18] sm:$0xf]
      %v974 = vld [vmem:[%s966 + $0x1c] sm:$0xf]
      %976 = vst [vmem:[#allocation1] ss:$4 sm:$0xff] %v953
      %s978 = scalar_lea.vmem [#allocation1], 1
      %979 = vst [vmem:[%s978] ss:$4 sm:$0xff] %v957
      %s981 = scalar_lea.vmem [#allocation1], 2
      %982 = vst [vmem:[%s981] ss:$4 sm:$0xff] %v961
      %s984 = scalar_lea.vmem [#allocation1], 3
      %985 = vst [vmem:[%s984] ss:$4 sm:$0xff] %v965
      %v986 = vld.sshfl [vmem:[#allocation1] sm:$0xff pattern:$0x73625140]
      %v995 = vunpack.c.l.b16 %v967
      %v996 = vunpack.c.l.b16 %v968
      %v997 = vunpack.c.l.b16 %v969
      %v998 = vunpack.c.l.b16 %v970
      %v999 = vunpack.c.l.b16 %v971
      %v1000 = vunpack.c.l.b16 %v972
      %v1001 = vunpack.c.l.b16 %v973
      %v1002 = vunpack.c.l.b16 %v974
      %v1003 = vpack.c.b16 %v996, %v995
      %v1004 = vpack.c.b16 %v998, %v997
      %v1005 = vpack.c.b16 %v1000, %v999
      %v1006 = vpack.c.b16 %v1002, %v1001
      %v1011 = vsel %vm585, %v986, 0
      %1013 = vmatpush.bf16.msra.mxu0 0
      %1014 = vmatpush.bf16.msra.mxu0 0
      %1015 = vmatpush.bf16.msra.mxu0 0
      %1016 = vmatpush.bf16.msra.mxu0 0
      %1017 = vmatpush.bf16.msra.mxu0 %v1006
      %1018 = vmatpush.bf16.msra.mxu0 %v1005
      %1019 = vmatpush.bf16.msra.mxu0 %v1004
      %1020 = vmatpush.bf16.msra.mxu0 %v1003
      %1021 = vmatmul.bf16.gmra.mxu0 %v1011
      %v1022 = vpop.f32.mrf.mxu0
      %v1023 = vadd.f32 0.0, %v1022
      %v1024 = vpop.f32.mrf.mxu0
      %v1025 = vadd.f32 0.0, %v1024
      %1026 = vdwg.mxu0
      %v1027 = vadd.f32 %v908, %v1023
      %v1028 = vadd.f32 %v909, %v1025
      %s1029 = scalar_lea.vmem %s327, 8
      %v1030 = vld [vmem:[%s1029] sm:$0x3]
      %v1031 = vld [vmem:[%s1029 + $0x4] sm:$0x3]
      %v1032 = vld [vmem:[%s1029 + $0x8] sm:$0x3]
      %v1033 = vld [vmem:[%s1029 + $0xc] sm:$0x3]
      %s1034 = scalar_lea.vmem %s1, 192
      %v1035 = vld [vmem:[%s1034] sm:$0xf]
      %v1036 = vld [vmem:[%s1034 + $0x4] sm:$0xf]
      %v1037 = vld [vmem:[%s1034 + $0x8] sm:$0xf]
      %v1038 = vld [vmem:[%s1034 + $0xc] sm:$0xf]
      %v1039 = vld [vmem:[%s1034 + $0x10] sm:$0xf]
      %v1040 = vld [vmem:[%s1034 + $0x14] sm:$0xf]
      %v1041 = vld [vmem:[%s1034 + $0x18] sm:$0xf]
      %v1042 = vld [vmem:[%s1034 + $0x1c] sm:$0xf]
      %1044 = vst [vmem:[#allocation1] ss:$4 sm:$0xff] %v1030
      %s1046 = scalar_lea.vmem [#allocation1], 1
      %1047 = vst [vmem:[%s1046] ss:$4 sm:$0xff] %v1031
      %s1049 = scalar_lea.vmem [#allocation1], 2
      %1050 = vst [vmem:[%s1049] ss:$4 sm:$0xff] %v1032
      %s1052 = scalar_lea.vmem [#allocation1], 3
      %1053 = vst [vmem:[%s1052] ss:$4 sm:$0xff] %v1033
      %v1054 = vld.sshfl [vmem:[#allocation1] sm:$0xff pattern:$0x73625140]
      %v1063 = vunpack.c.l.b16 %v1035
      %v1064 = vunpack.c.l.b16 %v1036
      %v1065 = vunpack.c.l.b16 %v1037
      %v1066 = vunpack.c.l.b16 %v1038
      %v1067 = vunpack.c.l.b16 %v1039
      %v1068 = vunpack.c.l.b16 %v1040
      %v1069 = vunpack.c.l.b16 %v1041
      %v1070 = vunpack.c.l.b16 %v1042
      %v1071 = vpack.c.b16 %v1064, %v1063
      %v1072 = vpack.c.b16 %v1066, %v1065
      %v1073 = vpack.c.b16 %v1068, %v1067
      %v1074 = vpack.c.b16 %v1070, %v1069
      %v1079 = vsel %vm585, %v1054, 0
      %1081 = vmatpush.bf16.msra.mxu0 0
      %1082 = vmatpush.bf16.msra.mxu0 0
      %1083 = vmatpush.bf16.msra.mxu0 0
      %1084 = vmatpush.bf16.msra.mxu0 0
      %1085 = vmatpush.bf16.msra.mxu0 %v1074
      %1086 = vmatpush.bf16.msra.mxu0 %v1073
      %1087 = vmatpush.bf16.msra.mxu0 %v1072
      %1088 = vmatpush.bf16.msra.mxu0 %v1071
      %1089 = vmatmul.bf16.gmra.mxu0 %v1079
      %v1090 = vpop.f32.mrf.mxu0
      %v1091 = vadd.f32 0.0, %v1090
      %v1092 = vpop.f32.mrf.mxu0
      %v1093 = vadd.f32 0.0, %v1092
      %1094 = vdwg.mxu0
      %v1095 = vadd.f32 %v1027, %v1091
      %v1096 = vadd.f32 %v1028, %v1093
      %v1097 = vld [vmem:[%s1029] sm:$0x7]
      %v1098 = vld [vmem:[%s1029 + $0x4] sm:$0x7]
      %v1099 = vld [vmem:[%s1029 + $0x8] sm:$0x7]
      %v1100 = vld [vmem:[%s1029 + $0xc] sm:$0x7]
      %v1105 = vrot.slane %v1097, 2
      %v1106 = vrot.slane %v1098, 2
      %v1107 = vrot.slane %v1099, 2
      %v1108 = vrot.slane %v1100, 2
      %v1111 = vsel %vm347, %v1097, %v1105
      %v1112 = vsel %vm351, %v1097, %v1105
      %v1114 = vrot.slane %v1112, 2
      %v1117 = vsel %vm347, %v1098, %v1106
      %v1118 = vsel %vm351, %v1098, %v1106
      %v1120 = vrot.slane %v1118, 2
      %v1123 = vsel %vm347, %v1099, %v1107
      %v1124 = vsel %vm351, %v1099, %v1107
      %v1126 = vrot.slane %v1124, 2
      %v1129 = vsel %vm347, %v1100, %v1108
      %v1130 = vsel %vm351, %v1100, %v1108
      %v1132 = vrot.slane %v1130, 2
      %v1133 = vshrl.u32 %v1111, 16
      %v1135 = vrot.slane %v1133, 6
      %v1136 = vshll.u32 %v1111, 16
      %v1138 = vrot.slane %v1136, 7
      %v1139 = vor.u32 %v1135, %v1138
      %v1140 = vrot.slane %v1139, 2
      %v1142 = vshll.u32 %v1114, 16
      %v1144 = vrot.slane %v1142, 7
      %v1145 = vsel %vm379, %v1140, %v1144
      %v1146 = vshrl.u32 %v1117, 16
      %v1148 = vrot.slane %v1146, 6
      %v1149 = vshll.u32 %v1117, 16
      %v1151 = vrot.slane %v1149, 7
      %v1152 = vor.u32 %v1148, %v1151
      %v1153 = vrot.slane %v1152, 2
      %v1155 = vshll.u32 %v1120, 16
      %v1157 = vrot.slane %v1155, 7
      %v1158 = vsel %vm379, %v1153, %v1157
      %v1159 = vshrl.u32 %v1123, 16
      %v1161 = vrot.slane %v1159, 6
      %v1162 = vshll.u32 %v1123, 16
      %v1164 = vrot.slane %v1162, 7
      %v1165 = vor.u32 %v1161, %v1164
      %v1166 = vrot.slane %v1165, 2
      %v1168 = vshll.u32 %v1126, 16
      %v1170 = vrot.slane %v1168, 7
      %v1171 = vsel %vm379, %v1166, %v1170
      %v1172 = vshrl.u32 %v1129, 16
      %v1174 = vrot.slane %v1172, 6
      %v1175 = vshll.u32 %v1129, 16
      %v1177 = vrot.slane %v1175, 7
      %v1178 = vor.u32 %v1174, %v1177
      %v1179 = vrot.slane %v1178, 2
      %v1181 = vshll.u32 %v1132, 16
      %v1183 = vrot.slane %v1181, 7
      %v1184 = vsel %vm379, %v1179, %v1183
      %s1185 = scalar_lea.vmem %s1, 224
      %v1186 = vld [vmem:[%s1185] sm:$0xf]
      %v1187 = vld [vmem:[%s1185 + $0x4] sm:$0xf]
      %v1188 = vld [vmem:[%s1185 + $0x8] sm:$0xf]
      %v1189 = vld [vmem:[%s1185 + $0xc] sm:$0xf]
      %v1190 = vld [vmem:[%s1185 + $0x10] sm:$0xf]
      %v1191 = vld [vmem:[%s1185 + $0x14] sm:$0xf]
      %v1192 = vld [vmem:[%s1185 + $0x18] sm:$0xf]
      %v1193 = vld [vmem:[%s1185 + $0x1c] sm:$0xf]
      %1195 = vst [vmem:[#allocation1] ss:$4 sm:$0xff] %v1145
      %s1197 = scalar_lea.vmem [#allocation1], 1
      %1198 = vst [vmem:[%s1197] ss:$4 sm:$0xff] %v1158
      %s1200 = scalar_lea.vmem [#allocation1], 2
      %1201 = vst [vmem:[%s1200] ss:$4 sm:$0xff] %v1171
      %s1203 = scalar_lea.vmem [#allocation1], 3
      %1204 = vst [vmem:[%s1203] ss:$4 sm:$0xff] %v1184
      %v1205 = vld.sshfl [vmem:[#allocation1] sm:$0xff pattern:$0x73625140]
      %v1214 = vunpack.c.l.b16 %v1186
      %v1215 = vunpack.c.l.b16 %v1187
      %v1216 = vunpack.c.l.b16 %v1188
      %v1217 = vunpack.c.l.b16 %v1189
      %v1218 = vunpack.c.l.b16 %v1190
      %v1219 = vunpack.c.l.b16 %v1191
      %v1220 = vunpack.c.l.b16 %v1192
      %v1221 = vunpack.c.l.b16 %v1193
      %v1222 = vpack.c.b16 %v1215, %v1214
      %v1223 = vpack.c.b16 %v1217, %v1216
      %v1224 = vpack.c.b16 %v1219, %v1218
      %v1225 = vpack.c.b16 %v1221, %v1220
      %v1230 = vsel %vm585, %v1205, 0
      %1232 = vmatpush.bf16.msra.mxu0 0
      %1233 = vmatpush.bf16.msra.mxu0 0
      %1234 = vmatpush.bf16.msra.mxu0 0
      %1235 = vmatpush.bf16.msra.mxu0 0
      %1236 = vmatpush.bf16.msra.mxu0 %v1225
      %1237 = vmatpush.bf16.msra.mxu0 %v1224
      %1238 = vmatpush.bf16.msra.mxu0 %v1223
      %1239 = vmatpush.bf16.msra.mxu0 %v1222
      %1240 = vmatmul.bf16.gmra.mxu0 %v1230
      %v1241 = vpop.f32.mrf.mxu0
      %v1242 = vadd.f32 0.0, %v1241
      %v1243 = vpop.f32.mrf.mxu0
      %v1244 = vadd.f32 0.0, %v1243
      %1245 = vdwg.mxu0
      %v1246 = vadd.f32 %v1095, %v1242
      %v1247 = vadd.f32 %v1096, %v1244
      %v1248 = vld [vmem:[%s1029] sm:$0x6]
      %v1249 = vld [vmem:[%s1029 + $0x4] sm:$0x6]
      %v1250 = vld [vmem:[%s1029 + $0x8] sm:$0x6]
      %v1251 = vld [vmem:[%s1029 + $0xc] sm:$0x6]
      %v1256 = vrot.slane %v1248, 2
      %v1257 = vrot.slane %v1249, 2
      %v1258 = vrot.slane %v1250, 2
      %v1259 = vrot.slane %v1251, 2
      %v1262 = vsel %vm347, %v1248, %v1256
      %v1264 = vsel %vm351, %v1248, %v1256
      %v1266 = vrot.slane %v1264, 2
      %v1269 = vsel %vm347, %v1249, %v1257
      %v1271 = vsel %vm351, %v1249, %v1257
      %v1273 = vrot.slane %v1271, 2
      %v1276 = vsel %vm347, %v1250, %v1258
      %v1278 = vsel %vm351, %v1250, %v1258
      %v1280 = vrot.slane %v1278, 2
      %v1283 = vsel %vm347, %v1251, %v1259
      %v1285 = vsel %vm351, %v1251, %v1259
      %v1287 = vrot.slane %v1285, 2
      %v1288 = vrot.slane %v1262, 7
      %v1289 = vrot.slane %v1288, 2
      %v1290 = vrot.slane %v1266, 7
      %v1291 = vsel %vm700, %v1289, %v1290
      %v1292 = vrot.slane %v1269, 7
      %v1293 = vrot.slane %v1292, 2
      %v1294 = vrot.slane %v1273, 7
      %v1295 = vsel %vm700, %v1293, %v1294
      %v1296 = vrot.slane %v1276, 7
      %v1297 = vrot.slane %v1296, 2
      %v1298 = vrot.slane %v1280, 7
      %v1299 = vsel %vm700, %v1297, %v1298
      %v1300 = vrot.slane %v1283, 7
      %v1301 = vrot.slane %v1300, 2
      %v1302 = vrot.slane %v1287, 7
      %v1303 = vsel %vm700, %v1301, %v1302
      %s1304 = scalar_lea.vmem %s1, 256
      %v1305 = vld [vmem:[%s1304] sm:$0xf]
      %v1306 = vld [vmem:[%s1304 + $0x4] sm:$0xf]
      %v1307 = vld [vmem:[%s1304 + $0x8] sm:$0xf]
      %v1308 = vld [vmem:[%s1304 + $0xc] sm:$0xf]
      %v1309 = vld [vmem:[%s1304 + $0x10] sm:$0xf]
      %v1310 = vld [vmem:[%s1304 + $0x14] sm:$0xf]
      %v1311 = vld [vmem:[%s1304 + $0x18] sm:$0xf]
      %v1312 = vld [vmem:[%s1304 + $0x1c] sm:$0xf]
      %1314 = vst [vmem:[#allocation1] ss:$4 sm:$0xff] %v1291
      %s1316 = scalar_lea.vmem [#allocation1], 1
      %1317 = vst [vmem:[%s1316] ss:$4 sm:$0xff] %v1295
      %s1319 = scalar_lea.vmem [#allocation1], 2
      %1320 = vst [vmem:[%s1319] ss:$4 sm:$0xff] %v1299
      %s1322 = scalar_lea.vmem [#allocation1], 3
      %1323 = vst [vmem:[%s1322] ss:$4 sm:$0xff] %v1303
      %v1324 = vld.sshfl [vmem:[#allocation1] sm:$0xff pattern:$0x73625140]
      %v1333 = vunpack.c.l.b16 %v1305
      %v1334 = vunpack.c.l.b16 %v1306
      %v1335 = vunpack.c.l.b16 %v1307
      %v1336 = vunpack.c.l.b16 %v1308
      %v1337 = vunpack.c.l.b16 %v1309
      %v1338 = vunpack.c.l.b16 %v1310
      %v1339 = vunpack.c.l.b16 %v1311
      %v1340 = vunpack.c.l.b16 %v1312
      %v1341 = vpack.c.b16 %v1334, %v1333
      %v1342 = vpack.c.b16 %v1336, %v1335
      %v1343 = vpack.c.b16 %v1338, %v1337
      %v1344 = vpack.c.b16 %v1340, %v1339
      %v1349 = vsel %vm585, %v1324, 0
      %1351 = vmatpush.bf16.msra.mxu0 0
      %1352 = vmatpush.bf16.msra.mxu0 0
      %1353 = vmatpush.bf16.msra.mxu0 0
      %1354 = vmatpush.bf16.msra.mxu0 0
      %1355 = vmatpush.bf16.msra.mxu0 %v1344
      %1356 = vmatpush.bf16.msra.mxu0 %v1343
      %1357 = vmatpush.bf16.msra.mxu0 %v1342
      %1358 = vmatpush.bf16.msra.mxu0 %v1341
      %1359 = vmatmul.bf16.gmra.mxu0 %v1349
      %v1360 = vpop.f32.mrf.mxu0
      %v1361 = vadd.f32 0.0, %v1360
      %v1362 = vpop.f32.mrf.mxu0
      %v1363 = vadd.f32 0.0, %v1362
      %1364 = vdwg.mxu0
      %v1365 = vadd.f32 %v1246, %v1361
      %v1366 = vadd.f32 %v1247, %v1363
      %v1367 = vld [vmem:[%s2] sm:$0x1]
      %v1369 = vperm.slane %v1367, 0
      %v1371 = vadd.f32 %v1365, %v1369
      %v1372 = vadd.f32 %v1366, %v1369
      %v1373 = vmax.f32 %v1371, 0.0
      %v1374 = vmax.f32 %v1372, 0.0
      %vm1375 = vcmask 518144
      %1376 = vst.msk [vmem:[#allocation2] sm:$0x7] %vm1375, 0
      %1377 = vst.msk [vmem:[#allocation2 + $0x4] sm:$0x7] %vm1375, 0
      %1378 = vst.msk [vmem:[#allocation2 + $0x8] sm:$0x7] %vm1375, 0
      %1379 = vst.msk [vmem:[#allocation2 + $0xc] sm:$0x7] %vm1375, 0
      %1380 = vst.msk [vmem:[#allocation2 + $0x10] sm:$0x7] %vm1375, 0
      %1381 = vst.msk [vmem:[#allocation2 + $0x14] sm:$0x7] %vm1375, 0
      %v1384 = vrot.slane %v1373, 4
      %v1385 = vrot.slane %v1374, 4
      %v1388 = vpack.c.bf16 %v1373, %v1373
      %v1389 = vpack.c.bf16 %v1384, %v1384
      %v1390 = vpack.c.bf16 %v1374, %v1374
      %v1391 = vpack.c.bf16 %v1385, %v1385
      %v1393 = vshrl.u32 %v1388, 16
      %v1395 = vrot.slane %v1393, 7
      %v1396 = vshll.u32 %v1388, 16
      %v1398 = vor.u32 %v1395, %v1396
      %v1400 = vshrl.u32 %v1389, 16
      %v1402 = vrot.slane %v1400, 7
      %v1403 = vshll.u32 %v1389, 16
      %v1405 = vor.u32 %v1402, %v1403
      %v1407 = vshrl.u32 %v1390, 16
      %v1409 = vrot.slane %v1407, 7
      %v1410 = vshll.u32 %v1390, 16
      %v1412 = vor.u32 %v1409, %v1410
      %v1414 = vshrl.u32 %v1391, 16
      %v1416 = vrot.slane %v1414, 7
      %v1417 = vshll.u32 %v1391, 16
      %v1419 = vor.u32 %v1416, %v1417
      %s1424 = scalar_lea.vmem [#allocation2], 4
      %vm1425 = vcmask 518144
      %vm1426 = vsmask.f32 2306
      %vm1427 = vmand %vm1425, %vm1426
      %v1428 = vld [vmem:[%s1424] sm:$0x7]
      %v1429 = vsel %vm1427, %v1398, %v1428
      %1430 = vst [vmem:[%s1424] sm:$0x7] %v1429
      %v1431 = vld [vmem:[%s1424 + $0x4] sm:$0x7]
      %v1432 = vsel %vm1427, %v1405, %v1431
      %1433 = vst [vmem:[%s1424 + $0x4] sm:$0x7] %v1432
      %v1434 = vld [vmem:[%s1424 + $0x8] sm:$0x7]
      %v1435 = vsel %vm1427, %v1412, %v1434
      %1436 = vst [vmem:[%s1424 + $0x8] sm:$0x7] %v1435
      %v1437 = vld [vmem:[%s1424 + $0xc] sm:$0x7]
      %v1438 = vsel %vm1427, %v1419, %v1437
      %1439 = vst [vmem:[%s1424 + $0xc] sm:$0x7] %v1438
      %v1440 = vld [vmem:[#allocation2] sm:$0x3]
      %v1441 = vld [vmem:[#allocation2 + $0x4] sm:$0x3]
      %v1442 = vld [vmem:[#allocation2 + $0x8] sm:$0x3]
      %v1443 = vld [vmem:[#allocation2 + $0xc] sm:$0x3]
      %v1444 = vld [vmem:[%s3] sm:$0xf]
      %v1445 = vld [vmem:[%s3 + $0x4] sm:$0xf]
      %v1446 = vld [vmem:[%s3 + $0x8] sm:$0xf]
      %v1447 = vld [vmem:[%s3 + $0xc] sm:$0xf]
      %v1448 = vld [vmem:[%s3 + $0x10] sm:$0xf]
      %v1449 = vld [vmem:[%s3 + $0x14] sm:$0xf]
      %v1450 = vld [vmem:[%s3 + $0x18] sm:$0xf]
      %v1451 = vld [vmem:[%s3 + $0x1c] sm:$0xf]
      %v1452 = vld [vmem:[#allocation2] sm:$0x7]
      %v1453 = vld [vmem:[#allocation2 + $0x4] sm:$0x7]
      %v1454 = vld [vmem:[#allocation2 + $0x8] sm:$0x7]
      %v1455 = vld [vmem:[#allocation2 + $0xc] sm:$0x7]
      %v1460 = vrot.slane %v1452, 2
      %v1461 = vrot.slane %v1453, 2
      %v1462 = vrot.slane %v1454, 2
      %v1463 = vrot.slane %v1455, 2
      %v1466 = vsel %vm347, %v1452, %v1460
      %v1467 = vsel %vm351, %v1452, %v1460
      %v1469 = vrot.slane %v1467, 2
      %v1472 = vsel %vm347, %v1453, %v1461
      %v1473 = vsel %vm351, %v1453, %v1461
      %v1475 = vrot.slane %v1473, 2
      %v1478 = vsel %vm347, %v1454, %v1462
      %v1479 = vsel %vm351, %v1454, %v1462
      %v1481 = vrot.slane %v1479, 2
      %v1484 = vsel %vm347, %v1455, %v1463
      %v1485 = vsel %vm351, %v1455, %v1463
      %v1487 = vrot.slane %v1485, 2
      %v1488 = vshrl.u32 %v1466, 16
      %v1490 = vrot.slane %v1488, 6
      %v1491 = vshll.u32 %v1466, 16
      %v1493 = vrot.slane %v1491, 7
      %v1494 = vor.u32 %v1490, %v1493
      %v1495 = vrot.slane %v1494, 2
      %v1497 = vshll.u32 %v1469, 16
      %v1499 = vrot.slane %v1497, 7
      %v1500 = vsel %vm379, %v1495, %v1499
      %v1501 = vshrl.u32 %v1472, 16
      %v1503 = vrot.slane %v1501, 6
      %v1504 = vshll.u32 %v1472, 16
      %v1506 = vrot.slane %v1504, 7
      %v1507 = vor.u32 %v1503, %v1506
      %v1508 = vrot.slane %v1507, 2
      %v1510 = vshll.u32 %v1475, 16
      %v1512 = vrot.slane %v1510, 7
      %v1513 = vsel %vm379, %v1508, %v1512
      %v1514 = vshrl.u32 %v1478, 16
      %v1516 = vrot.slane %v1514, 6
      %v1517 = vshll.u32 %v1478, 16
      %v1519 = vrot.slane %v1517, 7
      %v1520 = vor.u32 %v1516, %v1519
      %v1521 = vrot.slane %v1520, 2
      %v1523 = vshll.u32 %v1481, 16
      %v1525 = vrot.slane %v1523, 7
      %v1526 = vsel %vm379, %v1521, %v1525
      %v1527 = vshrl.u32 %v1484, 16
      %v1529 = vrot.slane %v1527, 6
      %v1530 = vshll.u32 %v1484, 16
      %v1532 = vrot.slane %v1530, 7
      %v1533 = vor.u32 %v1529, %v1532
      %v1534 = vrot.slane %v1533, 2
      %v1536 = vshll.u32 %v1487, 16
      %v1538 = vrot.slane %v1536, 7
      %v1539 = vsel %vm379, %v1534, %v1538
      %s1540 = scalar_lea.vmem %s3, 32
      %v1541 = vld [vmem:[%s1540] sm:$0xf]
      %v1542 = vld [vmem:[%s1540 + $0x4] sm:$0xf]
      %v1543 = vld [vmem:[%s1540 + $0x8] sm:$0xf]
      %v1544 = vld [vmem:[%s1540 + $0xc] sm:$0xf]
      %v1545 = vld [vmem:[%s1540 + $0x10] sm:$0xf]
      %v1546 = vld [vmem:[%s1540 + $0x14] sm:$0xf]
      %v1547 = vld [vmem:[%s1540 + $0x18] sm:$0xf]
      %v1548 = vld [vmem:[%s1540 + $0x1c] sm:$0xf]
      %1550 = vst [vmem:[#allocation1] ss:$4 sm:$0xff] %v1500
      %s1552 = scalar_lea.vmem [#allocation1], 1
      %1553 = vst [vmem:[%s1552] ss:$4 sm:$0xff] %v1513
      %s1555 = scalar_lea.vmem [#allocation1], 2
      %1556 = vst [vmem:[%s1555] ss:$4 sm:$0xff] %v1526
      %s1558 = scalar_lea.vmem [#allocation1], 3
      %1559 = vst [vmem:[%s1558] ss:$4 sm:$0xff] %v1539
      %v1560 = vld.sshfl [vmem:[#allocation1] sm:$0xff pattern:$0x73625140]
      %v1569 = vunpack.c.l.b16 %v1541
      %v1570 = vunpack.c.l.b16 %v1542
      %v1571 = vunpack.c.l.b16 %v1543
      %v1572 = vunpack.c.l.b16 %v1544
      %v1573 = vunpack.c.l.b16 %v1545
      %v1574 = vunpack.c.l.b16 %v1546
      %v1575 = vunpack.c.l.b16 %v1547
      %v1576 = vunpack.c.l.b16 %v1548
      %v1577 = vpack.c.b16 %v1570, %v1569
      %v1578 = vpack.c.b16 %v1572, %v1571
      %v1579 = vpack.c.b16 %v1574, %v1573
      %v1580 = vpack.c.b16 %v1576, %v1575
      %v1585 = vsel %vm585, %v1560, 0
      %1587 = vmatpush.bf16.msra.mxu0 0
      %1588 = vmatpush.bf16.msra.mxu0 0
      %1589 = vmatpush.bf16.msra.mxu0 0
      %1590 = vmatpush.bf16.msra.mxu0 0
      %1591 = vmatpush.bf16.msra.mxu0 %v1580
      %1592 = vmatpush.bf16.msra.mxu0 %v1579
      %1593 = vmatpush.bf16.msra.mxu0 %v1578
      %1594 = vmatpush.bf16.msra.mxu0 %v1577
      %1595 = vmatmul.bf16.gmra.mxu0 %v1585
      %v1596 = vpop.f32.mrf.mxu0
      %v1597 = vadd.f32 0.0, %v1596
      %v1598 = vpop.f32.mrf.mxu0
      %v1599 = vadd.f32 0.0, %v1598
      %1600 = vdwg.mxu0
      %1602 = vst [vmem:[#allocation1] ss:$4 sm:$0xff] %v1440
      %s1604 = scalar_lea.vmem [#allocation1], 1
      %1605 = vst [vmem:[%s1604] ss:$4 sm:$0xff] %v1441
      %s1607 = scalar_lea.vmem [#allocation1], 2
      %1608 = vst [vmem:[%s1607] ss:$4 sm:$0xff] %v1442
      %s1610 = scalar_lea.vmem [#allocation1], 3
      %1611 = vst [vmem:[%s1610] ss:$4 sm:$0xff] %v1443
      %v1612 = vld.sshfl [vmem:[#allocation1] sm:$0xff pattern:$0x73625140]
      %v1621 = vunpack.c.l.b16 %v1444
      %v1622 = vunpack.c.l.b16 %v1445
      %v1623 = vunpack.c.l.b16 %v1446
      %v1624 = vunpack.c.l.b16 %v1447
      %v1625 = vunpack.c.l.b16 %v1448
      %v1626 = vunpack.c.l.b16 %v1449
      %v1627 = vunpack.c.l.b16 %v1450
      %v1628 = vunpack.c.l.b16 %v1451
      %v1629 = vpack.c.b16 %v1622, %v1621
      %v1630 = vpack.c.b16 %v1624, %v1623
      %v1631 = vpack.c.b16 %v1626, %v1625
      %v1632 = vpack.c.b16 %v1628, %v1627
      %v1637 = vsel %vm585, %v1612, 0
      %1639 = vmatpush.bf16.msra.mxu0 0
      %1640 = vmatpush.bf16.msra.mxu0 0
      %1641 = vmatpush.bf16.msra.mxu0 0
      %1642 = vmatpush.bf16.msra.mxu0 0
      %1643 = vmatpush.bf16.msra.mxu0 %v1632
      %1644 = vmatpush.bf16.msra.mxu0 %v1631
      %1645 = vmatpush.bf16.msra.mxu0 %v1630
      %1646 = vmatpush.bf16.msra.mxu0 %v1629
      %1647 = vmatmul.bf16.gmra.mxu0 %v1637
      %v1648 = vpop.f32.mrf.mxu0
      %v1649 = vadd.f32 %v1597, %v1648
      %v1650 = vpop.f32.mrf.mxu0
      %v1651 = vadd.f32 %v1599, %v1650
      %1652 = vdwg.mxu0
      %v1653 = vld [vmem:[#allocation2] sm:$0x6]
      %v1654 = vld [vmem:[#allocation2 + $0x4] sm:$0x6]
      %v1655 = vld [vmem:[#allocation2 + $0x8] sm:$0x6]
      %v1656 = vld [vmem:[#allocation2 + $0xc] sm:$0x6]
      %v1661 = vrot.slane %v1653, 2
      %v1662 = vrot.slane %v1654, 2
      %v1663 = vrot.slane %v1655, 2
      %v1664 = vrot.slane %v1656, 2
      %v1667 = vsel %vm347, %v1653, %v1661
      %v1669 = vsel %vm351, %v1653, %v1661
      %v1671 = vrot.slane %v1669, 2
      %v1674 = vsel %vm347, %v1654, %v1662
      %v1676 = vsel %vm351, %v1654, %v1662
      %v1678 = vrot.slane %v1676, 2
      %v1681 = vsel %vm347, %v1655, %v1663
      %v1683 = vsel %vm351, %v1655, %v1663
      %v1685 = vrot.slane %v1683, 2
      %v1688 = vsel %vm347, %v1656, %v1664
      %v1690 = vsel %vm351, %v1656, %v1664
      %v1692 = vrot.slane %v1690, 2
      %v1693 = vrot.slane %v1667, 7
      %v1694 = vrot.slane %v1693, 2
      %v1695 = vrot.slane %v1671, 7
      %v1696 = vsel %vm700, %v1694, %v1695
      %v1697 = vrot.slane %v1674, 7
      %v1698 = vrot.slane %v1697, 2
      %v1699 = vrot.slane %v1678, 7
      %v1700 = vsel %vm700, %v1698, %v1699
      %v1701 = vrot.slane %v1681, 7
      %v1702 = vrot.slane %v1701, 2
      %v1703 = vrot.slane %v1685, 7
      %v1704 = vsel %vm700, %v1702, %v1703
      %v1705 = vrot.slane %v1688, 7
      %v1706 = vrot.slane %v1705, 2
      %v1707 = vrot.slane %v1692, 7
      %v1708 = vsel %vm700, %v1706, %v1707
      %s1709 = scalar_lea.vmem %s3, 64
      %v1710 = vld [vmem:[%s1709] sm:$0xf]
      %v1711 = vld [vmem:[%s1709 + $0x4] sm:$0xf]
      %v1712 = vld [vmem:[%s1709 + $0x8] sm:$0xf]
      %v1713 = vld [vmem:[%s1709 + $0xc] sm:$0xf]
      %v1714 = vld [vmem:[%s1709 + $0x10] sm:$0xf]
      %v1715 = vld [vmem:[%s1709 + $0x14] sm:$0xf]
      %v1716 = vld [vmem:[%s1709 + $0x18] sm:$0xf]
      %v1717 = vld [vmem:[%s1709 + $0x1c] sm:$0xf]
      %1719 = vst [vmem:[#allocation1] ss:$4 sm:$0xff] %v1696
      %s1721 = scalar_lea.vmem [#allocation1], 1
      %1722 = vst [vmem:[%s1721] ss:$4 sm:$0xff] %v1700
      %s1724 = scalar_lea.vmem [#allocation1], 2
      %1725 = vst [vmem:[%s1724] ss:$4 sm:$0xff] %v1704
      %s1727 = scalar_lea.vmem [#allocation1], 3
      %1728 = vst [vmem:[%s1727] ss:$4 sm:$0xff] %v1708
      %v1729 = vld.sshfl [vmem:[#allocation1] sm:$0xff pattern:$0x73625140]
      %v1738 = vunpack.c.l.b16 %v1710
      %v1739 = vunpack.c.l.b16 %v1711
      %v1740 = vunpack.c.l.b16 %v1712
      %v1741 = vunpack.c.l.b16 %v1713
      %v1742 = vunpack.c.l.b16 %v1714
      %v1743 = vunpack.c.l.b16 %v1715
      %v1744 = vunpack.c.l.b16 %v1716
      %v1745 = vunpack.c.l.b16 %v1717
      %v1746 = vpack.c.b16 %v1739, %v1738
      %v1747 = vpack.c.b16 %v1741, %v1740
      %v1748 = vpack.c.b16 %v1743, %v1742
      %v1749 = vpack.c.b16 %v1745, %v1744
      %v1754 = vsel %vm585, %v1729, 0
      %1756 = vmatpush.bf16.msra.mxu0 0
      %1757 = vmatpush.bf16.msra.mxu0 0
      %1758 = vmatpush.bf16.msra.mxu0 0
      %1759 = vmatpush.bf16.msra.mxu0 0
      %1760 = vmatpush.bf16.msra.mxu0 %v1749
      %1761 = vmatpush.bf16.msra.mxu0 %v1748
      %1762 = vmatpush.bf16.msra.mxu0 %v1747
      %1763 = vmatpush.bf16.msra.mxu0 %v1746
      %1764 = vmatmul.bf16.gmra.mxu0 %v1754
      %v1765 = vpop.f32.mrf.mxu0
      %v1766 = vadd.f32 0.0, %v1765
      %v1767 = vpop.f32.mrf.mxu0
      %v1768 = vadd.f32 0.0, %v1767
      %1769 = vdwg.mxu0
      %v1770 = vadd.f32 %v1649, %v1766
      %v1771 = vadd.f32 %v1651, %v1768
      %v1772 = vld [vmem:[%s1424] sm:$0x3]
      %v1773 = vld [vmem:[%s1424 + $0x4] sm:$0x3]
      %v1774 = vld [vmem:[%s1424 + $0x8] sm:$0x3]
      %v1775 = vld [vmem:[%s1424 + $0xc] sm:$0x3]
      %s1776 = scalar_lea.vmem %s3, 96
      %v1777 = vld [vmem:[%s1776] sm:$0xf]
      %v1778 = vld [vmem:[%s1776 + $0x4] sm:$0xf]
      %v1779 = vld [vmem:[%s1776 + $0x8] sm:$0xf]
      %v1780 = vld [vmem:[%s1776 + $0xc] sm:$0xf]
      %v1781 = vld [vmem:[%s1776 + $0x10] sm:$0xf]
      %v1782 = vld [vmem:[%s1776 + $0x14] sm:$0xf]
      %v1783 = vld [vmem:[%s1776 + $0x18] sm:$0xf]
      %v1784 = vld [vmem:[%s1776 + $0x1c] sm:$0xf]
      %1786 = vst [vmem:[#allocation1] ss:$4 sm:$0xff] %v1772
      %s1788 = scalar_lea.vmem [#allocation1], 1
      %1789 = vst [vmem:[%s1788] ss:$4 sm:$0xff] %v1773
      %s1791 = scalar_lea.vmem [#allocation1], 2
      %1792 = vst [vmem:[%s1791] ss:$4 sm:$0xff] %v1774
      %s1794 = scalar_lea.vmem [#allocation1], 3
      %1795 = vst [vmem:[%s1794] ss:$4 sm:$0xff] %v1775
      %v1796 = vld.sshfl [vmem:[#allocation1] sm:$0xff pattern:$0x73625140]
      %v1805 = vunpack.c.l.b16 %v1777
      %v1806 = vunpack.c.l.b16 %v1778
      %v1807 = vunpack.c.l.b16 %v1779
      %v1808 = vunpack.c.l.b16 %v1780
      %v1809 = vunpack.c.l.b16 %v1781
      %v1810 = vunpack.c.l.b16 %v1782
      %v1811 = vunpack.c.l.b16 %v1783
      %v1812 = vunpack.c.l.b16 %v1784
      %v1813 = vpack.c.b16 %v1806, %v1805
      %v1814 = vpack.c.b16 %v1808, %v1807
      %v1815 = vpack.c.b16 %v1810, %v1809
      %v1816 = vpack.c.b16 %v1812, %v1811
      %v1821 = vsel %vm585, %v1796, 0
      %1823 = vmatpush.bf16.msra.mxu0 0
      %1824 = vmatpush.bf16.msra.mxu0 0
      %1825 = vmatpush.bf16.msra.mxu0 0
      %1826 = vmatpush.bf16.msra.mxu0 0
      %1827 = vmatpush.bf16.msra.mxu0 %v1816
      %1828 = vmatpush.bf16.msra.mxu0 %v1815
      %1829 = vmatpush.bf16.msra.mxu0 %v1814
      %1830 = vmatpush.bf16.msra.mxu0 %v1813
      %1831 = vmatmul.bf16.gmra.mxu0 %v1821
      %v1832 = vpop.f32.mrf.mxu0
      %v1833 = vadd.f32 0.0, %v1832
      %v1834 = vpop.f32.mrf.mxu0
      %v1835 = vadd.f32 0.0, %v1834
      %1836 = vdwg.mxu0
      %v1837 = vadd.f32 %v1770, %v1833
      %v1838 = vadd.f32 %v1771, %v1835
      %v1839 = vld [vmem:[%s1424] sm:$0x7]
      %v1840 = vld [vmem:[%s1424 + $0x4] sm:$0x7]
      %v1841 = vld [vmem:[%s1424 + $0x8] sm:$0x7]
      %v1842 = vld [vmem:[%s1424 + $0xc] sm:$0x7]
      %v1847 = vrot.slane %v1839, 2
      %v1848 = vrot.slane %v1840, 2
      %v1849 = vrot.slane %v1841, 2
      %v1850 = vrot.slane %v1842, 2
      %v1853 = vsel %vm347, %v1839, %v1847
      %v1854 = vsel %vm351, %v1839, %v1847
      %v1856 = vrot.slane %v1854, 2
      %v1859 = vsel %vm347, %v1840, %v1848
      %v1860 = vsel %vm351, %v1840, %v1848
      %v1862 = vrot.slane %v1860, 2
      %v1865 = vsel %vm347, %v1841, %v1849
      %v1866 = vsel %vm351, %v1841, %v1849
      %v1868 = vrot.slane %v1866, 2
      %v1871 = vsel %vm347, %v1842, %v1850
      %v1872 = vsel %vm351, %v1842, %v1850
      %v1874 = vrot.slane %v1872, 2
      %v1875 = vshrl.u32 %v1853, 16
      %v1877 = vrot.slane %v1875, 6
      %v1878 = vshll.u32 %v1853, 16
      %v1880 = vrot.slane %v1878, 7
      %v1881 = vor.u32 %v1877, %v1880
      %v1882 = vrot.slane %v1881, 2
      %v1884 = vshll.u32 %v1856, 16
      %v1886 = vrot.slane %v1884, 7
      %v1887 = vsel %vm379, %v1882, %v1886
      %v1888 = vshrl.u32 %v1859, 16
      %v1890 = vrot.slane %v1888, 6
      %v1891 = vshll.u32 %v1859, 16
      %v1893 = vrot.slane %v1891, 7
      %v1894 = vor.u32 %v1890, %v1893
      %v1895 = vrot.slane %v1894, 2
      %v1897 = vshll.u32 %v1862, 16
      %v1899 = vrot.slane %v1897, 7
      %v1900 = vsel %vm379, %v1895, %v1899
      %v1901 = vshrl.u32 %v1865, 16
      %v1903 = vrot.slane %v1901, 6
      %v1904 = vshll.u32 %v1865, 16
      %v1906 = vrot.slane %v1904, 7
      %v1907 = vor.u32 %v1903, %v1906
      %v1908 = vrot.slane %v1907, 2
      %v1910 = vshll.u32 %v1868, 16
      %v1912 = vrot.slane %v1910, 7
      %v1913 = vsel %vm379, %v1908, %v1912
      %v1914 = vshrl.u32 %v1871, 16
      %v1916 = vrot.slane %v1914, 6
      %v1917 = vshll.u32 %v1871, 16
      %v1919 = vrot.slane %v1917, 7
      %v1920 = vor.u32 %v1916, %v1919
      %v1921 = vrot.slane %v1920, 2
      %v1923 = vshll.u32 %v1874, 16
      %v1925 = vrot.slane %v1923, 7
      %v1926 = vsel %vm379, %v1921, %v1925
      %s1927 = scalar_lea.vmem %s3, 128
      %v1928 = vld [vmem:[%s1927] sm:$0xf]
      %v1929 = vld [vmem:[%s1927 + $0x4] sm:$0xf]
      %v1930 = vld [vmem:[%s1927 + $0x8] sm:$0xf]
      %v1931 = vld [vmem:[%s1927 + $0xc] sm:$0xf]
      %v1932 = vld [vmem:[%s1927 + $0x10] sm:$0xf]
      %v1933 = vld [vmem:[%s1927 + $0x14] sm:$0xf]
      %v1934 = vld [vmem:[%s1927 + $0x18] sm:$0xf]
      %v1935 = vld [vmem:[%s1927 + $0x1c] sm:$0xf]
      %1937 = vst [vmem:[#allocation1] ss:$4 sm:$0xff] %v1887
      %s1939 = scalar_lea.vmem [#allocation1], 1
      %1940 = vst [vmem:[%s1939] ss:$4 sm:$0xff] %v1900
      %s1942 = scalar_lea.vmem [#allocation1], 2
      %1943 = vst [vmem:[%s1942] ss:$4 sm:$0xff] %v1913
      %s1945 = scalar_lea.vmem [#allocation1], 3
      %1946 = vst [vmem:[%s1945] ss:$4 sm:$0xff] %v1926
      %v1947 = vld.sshfl [vmem:[#allocation1] sm:$0xff pattern:$0x73625140]
      %v1956 = vunpack.c.l.b16 %v1928
      %v1957 = vunpack.c.l.b16 %v1929
      %v1958 = vunpack.c.l.b16 %v1930
      %v1959 = vunpack.c.l.b16 %v1931
      %v1960 = vunpack.c.l.b16 %v1932
      %v1961 = vunpack.c.l.b16 %v1933
      %v1962 = vunpack.c.l.b16 %v1934
      %v1963 = vunpack.c.l.b16 %v1935
      %v1964 = vpack.c.b16 %v1957, %v1956
      %v1965 = vpack.c.b16 %v1959, %v1958
      %v1966 = vpack.c.b16 %v1961, %v1960
      %v1967 = vpack.c.b16 %v1963, %v1962
      %v1972 = vsel %vm585, %v1947, 0
      %1974 = vmatpush.bf16.msra.mxu0 0
      %1975 = vmatpush.bf16.msra.mxu0 0
      %1976 = vmatpush.bf16.msra.mxu0 0
      %1977 = vmatpush.bf16.msra.mxu0 0
      %1978 = vmatpush.bf16.msra.mxu0 %v1967
      %1979 = vmatpush.bf16.msra.mxu0 %v1966
      %1980 = vmatpush.bf16.msra.mxu0 %v1965
      %1981 = vmatpush.bf16.msra.mxu0 %v1964
      %1982 = vmatmul.bf16.gmra.mxu0 %v1972
      %v1983 = vpop.f32.mrf.mxu0
      %v1984 = vadd.f32 0.0, %v1983
      %v1985 = vpop.f32.mrf.mxu0
      %v1986 = vadd.f32 0.0, %v1985
      %1987 = vdwg.mxu0
      %v1988 = vadd.f32 %v1837, %v1984
      %v1989 = vadd.f32 %v1838, %v1986
      %v1990 = vld [vmem:[%s1424] sm:$0x6]
      %v1991 = vld [vmem:[%s1424 + $0x4] sm:$0x6]
      %v1992 = vld [vmem:[%s1424 + $0x8] sm:$0x6]
      %v1993 = vld [vmem:[%s1424 + $0xc] sm:$0x6]
      %v1998 = vrot.slane %v1990, 2
      %v1999 = vrot.slane %v1991, 2
      %v2000 = vrot.slane %v1992, 2
      %v2001 = vrot.slane %v1993, 2
      %v2004 = vsel %vm347, %v1990, %v1998
      %v2006 = vsel %vm351, %v1990, %v1998
      %v2008 = vrot.slane %v2006, 2
      %v2011 = vsel %vm347, %v1991, %v1999
      %v2013 = vsel %vm351, %v1991, %v1999
      %v2015 = vrot.slane %v2013, 2
      %v2018 = vsel %vm347, %v1992, %v2000
      %v2020 = vsel %vm351, %v1992, %v2000
      %v2022 = vrot.slane %v2020, 2
      %v2025 = vsel %vm347, %v1993, %v2001
      %v2027 = vsel %vm351, %v1993, %v2001
      %v2029 = vrot.slane %v2027, 2
      %v2030 = vrot.slane %v2004, 7
      %v2031 = vrot.slane %v2030, 2
      %v2032 = vrot.slane %v2008, 7
      %v2033 = vsel %vm700, %v2031, %v2032
      %v2034 = vrot.slane %v2011, 7
      %v2035 = vrot.slane %v2034, 2
      %v2036 = vrot.slane %v2015, 7
      %v2037 = vsel %vm700, %v2035, %v2036
      %v2038 = vrot.slane %v2018, 7
      %v2039 = vrot.slane %v2038, 2
      %v2040 = vrot.slane %v2022, 7
      %v2041 = vsel %vm700, %v2039, %v2040
      %v2042 = vrot.slane %v2025, 7
      %v2043 = vrot.slane %v2042, 2
      %v2044 = vrot.slane %v2029, 7
      %v2045 = vsel %vm700, %v2043, %v2044
      %s2046 = scalar_lea.vmem %s3, 160
      %v2047 = vld [vmem:[%s2046] sm:$0xf]
      %v2048 = vld [vmem:[%s2046 + $0x4] sm:$0xf]
      %v2049 = vld [vmem:[%s2046 + $0x8] sm:$0xf]
      %v2050 = vld [vmem:[%s2046 + $0xc] sm:$0xf]
      %v2051 = vld [vmem:[%s2046 + $0x10] sm:$0xf]
      %v2052 = vld [vmem:[%s2046 + $0x14] sm:$0xf]
      %v2053 = vld [vmem:[%s2046 + $0x18] sm:$0xf]
      %v2054 = vld [vmem:[%s2046 + $0x1c] sm:$0xf]
      %2056 = vst [vmem:[#allocation1] ss:$4 sm:$0xff] %v2033
      %s2058 = scalar_lea.vmem [#allocation1], 1
      %2059 = vst [vmem:[%s2058] ss:$4 sm:$0xff] %v2037
      %s2061 = scalar_lea.vmem [#allocation1], 2
      %2062 = vst [vmem:[%s2061] ss:$4 sm:$0xff] %v2041
      %s2064 = scalar_lea.vmem [#allocation1], 3
      %2065 = vst [vmem:[%s2064] ss:$4 sm:$0xff] %v2045
      %v2066 = vld.sshfl [vmem:[#allocation1] sm:$0xff pattern:$0x73625140]
      %v2075 = vunpack.c.l.b16 %v2047
      %v2076 = vunpack.c.l.b16 %v2048
      %v2077 = vunpack.c.l.b16 %v2049
      %v2078 = vunpack.c.l.b16 %v2050
      %v2079 = vunpack.c.l.b16 %v2051
      %v2080 = vunpack.c.l.b16 %v2052
      %v2081 = vunpack.c.l.b16 %v2053
      %v2082 = vunpack.c.l.b16 %v2054
      %v2083 = vpack.c.b16 %v2076, %v2075
      %v2084 = vpack.c.b16 %v2078, %v2077
      %v2085 = vpack.c.b16 %v2080, %v2079
      %v2086 = vpack.c.b16 %v2082, %v2081
      %v2091 = vsel %vm585, %v2066, 0
      %2093 = vmatpush.bf16.msra.mxu0 0
      %2094 = vmatpush.bf16.msra.mxu0 0
      %2095 = vmatpush.bf16.msra.mxu0 0
      %2096 = vmatpush.bf16.msra.mxu0 0
      %2097 = vmatpush.bf16.msra.mxu0 %v2086
      %2098 = vmatpush.bf16.msra.mxu0 %v2085
      %2099 = vmatpush.bf16.msra.mxu0 %v2084
      %2100 = vmatpush.bf16.msra.mxu0 %v2083
      %2101 = vmatmul.bf16.gmra.mxu0 %v2091
      %v2102 = vpop.f32.mrf.mxu0
      %v2103 = vadd.f32 0.0, %v2102
      %v2104 = vpop.f32.mrf.mxu0
      %v2105 = vadd.f32 0.0, %v2104
      %2106 = vdwg.mxu0
      %v2107 = vadd.f32 %v1988, %v2103
      %v2108 = vadd.f32 %v1989, %v2105
      %s2109 = scalar_lea.vmem [#allocation2], 8
      %v2110 = vld [vmem:[%s2109] sm:$0x3]
      %v2111 = vld [vmem:[%s2109 + $0x4] sm:$0x3]
      %v2112 = vld [vmem:[%s2109 + $0x8] sm:$0x3]
      %v2113 = vld [vmem:[%s2109 + $0xc] sm:$0x3]
      %s2114 = scalar_lea.vmem %s3, 192
      %v2115 = vld [vmem:[%s2114] sm:$0xf]
      %v2116 = vld [vmem:[%s2114 + $0x4] sm:$0xf]
      %v2117 = vld [vmem:[%s2114 + $0x8] sm:$0xf]
      %v2118 = vld [vmem:[%s2114 + $0xc] sm:$0xf]
      %v2119 = vld [vmem:[%s2114 + $0x10] sm:$0xf]
      %v2120 = vld [vmem:[%s2114 + $0x14] sm:$0xf]
      %v2121 = vld [vmem:[%s2114 + $0x18] sm:$0xf]
      %v2122 = vld [vmem:[%s2114 + $0x1c] sm:$0xf]
      %2124 = vst [vmem:[#allocation1] ss:$4 sm:$0xff] %v2110
      %s2126 = scalar_lea.vmem [#allocation1], 1
      %2127 = vst [vmem:[%s2126] ss:$4 sm:$0xff] %v2111
      %s2129 = scalar_lea.vmem [#allocation1], 2
      %2130 = vst [vmem:[%s2129] ss:$4 sm:$0xff] %v2112
      %s2132 = scalar_lea.vmem [#allocation1], 3
      %2133 = vst [vmem:[%s2132] ss:$4 sm:$0xff] %v2113
      %v2134 = vld.sshfl [vmem:[#allocation1] sm:$0xff pattern:$0x73625140]
      %v2143 = vunpack.c.l.b16 %v2115
      %v2144 = vunpack.c.l.b16 %v2116
      %v2145 = vunpack.c.l.b16 %v2117
      %v2146 = vunpack.c.l.b16 %v2118
      %v2147 = vunpack.c.l.b16 %v2119
      %v2148 = vunpack.c.l.b16 %v2120
      %v2149 = vunpack.c.l.b16 %v2121
      %v2150 = vunpack.c.l.b16 %v2122
      %v2151 = vpack.c.b16 %v2144, %v2143
      %v2152 = vpack.c.b16 %v2146, %v2145
      %v2153 = vpack.c.b16 %v2148, %v2147
      %v2154 = vpack.c.b16 %v2150, %v2149
      %v2159 = vsel %vm585, %v2134, 0
      %2161 = vmatpush.bf16.msra.mxu0 0
      %2162 = vmatpush.bf16.msra.mxu0 0
      %2163 = vmatpush.bf16.msra.mxu0 0
      %2164 = vmatpush.bf16.msra.mxu0 0
      %2165 = vmatpush.bf16.msra.mxu0 %v2154
      %2166 = vmatpush.bf16.msra.mxu0 %v2153
      %2167 = vmatpush.bf16.msra.mxu0 %v2152
      %2168 = vmatpush.bf16.msra.mxu0 %v2151
      %2169 = vmatmul.bf16.gmra.mxu0 %v2159
      %v2170 = vpop.f32.mrf.mxu0
      %v2171 = vadd.f32 0.0, %v2170
      %v2172 = vpop.f32.mrf.mxu0
      %v2173 = vadd.f32 0.0, %v2172
      %2174 = vdwg.mxu0
      %v2175 = vadd.f32 %v2107, %v2171
      %v2176 = vadd.f32 %v2108, %v2173
      %v2177 = vld [vmem:[%s2109] sm:$0x7]
      %v2178 = vld [vmem:[%s2109 + $0x4] sm:$0x7]
      %v2179 = vld [vmem:[%s2109 + $0x8] sm:$0x7]
      %v2180 = vld [vmem:[%s2109 + $0xc] sm:$0x7]
      %v2185 = vrot.slane %v2177, 2
      %v2186 = vrot.slane %v2178, 2
      %v2187 = vrot.slane %v2179, 2
      %v2188 = vrot.slane %v2180, 2
      %v2191 = vsel %vm347, %v2177, %v2185
      %v2192 = vsel %vm351, %v2177, %v2185
      %v2194 = vrot.slane %v2192, 2
      %v2197 = vsel %vm347, %v2178, %v2186
      %v2198 = vsel %vm351, %v2178, %v2186
      %v2200 = vrot.slane %v2198, 2
      %v2203 = vsel %vm347, %v2179, %v2187
      %v2204 = vsel %vm351, %v2179, %v2187
      %v2206 = vrot.slane %v2204, 2
      %v2209 = vsel %vm347, %v2180, %v2188
      %v2210 = vsel %vm351, %v2180, %v2188
      %v2212 = vrot.slane %v2210, 2
      %v2213 = vshrl.u32 %v2191, 16
      %v2215 = vrot.slane %v2213, 6
      %v2216 = vshll.u32 %v2191, 16
      %v2218 = vrot.slane %v2216, 7
      %v2219 = vor.u32 %v2215, %v2218
      %v2220 = vrot.slane %v2219, 2
      %v2222 = vshll.u32 %v2194, 16
      %v2224 = vrot.slane %v2222, 7
      %v2225 = vsel %vm379, %v2220, %v2224
      %v2226 = vshrl.u32 %v2197, 16
      %v2228 = vrot.slane %v2226, 6
      %v2229 = vshll.u32 %v2197, 16
      %v2231 = vrot.slane %v2229, 7
      %v2232 = vor.u32 %v2228, %v2231
      %v2233 = vrot.slane %v2232, 2
      %v2235 = vshll.u32 %v2200, 16
      %v2237 = vrot.slane %v2235, 7
      %v2238 = vsel %vm379, %v2233, %v2237
      %v2239 = vshrl.u32 %v2203, 16
      %v2241 = vrot.slane %v2239, 6
      %v2242 = vshll.u32 %v2203, 16
      %v2244 = vrot.slane %v2242, 7
      %v2245 = vor.u32 %v2241, %v2244
      %v2246 = vrot.slane %v2245, 2
      %v2248 = vshll.u32 %v2206, 16
      %v2250 = vrot.slane %v2248, 7
      %v2251 = vsel %vm379, %v2246, %v2250
      %v2252 = vshrl.u32 %v2209, 16
      %v2254 = vrot.slane %v2252, 6
      %v2255 = vshll.u32 %v2209, 16
      %v2257 = vrot.slane %v2255, 7
      %v2258 = vor.u32 %v2254, %v2257
      %v2259 = vrot.slane %v2258, 2
      %v2261 = vshll.u32 %v2212, 16
      %v2263 = vrot.slane %v2261, 7
      %v2264 = vsel %vm379, %v2259, %v2263
      %s2265 = scalar_lea.vmem %s3, 224
      %v2266 = vld [vmem:[%s2265] sm:$0xf]
      %v2267 = vld [vmem:[%s2265 + $0x4] sm:$0xf]
      %v2268 = vld [vmem:[%s2265 + $0x8] sm:$0xf]
      %v2269 = vld [vmem:[%s2265 + $0xc] sm:$0xf]
      %v2270 = vld [vmem:[%s2265 + $0x10] sm:$0xf]
      %v2271 = vld [vmem:[%s2265 + $0x14] sm:$0xf]
      %v2272 = vld [vmem:[%s2265 + $0x18] sm:$0xf]
      %v2273 = vld [vmem:[%s2265 + $0x1c] sm:$0xf]
      %2275 = vst [vmem:[#allocation1] ss:$4 sm:$0xff] %v2225
      %s2277 = scalar_lea.vmem [#allocation1], 1
      %2278 = vst [vmem:[%s2277] ss:$4 sm:$0xff] %v2238
      %s2280 = scalar_lea.vmem [#allocation1], 2
      %2281 = vst [vmem:[%s2280] ss:$4 sm:$0xff] %v2251
      %s2283 = scalar_lea.vmem [#allocation1], 3
      %2284 = vst [vmem:[%s2283] ss:$4 sm:$0xff] %v2264
      %v2285 = vld.sshfl [vmem:[#allocation1] sm:$0xff pattern:$0x73625140]
      %v2294 = vunpack.c.l.b16 %v2266
      %v2295 = vunpack.c.l.b16 %v2267
      %v2296 = vunpack.c.l.b16 %v2268
      %v2297 = vunpack.c.l.b16 %v2269
      %v2298 = vunpack.c.l.b16 %v2270
      %v2299 = vunpack.c.l.b16 %v2271
      %v2300 = vunpack.c.l.b16 %v2272
      %v2301 = vunpack.c.l.b16 %v2273
      %v2302 = vpack.c.b16 %v2295, %v2294
      %v2303 = vpack.c.b16 %v2297, %v2296
      %v2304 = vpack.c.b16 %v2299, %v2298
      %v2305 = vpack.c.b16 %v2301, %v2300
      %v2310 = vsel %vm585, %v2285, 0
      %2312 = vmatpush.bf16.msra.mxu0 0
      %2313 = vmatpush.bf16.msra.mxu0 0
      %2314 = vmatpush.bf16.msra.mxu0 0
      %2315 = vmatpush.bf16.msra.mxu0 0
      %2316 = vmatpush.bf16.msra.mxu0 %v2305
      %2317 = vmatpush.bf16.msra.mxu0 %v2304
      %2318 = vmatpush.bf16.msra.mxu0 %v2303
      %2319 = vmatpush.bf16.msra.mxu0 %v2302
      %2320 = vmatmul.bf16.gmra.mxu0 %v2310
      %v2321 = vpop.f32.mrf.mxu0
      %v2322 = vadd.f32 0.0, %v2321
      %v2323 = vpop.f32.mrf.mxu0
      %v2324 = vadd.f32 0.0, %v2323
      %2325 = vdwg.mxu0
      %v2326 = vadd.f32 %v2175, %v2322
      %v2327 = vadd.f32 %v2176, %v2324
      %v2328 = vld [vmem:[%s2109] sm:$0x6]
      %v2329 = vld [vmem:[%s2109 + $0x4] sm:$0x6]
      %v2330 = vld [vmem:[%s2109 + $0x8] sm:$0x6]
      %v2331 = vld [vmem:[%s2109 + $0xc] sm:$0x6]
      %v2336 = vrot.slane %v2328, 2
      %v2337 = vrot.slane %v2329, 2
      %v2338 = vrot.slane %v2330, 2
      %v2339 = vrot.slane %v2331, 2
      %v2342 = vsel %vm347, %v2328, %v2336
      %v2344 = vsel %vm351, %v2328, %v2336
      %v2346 = vrot.slane %v2344, 2
      %v2349 = vsel %vm347, %v2329, %v2337
      %v2351 = vsel %vm351, %v2329, %v2337
      %v2353 = vrot.slane %v2351, 2
      %v2356 = vsel %vm347, %v2330, %v2338
      %v2358 = vsel %vm351, %v2330, %v2338
      %v2360 = vrot.slane %v2358, 2
      %v2363 = vsel %vm347, %v2331, %v2339
      %v2365 = vsel %vm351, %v2331, %v2339
      %v2367 = vrot.slane %v2365, 2
      %v2368 = vrot.slane %v2342, 7
      %v2369 = vrot.slane %v2368, 2
      %v2370 = vrot.slane %v2346, 7
      %v2371 = vsel %vm700, %v2369, %v2370
      %v2372 = vrot.slane %v2349, 7
      %v2373 = vrot.slane %v2372, 2
      %v2374 = vrot.slane %v2353, 7
      %v2375 = vsel %vm700, %v2373, %v2374
      %v2376 = vrot.slane %v2356, 7
      %v2377 = vrot.slane %v2376, 2
      %v2378 = vrot.slane %v2360, 7
      %v2379 = vsel %vm700, %v2377, %v2378
      %v2380 = vrot.slane %v2363, 7
      %v2381 = vrot.slane %v2380, 2
      %v2382 = vrot.slane %v2367, 7
      %v2383 = vsel %vm700, %v2381, %v2382
      %s2384 = scalar_lea.vmem %s3, 256
      %v2385 = vld [vmem:[%s2384] sm:$0xf]
      %v2386 = vld [vmem:[%s2384 + $0x4] sm:$0xf]
      %v2387 = vld [vmem:[%s2384 + $0x8] sm:$0xf]
      %v2388 = vld [vmem:[%s2384 + $0xc] sm:$0xf]
      %v2389 = vld [vmem:[%s2384 + $0x10] sm:$0xf]
      %v2390 = vld [vmem:[%s2384 + $0x14] sm:$0xf]
      %v2391 = vld [vmem:[%s2384 + $0x18] sm:$0xf]
      %v2392 = vld [vmem:[%s2384 + $0x1c] sm:$0xf]
      %2394 = vst [vmem:[#allocation1] ss:$4 sm:$0xff] %v2371
      %s2396 = scalar_lea.vmem [#allocation1], 1
      %2397 = vst [vmem:[%s2396] ss:$4 sm:$0xff] %v2375
      %s2399 = scalar_lea.vmem [#allocation1], 2
      %2400 = vst [vmem:[%s2399] ss:$4 sm:$0xff] %v2379
      %s2402 = scalar_lea.vmem [#allocation1], 3
      %2403 = vst [vmem:[%s2402] ss:$4 sm:$0xff] %v2383
      %v2404 = vld.sshfl [vmem:[#allocation1] sm:$0xff pattern:$0x73625140]
      %v2413 = vunpack.c.l.b16 %v2385
      %v2414 = vunpack.c.l.b16 %v2386
      %v2415 = vunpack.c.l.b16 %v2387
      %v2416 = vunpack.c.l.b16 %v2388
      %v2417 = vunpack.c.l.b16 %v2389
      %v2418 = vunpack.c.l.b16 %v2390
      %v2419 = vunpack.c.l.b16 %v2391
      %v2420 = vunpack.c.l.b16 %v2392
      %v2421 = vpack.c.b16 %v2414, %v2413
      %v2422 = vpack.c.b16 %v2416, %v2415
      %v2423 = vpack.c.b16 %v2418, %v2417
      %v2424 = vpack.c.b16 %v2420, %v2419
      %v2429 = vsel %vm585, %v2404, 0
      %2431 = vmatpush.bf16.msra.mxu0 0
      %2432 = vmatpush.bf16.msra.mxu0 0
      %2433 = vmatpush.bf16.msra.mxu0 0
      %2434 = vmatpush.bf16.msra.mxu0 0
      %2435 = vmatpush.bf16.msra.mxu0 %v2424
      %2436 = vmatpush.bf16.msra.mxu0 %v2423
      %2437 = vmatpush.bf16.msra.mxu0 %v2422
      %2438 = vmatpush.bf16.msra.mxu0 %v2421
      %2439 = vmatmul.bf16.gmra.mxu0 %v2429
      %v2440 = vpop.f32.mrf.mxu0
      %v2441 = vadd.f32 0.0, %v2440
      %v2442 = vpop.f32.mrf.mxu0
      %v2443 = vadd.f32 0.0, %v2442
      %2444 = vdwg.mxu0
      %v2445 = vadd.f32 %v2326, %v2441
      %v2446 = vadd.f32 %v2327, %v2443
      %v2447 = vld [vmem:[%s4] sm:$0x1]
      %v2449 = vperm.slane %v2447, 0
      %v2451 = vadd.f32 %v2445, %v2449
      %v2452 = vadd.f32 %v2446, %v2449
      %2457 = vst [vmem:[#allocation1] ss:$2 sm:$0xff] %v436
      %s2458 = scalar_lea.vmem [#allocation1], 1
      %2459 = vst [vmem:[%s2458] ss:$2 sm:$0xff] %v437
      %s2460 = scalar_lea.vmem [#allocation1], 16
      %2461 = vst [vmem:[%s2460] ss:$2 sm:$0xff] %v438
      %s2462 = scalar_lea.vmem [#allocation1], 17
      %2463 = vst [vmem:[%s2462] ss:$2 sm:$0xff] %v439
      %v2464 = vld.sshfl [vmem:[#allocation1] sm:$0xff pattern:$0x75316420]
      %v2465 = vld.sshfl [vmem:[#allocation1 + $0x10] sm:$0xff pattern:$0x75316420]
      %v2468 = vadd.f32 %v2451, %v2464
      %v2469 = vadd.f32 %v2452, %v2465
      %v2470 = vmax.f32 %v2468, 0.0
      %v2471 = vmax.f32 %v2469, 0.0
      %2472 = vst.msk [vmem:[#allocation3] sm:$0x7] %vm1375, 0
      %2473 = vst.msk [vmem:[#allocation3 + $0x4] sm:$0x7] %vm1375, 0
      %2474 = vst.msk [vmem:[#allocation3 + $0x8] sm:$0x7] %vm1375, 0
      %2475 = vst.msk [vmem:[#allocation3 + $0xc] sm:$0x7] %vm1375, 0
      %2476 = vst.msk [vmem:[#allocation3 + $0x10] sm:$0x7] %vm1375, 0
      %2477 = vst.msk [vmem:[#allocation3 + $0x14] sm:$0x7] %vm1375, 0
      %v2480 = vrot.slane %v2470, 4
      %v2481 = vrot.slane %v2471, 4
      %v2484 = vpack.c.bf16 %v2470, %v2470
      %v2485 = vpack.c.bf16 %v2480, %v2480
      %v2486 = vpack.c.bf16 %v2471, %v2471
      %v2487 = vpack.c.bf16 %v2481, %v2481
      %v2489 = vshrl.u32 %v2484, 16
      %v2491 = vrot.slane %v2489, 7
      %v2492 = vshll.u32 %v2484, 16
      %v2494 = vor.u32 %v2491, %v2492
      %v2496 = vshrl.u32 %v2485, 16
      %v2498 = vrot.slane %v2496, 7
      %v2499 = vshll.u32 %v2485, 16
      %v2501 = vor.u32 %v2498, %v2499
      %v2503 = vshrl.u32 %v2486, 16
      %v2505 = vrot.slane %v2503, 7
      %v2506 = vshll.u32 %v2486, 16
      %v2508 = vor.u32 %v2505, %v2506
      %v2510 = vshrl.u32 %v2487, 16
      %v2512 = vrot.slane %v2510, 7
      %v2513 = vshll.u32 %v2487, 16
      %v2515 = vor.u32 %v2512, %v2513
      %s2520 = scalar_lea.vmem [#allocation3], 4
      %v2521 = vld [vmem:[%s2520] sm:$0x7]
      %v2522 = vsel %vm1427, %v2494, %v2521
      %2523 = vst [vmem:[%s2520] sm:$0x7] %v2522
      %v2524 = vld [vmem:[%s2520 + $0x4] sm:$0x7]
      %v2525 = vsel %vm1427, %v2501, %v2524
      %2526 = vst [vmem:[%s2520 + $0x4] sm:$0x7] %v2525
      %v2527 = vld [vmem:[%s2520 + $0x8] sm:$0x7]
      %v2528 = vsel %vm1427, %v2508, %v2527
      %2529 = vst [vmem:[%s2520 + $0x8] sm:$0x7] %v2528
      %v2530 = vld [vmem:[%s2520 + $0xc] sm:$0x7]
      %v2531 = vsel %vm1427, %v2515, %v2530
      %2532 = vst [vmem:[%s2520 + $0xc] sm:$0x7] %v2531
      %v2533 = vld [vmem:[%s2520] sm:$0x7]
      %v2534 = vld [vmem:[%s2520 + $0x4] sm:$0x7]
      %v2535 = vld [vmem:[%s2520 + $0x8] sm:$0x7]
      %v2536 = vld [vmem:[%s2520 + $0xc] sm:$0x7]
      %v2541 = vrot.slane %v2533, 2
      %v2542 = vrot.slane %v2534, 2
      %v2543 = vrot.slane %v2535, 2
      %v2544 = vrot.slane %v2536, 2
      %v2547 = vsel %vm347, %v2533, %v2541
      %v2548 = vsel %vm351, %v2533, %v2541
      %v2550 = vrot.slane %v2548, 2
      %v2553 = vsel %vm347, %v2534, %v2542
      %v2554 = vsel %vm351, %v2534, %v2542
      %v2556 = vrot.slane %v2554, 2
      %v2559 = vsel %vm347, %v2535, %v2543
      %v2560 = vsel %vm351, %v2535, %v2543
      %v2562 = vrot.slane %v2560, 2
      %v2565 = vsel %vm347, %v2536, %v2544
      %v2566 = vsel %vm351, %v2536, %v2544
      %v2568 = vrot.slane %v2566, 2
      %v2569 = vshrl.u32 %v2547, 16
      %v2571 = vrot.slane %v2569, 6
      %v2572 = vshll.u32 %v2547, 16
      %v2574 = vrot.slane %v2572, 7
      %v2575 = vor.u32 %v2571, %v2574
      %v2576 = vrot.slane %v2575, 2
      %v2578 = vshll.u32 %v2550, 16
      %v2580 = vrot.slane %v2578, 7
      %v2581 = vsel %vm379, %v2576, %v2580
      %v2582 = vshrl.u32 %v2553, 16
      %v2584 = vrot.slane %v2582, 6
      %v2585 = vshll.u32 %v2553, 16
      %v2587 = vrot.slane %v2585, 7
      %v2588 = vor.u32 %v2584, %v2587
      %v2589 = vrot.slane %v2588, 2
      %v2591 = vshll.u32 %v2556, 16
      %v2593 = vrot.slane %v2591, 7
      %v2594 = vsel %vm379, %v2589, %v2593
      %v2595 = vshrl.u32 %v2559, 16
      %v2597 = vrot.slane %v2595, 6
      %v2598 = vshll.u32 %v2559, 16
      %v2600 = vrot.slane %v2598, 7
      %v2601 = vor.u32 %v2597, %v2600
      %v2602 = vrot.slane %v2601, 2
      %v2604 = vshll.u32 %v2562, 16
      %v2606 = vrot.slane %v2604, 7
      %v2607 = vsel %vm379, %v2602, %v2606
      %v2608 = vshrl.u32 %v2565, 16
      %v2610 = vrot.slane %v2608, 6
      %v2611 = vshll.u32 %v2565, 16
      %v2613 = vrot.slane %v2611, 7
      %v2614 = vor.u32 %v2610, %v2613
      %v2615 = vrot.slane %v2614, 2
      %v2617 = vshll.u32 %v2568, 16
      %v2619 = vrot.slane %v2617, 7
      %v2620 = vsel %vm379, %v2615, %v2619
      %v2625 = vunpack.c.l.bf16 %v2581
      %v2626 = vunpack.c.l.bf16 %v2594
      %v2627 = vunpack.c.l.bf16 %v2607
      %v2628 = vunpack.c.l.bf16 %v2620
      %v2629 = vld [vmem:[#allocation3] sm:$0x3]
      %v2630 = vld [vmem:[#allocation3 + $0x4] sm:$0x3]
      %v2631 = vld [vmem:[#allocation3 + $0x8] sm:$0x3]
      %v2632 = vld [vmem:[#allocation3 + $0xc] sm:$0x3]
      %v2633 = vld [vmem:[%s5] sm:$0xf]
      %v2634 = vld [vmem:[%s5 + $0x4] sm:$0xf]
      %v2635 = vld [vmem:[%s5 + $0x8] sm:$0xf]
      %v2636 = vld [vmem:[%s5 + $0xc] sm:$0xf]
      %v2637 = vld [vmem:[%s5 + $0x10] sm:$0xf]
      %v2638 = vld [vmem:[%s5 + $0x14] sm:$0xf]
      %v2639 = vld [vmem:[%s5 + $0x18] sm:$0xf]
      %v2640 = vld [vmem:[%s5 + $0x1c] sm:$0xf]
      %v2641 = vld [vmem:[#allocation3] sm:$0x7]
      %v2642 = vld [vmem:[#allocation3 + $0x4] sm:$0x7]
      %v2643 = vld [vmem:[#allocation3 + $0x8] sm:$0x7]
      %v2644 = vld [vmem:[#allocation3 + $0xc] sm:$0x7]
      %v2649 = vrot.slane %v2641, 2
      %v2650 = vrot.slane %v2642, 2
      %v2651 = vrot.slane %v2643, 2
      %v2652 = vrot.slane %v2644, 2
      %v2655 = vsel %vm347, %v2641, %v2649
      %v2656 = vsel %vm351, %v2641, %v2649
      %v2658 = vrot.slane %v2656, 2
      %v2661 = vsel %vm347, %v2642, %v2650
      %v2662 = vsel %vm351, %v2642, %v2650
      %v2664 = vrot.slane %v2662, 2
      %v2667 = vsel %vm347, %v2643, %v2651
      %v2668 = vsel %vm351, %v2643, %v2651
      %v2670 = vrot.slane %v2668, 2
      %v2673 = vsel %vm347, %v2644, %v2652
      %v2674 = vsel %vm351, %v2644, %v2652
      %v2676 = vrot.slane %v2674, 2
      %v2677 = vshrl.u32 %v2655, 16
      %v2679 = vrot.slane %v2677, 6
      %v2680 = vshll.u32 %v2655, 16
      %v2682 = vrot.slane %v2680, 7
      %v2683 = vor.u32 %v2679, %v2682
      %v2684 = vrot.slane %v2683, 2
      %v2686 = vshll.u32 %v2658, 16
      %v2688 = vrot.slane %v2686, 7
      %v2689 = vsel %vm379, %v2684, %v2688
      %v2690 = vshrl.u32 %v2661, 16
      %v2692 = vrot.slane %v2690, 6
      %v2693 = vshll.u32 %v2661, 16
      %v2695 = vrot.slane %v2693, 7
      %v2696 = vor.u32 %v2692, %v2695
      %v2697 = vrot.slane %v2696, 2
      %v2699 = vshll.u32 %v2664, 16
      %v2701 = vrot.slane %v2699, 7
      %v2702 = vsel %vm379, %v2697, %v2701
      %v2703 = vshrl.u32 %v2667, 16
      %v2705 = vrot.slane %v2703, 6
      %v2706 = vshll.u32 %v2667, 16
      %v2708 = vrot.slane %v2706, 7
      %v2709 = vor.u32 %v2705, %v2708
      %v2710 = vrot.slane %v2709, 2
      %v2712 = vshll.u32 %v2670, 16
      %v2714 = vrot.slane %v2712, 7
      %v2715 = vsel %vm379, %v2710, %v2714
      %v2716 = vshrl.u32 %v2673, 16
      %v2718 = vrot.slane %v2716, 6
      %v2719 = vshll.u32 %v2673, 16
      %v2721 = vrot.slane %v2719, 7
      %v2722 = vor.u32 %v2718, %v2721
      %v2723 = vrot.slane %v2722, 2
      %v2725 = vshll.u32 %v2676, 16
      %v2727 = vrot.slane %v2725, 7
      %v2728 = vsel %vm379, %v2723, %v2727
      %s2729 = scalar_lea.vmem %s5, 32
      %v2730 = vld [vmem:[%s2729] sm:$0xf]
      %v2731 = vld [vmem:[%s2729 + $0x4] sm:$0xf]
      %v2732 = vld [vmem:[%s2729 + $0x8] sm:$0xf]
      %v2733 = vld [vmem:[%s2729 + $0xc] sm:$0xf]
      %v2734 = vld [vmem:[%s2729 + $0x10] sm:$0xf]
      %v2735 = vld [vmem:[%s2729 + $0x14] sm:$0xf]
      %v2736 = vld [vmem:[%s2729 + $0x18] sm:$0xf]
      %v2737 = vld [vmem:[%s2729 + $0x1c] sm:$0xf]
      %2739 = vst [vmem:[#allocation1] ss:$4 sm:$0xff] %v2689
      %s2741 = scalar_lea.vmem [#allocation1], 1
      %2742 = vst [vmem:[%s2741] ss:$4 sm:$0xff] %v2702
      %s2744 = scalar_lea.vmem [#allocation1], 2
      %2745 = vst [vmem:[%s2744] ss:$4 sm:$0xff] %v2715
      %s2747 = scalar_lea.vmem [#allocation1], 3
      %2748 = vst [vmem:[%s2747] ss:$4 sm:$0xff] %v2728
      %v2749 = vld.sshfl [vmem:[#allocation1] sm:$0xff pattern:$0x73625140]
      %v2758 = vunpack.c.l.b16 %v2730
      %v2759 = vunpack.c.l.b16 %v2731
      %v2760 = vunpack.c.l.b16 %v2732
      %v2761 = vunpack.c.l.b16 %v2733
      %v2762 = vunpack.c.l.b16 %v2734
      %v2763 = vunpack.c.l.b16 %v2735
      %v2764 = vunpack.c.l.b16 %v2736
      %v2765 = vunpack.c.l.b16 %v2737
      %v2766 = vpack.c.b16 %v2759, %v2758
      %v2767 = vpack.c.b16 %v2761, %v2760
      %v2768 = vpack.c.b16 %v2763, %v2762
      %v2769 = vpack.c.b16 %v2765, %v2764
      %v2774 = vsel %vm585, %v2749, 0
      %2776 = vmatpush.bf16.msra.mxu0 0
      %2777 = vmatpush.bf16.msra.mxu0 0
      %2778 = vmatpush.bf16.msra.mxu0 0
      %2779 = vmatpush.bf16.msra.mxu0 0
      %2780 = vmatpush.bf16.msra.mxu0 %v2769
      %2781 = vmatpush.bf16.msra.mxu0 %v2768
      %2782 = vmatpush.bf16.msra.mxu0 %v2767
      %2783 = vmatpush.bf16.msra.mxu0 %v2766
      %2784 = vmatmul.bf16.gmra.mxu0 %v2774
      %v2785 = vpop.f32.mrf.mxu0
      %v2786 = vadd.f32 0.0, %v2785
      %v2787 = vpop.f32.mrf.mxu0
      %v2788 = vadd.f32 0.0, %v2787
      %2789 = vdwg.mxu0
      %2791 = vst [vmem:[#allocation1] ss:$4 sm:$0xff] %v2629
      %s2793 = scalar_lea.vmem [#allocation1], 1
      %2794 = vst [vmem:[%s2793] ss:$4 sm:$0xff] %v2630
      %s2796 = scalar_lea.vmem [#allocation1], 2
      %2797 = vst [vmem:[%s2796] ss:$4 sm:$0xff] %v2631
      %s2799 = scalar_lea.vmem [#allocation1], 3
      %2800 = vst [vmem:[%s2799] ss:$4 sm:$0xff] %v2632
      %v2801 = vld.sshfl [vmem:[#allocation1] sm:$0xff pattern:$0x73625140]
      %v2810 = vunpack.c.l.b16 %v2633
      %v2811 = vunpack.c.l.b16 %v2634
      %v2812 = vunpack.c.l.b16 %v2635
      %v2813 = vunpack.c.l.b16 %v2636
      %v2814 = vunpack.c.l.b16 %v2637
      %v2815 = vunpack.c.l.b16 %v2638
      %v2816 = vunpack.c.l.b16 %v2639
      %v2817 = vunpack.c.l.b16 %v2640
      %v2818 = vpack.c.b16 %v2811, %v2810
      %v2819 = vpack.c.b16 %v2813, %v2812
      %v2820 = vpack.c.b16 %v2815, %v2814
      %v2821 = vpack.c.b16 %v2817, %v2816
      %v2826 = vsel %vm585, %v2801, 0
      %2828 = vmatpush.bf16.msra.mxu0 0
      %2829 = vmatpush.bf16.msra.mxu0 0
      %2830 = vmatpush.bf16.msra.mxu0 0
      %2831 = vmatpush.bf16.msra.mxu0 0
      %2832 = vmatpush.bf16.msra.mxu0 %v2821
      %2833 = vmatpush.bf16.msra.mxu0 %v2820
      %2834 = vmatpush.bf16.msra.mxu0 %v2819
      %2835 = vmatpush.bf16.msra.mxu0 %v2818
      %2836 = vmatmul.bf16.gmra.mxu0 %v2826
      %v2837 = vpop.f32.mrf.mxu0
      %v2838 = vadd.f32 %v2786, %v2837
      %v2839 = vpop.f32.mrf.mxu0
      %v2840 = vadd.f32 %v2788, %v2839
      %2841 = vdwg.mxu0
      %v2842 = vld [vmem:[#allocation3] sm:$0x6]
      %v2843 = vld [vmem:[#allocation3 + $0x4] sm:$0x6]
      %v2844 = vld [vmem:[#allocation3 + $0x8] sm:$0x6]
      %v2845 = vld [vmem:[#allocation3 + $0xc] sm:$0x6]
      %v2850 = vrot.slane %v2842, 2
      %v2851 = vrot.slane %v2843, 2
      %v2852 = vrot.slane %v2844, 2
      %v2853 = vrot.slane %v2845, 2
      %v2856 = vsel %vm347, %v2842, %v2850
      %v2858 = vsel %vm351, %v2842, %v2850
      %v2860 = vrot.slane %v2858, 2
      %v2863 = vsel %vm347, %v2843, %v2851
      %v2865 = vsel %vm351, %v2843, %v2851
      %v2867 = vrot.slane %v2865, 2
      %v2870 = vsel %vm347, %v2844, %v2852
      %v2872 = vsel %vm351, %v2844, %v2852
      %v2874 = vrot.slane %v2872, 2
      %v2877 = vsel %vm347, %v2845, %v2853
      %v2879 = vsel %vm351, %v2845, %v2853
      %v2881 = vrot.slane %v2879, 2
      %v2882 = vrot.slane %v2856, 7
      %v2883 = vrot.slane %v2882, 2
      %v2884 = vrot.slane %v2860, 7
      %v2885 = vsel %vm700, %v2883, %v2884
      %v2886 = vrot.slane %v2863, 7
      %v2887 = vrot.slane %v2886, 2
      %v2888 = vrot.slane %v2867, 7
      %v2889 = vsel %vm700, %v2887, %v2888
      %v2890 = vrot.slane %v2870, 7
      %v2891 = vrot.slane %v2890, 2
      %v2892 = vrot.slane %v2874, 7
      %v2893 = vsel %vm700, %v2891, %v2892
      %v2894 = vrot.slane %v2877, 7
      %v2895 = vrot.slane %v2894, 2
      %v2896 = vrot.slane %v2881, 7
      %v2897 = vsel %vm700, %v2895, %v2896
      %s2898 = scalar_lea.vmem %s5, 64
      %v2899 = vld [vmem:[%s2898] sm:$0xf]
      %v2900 = vld [vmem:[%s2898 + $0x4] sm:$0xf]
      %v2901 = vld [vmem:[%s2898 + $0x8] sm:$0xf]
      %v2902 = vld [vmem:[%s2898 + $0xc] sm:$0xf]
      %v2903 = vld [vmem:[%s2898 + $0x10] sm:$0xf]
      %v2904 = vld [vmem:[%s2898 + $0x14] sm:$0xf]
      %v2905 = vld [vmem:[%s2898 + $0x18] sm:$0xf]
      %v2906 = vld [vmem:[%s2898 + $0x1c] sm:$0xf]
      %2908 = vst [vmem:[#allocation1] ss:$4 sm:$0xff] %v2885
      %s2910 = scalar_lea.vmem [#allocation1], 1
      %2911 = vst [vmem:[%s2910] ss:$4 sm:$0xff] %v2889
      %s2913 = scalar_lea.vmem [#allocation1], 2
      %2914 = vst [vmem:[%s2913] ss:$4 sm:$0xff] %v2893
      %s2916 = scalar_lea.vmem [#allocation1], 3
      %2917 = vst [vmem:[%s2916] ss:$4 sm:$0xff] %v2897
      %v2918 = vld.sshfl [vmem:[#allocation1] sm:$0xff pattern:$0x73625140]
      %v2927 = vunpack.c.l.b16 %v2899
      %v2928 = vunpack.c.l.b16 %v2900
      %v2929 = vunpack.c.l.b16 %v2901
      %v2930 = vunpack.c.l.b16 %v2902
      %v2931 = vunpack.c.l.b16 %v2903
      %v2932 = vunpack.c.l.b16 %v2904
      %v2933 = vunpack.c.l.b16 %v2905
      %v2934 = vunpack.c.l.b16 %v2906
      %v2935 = vpack.c.b16 %v2928, %v2927
      %v2936 = vpack.c.b16 %v2930, %v2929
      %v2937 = vpack.c.b16 %v2932, %v2931
      %v2938 = vpack.c.b16 %v2934, %v2933
      %v2943 = vsel %vm585, %v2918, 0
      %2945 = vmatpush.bf16.msra.mxu0 0
      %2946 = vmatpush.bf16.msra.mxu0 0
      %2947 = vmatpush.bf16.msra.mxu0 0
      %2948 = vmatpush.bf16.msra.mxu0 0
      %2949 = vmatpush.bf16.msra.mxu0 %v2938
      %2950 = vmatpush.bf16.msra.mxu0 %v2937
      %2951 = vmatpush.bf16.msra.mxu0 %v2936
      %2952 = vmatpush.bf16.msra.mxu0 %v2935
      %2953 = vmatmul.bf16.gmra.mxu0 %v2943
      %v2954 = vpop.f32.mrf.mxu0
      %v2955 = vadd.f32 0.0, %v2954
      %v2956 = vpop.f32.mrf.mxu0
      %v2957 = vadd.f32 0.0, %v2956
      %2958 = vdwg.mxu0
      %v2959 = vadd.f32 %v2838, %v2955
      %v2960 = vadd.f32 %v2840, %v2957
      %v2961 = vld [vmem:[%s2520] sm:$0x3]
      %v2962 = vld [vmem:[%s2520 + $0x4] sm:$0x3]
      %v2963 = vld [vmem:[%s2520 + $0x8] sm:$0x3]
      %v2964 = vld [vmem:[%s2520 + $0xc] sm:$0x3]
      %s2965 = scalar_lea.vmem %s5, 96
      %v2966 = vld [vmem:[%s2965] sm:$0xf]
      %v2967 = vld [vmem:[%s2965 + $0x4] sm:$0xf]
      %v2968 = vld [vmem:[%s2965 + $0x8] sm:$0xf]
      %v2969 = vld [vmem:[%s2965 + $0xc] sm:$0xf]
      %v2970 = vld [vmem:[%s2965 + $0x10] sm:$0xf]
      %v2971 = vld [vmem:[%s2965 + $0x14] sm:$0xf]
      %v2972 = vld [vmem:[%s2965 + $0x18] sm:$0xf]
      %v2973 = vld [vmem:[%s2965 + $0x1c] sm:$0xf]
      %2975 = vst [vmem:[#allocation1] ss:$4 sm:$0xff] %v2961
      %s2977 = scalar_lea.vmem [#allocation1], 1
      %2978 = vst [vmem:[%s2977] ss:$4 sm:$0xff] %v2962
      %s2980 = scalar_lea.vmem [#allocation1], 2
      %2981 = vst [vmem:[%s2980] ss:$4 sm:$0xff] %v2963
      %s2983 = scalar_lea.vmem [#allocation1], 3
      %2984 = vst [vmem:[%s2983] ss:$4 sm:$0xff] %v2964
      %v2985 = vld.sshfl [vmem:[#allocation1] sm:$0xff pattern:$0x73625140]
      %v2994 = vunpack.c.l.b16 %v2966
      %v2995 = vunpack.c.l.b16 %v2967
      %v2996 = vunpack.c.l.b16 %v2968
      %v2997 = vunpack.c.l.b16 %v2969
      %v2998 = vunpack.c.l.b16 %v2970
      %v2999 = vunpack.c.l.b16 %v2971
      %v3000 = vunpack.c.l.b16 %v2972
      %v3001 = vunpack.c.l.b16 %v2973
      %v3002 = vpack.c.b16 %v2995, %v2994
      %v3003 = vpack.c.b16 %v2997, %v2996
      %v3004 = vpack.c.b16 %v2999, %v2998
      %v3005 = vpack.c.b16 %v3001, %v3000
      %v3010 = vsel %vm585, %v2985, 0
      %3012 = vmatpush.bf16.msra.mxu0 0
      %3013 = vmatpush.bf16.msra.mxu0 0
      %3014 = vmatpush.bf16.msra.mxu0 0
      %3015 = vmatpush.bf16.msra.mxu0 0
      %3016 = vmatpush.bf16.msra.mxu0 %v3005
      %3017 = vmatpush.bf16.msra.mxu0 %v3004
      %3018 = vmatpush.bf16.msra.mxu0 %v3003
      %3019 = vmatpush.bf16.msra.mxu0 %v3002
      %3020 = vmatmul.bf16.gmra.mxu0 %v3010
      %v3021 = vpop.f32.mrf.mxu0
      %v3022 = vadd.f32 0.0, %v3021
      %v3023 = vpop.f32.mrf.mxu0
      %v3024 = vadd.f32 0.0, %v3023
      %3025 = vdwg.mxu0
      %v3026 = vadd.f32 %v2959, %v3022
      %v3027 = vadd.f32 %v2960, %v3024
      %s3028 = scalar_lea.vmem %s5, 128
      %v3029 = vld [vmem:[%s3028] sm:$0xf]
      %v3030 = vld [vmem:[%s3028 + $0x4] sm:$0xf]
      %v3031 = vld [vmem:[%s3028 + $0x8] sm:$0xf]
      %v3032 = vld [vmem:[%s3028 + $0xc] sm:$0xf]
      %v3033 = vld [vmem:[%s3028 + $0x10] sm:$0xf]
      %v3034 = vld [vmem:[%s3028 + $0x14] sm:$0xf]
      %v3035 = vld [vmem:[%s3028 + $0x18] sm:$0xf]
      %v3036 = vld [vmem:[%s3028 + $0x1c] sm:$0xf]
      %3038 = vst [vmem:[#allocation1] ss:$4 sm:$0xff] %v2581
      %s3040 = scalar_lea.vmem [#allocation1], 1
      %3041 = vst [vmem:[%s3040] ss:$4 sm:$0xff] %v2594
      %s3043 = scalar_lea.vmem [#allocation1], 2
      %3044 = vst [vmem:[%s3043] ss:$4 sm:$0xff] %v2607
      %s3046 = scalar_lea.vmem [#allocation1], 3
      %3047 = vst [vmem:[%s3046] ss:$4 sm:$0xff] %v2620
      %v3048 = vld.sshfl [vmem:[#allocation1] sm:$0xff pattern:$0x73625140]
      %v3057 = vunpack.c.l.b16 %v3029
      %v3058 = vunpack.c.l.b16 %v3030
      %v3059 = vunpack.c.l.b16 %v3031
      %v3060 = vunpack.c.l.b16 %v3032
      %v3061 = vunpack.c.l.b16 %v3033
      %v3062 = vunpack.c.l.b16 %v3034
      %v3063 = vunpack.c.l.b16 %v3035
      %v3064 = vunpack.c.l.b16 %v3036
      %v3065 = vpack.c.b16 %v3058, %v3057
      %v3066 = vpack.c.b16 %v3060, %v3059
      %v3067 = vpack.c.b16 %v3062, %v3061
      %v3068 = vpack.c.b16 %v3064, %v3063
      %v3073 = vsel %vm585, %v3048, 0
      %3075 = vmatpush.bf16.msra.mxu0 0
      %3076 = vmatpush.bf16.msra.mxu0 0
      %3077 = vmatpush.bf16.msra.mxu0 0
      %3078 = vmatpush.bf16.msra.mxu0 0
      %3079 = vmatpush.bf16.msra.mxu0 %v3068
      %3080 = vmatpush.bf16.msra.mxu0 %v3067
      %3081 = vmatpush.bf16.msra.mxu0 %v3066
      %3082 = vmatpush.bf16.msra.mxu0 %v3065
      %3083 = vmatmul.bf16.gmra.mxu0 %v3073
      %v3084 = vpop.f32.mrf.mxu0
      %v3085 = vadd.f32 0.0, %v3084
      %v3086 = vpop.f32.mrf.mxu0
      %v3087 = vadd.f32 0.0, %v3086
      %3088 = vdwg.mxu0
      %v3089 = vadd.f32 %v3026, %v3085
      %v3090 = vadd.f32 %v3027, %v3087
      %v3091 = vld [vmem:[%s2520] sm:$0x6]
      %v3092 = vld [vmem:[%s2520 + $0x4] sm:$0x6]
      %v3093 = vld [vmem:[%s2520 + $0x8] sm:$0x6]
      %v3094 = vld [vmem:[%s2520 + $0xc] sm:$0x6]
      %v3099 = vrot.slane %v3091, 2
      %v3100 = vrot.slane %v3092, 2
      %v3101 = vrot.slane %v3093, 2
      %v3102 = vrot.slane %v3094, 2
      %v3105 = vsel %vm347, %v3091, %v3099
      %v3107 = vsel %vm351, %v3091, %v3099
      %v3109 = vrot.slane %v3107, 2
      %v3112 = vsel %vm347, %v3092, %v3100
      %v3114 = vsel %vm351, %v3092, %v3100
      %v3116 = vrot.slane %v3114, 2
      %v3119 = vsel %vm347, %v3093, %v3101
      %v3121 = vsel %vm351, %v3093, %v3101
      %v3123 = vrot.slane %v3121, 2
      %v3126 = vsel %vm347, %v3094, %v3102
      %v3128 = vsel %vm351, %v3094, %v3102
      %v3130 = vrot.slane %v3128, 2
      %v3131 = vrot.slane %v3105, 7
      %v3132 = vrot.slane %v3131, 2
      %v3133 = vrot.slane %v3109, 7
      %v3134 = vsel %vm700, %v3132, %v3133
      %v3135 = vrot.slane %v3112, 7
      %v3136 = vrot.slane %v3135, 2
      %v3137 = vrot.slane %v3116, 7
      %v3138 = vsel %vm700, %v3136, %v3137
      %v3139 = vrot.slane %v3119, 7
      %v3140 = vrot.slane %v3139, 2
      %v3141 = vrot.slane %v3123, 7
      %v3142 = vsel %vm700, %v3140, %v3141
      %v3143 = vrot.slane %v3126, 7
      %v3144 = vrot.slane %v3143, 2
      %v3145 = vrot.slane %v3130, 7
      %v3146 = vsel %vm700, %v3144, %v3145
      %s3147 = scalar_lea.vmem %s5, 160
      %v3148 = vld [vmem:[%s3147] sm:$0xf]
      %v3149 = vld [vmem:[%s3147 + $0x4] sm:$0xf]
      %v3150 = vld [vmem:[%s3147 + $0x8] sm:$0xf]
      %v3151 = vld [vmem:[%s3147 + $0xc] sm:$0xf]
      %v3152 = vld [vmem:[%s3147 + $0x10] sm:$0xf]
      %v3153 = vld [vmem:[%s3147 + $0x14] sm:$0xf]
      %v3154 = vld [vmem:[%s3147 + $0x18] sm:$0xf]
      %v3155 = vld [vmem:[%s3147 + $0x1c] sm:$0xf]
      %3157 = vst [vmem:[#allocation1] ss:$4 sm:$0xff] %v3134
      %s3159 = scalar_lea.vmem [#allocation1], 1
      %3160 = vst [vmem:[%s3159] ss:$4 sm:$0xff] %v3138
      %s3162 = scalar_lea.vmem [#allocation1], 2
      %3163 = vst [vmem:[%s3162] ss:$4 sm:$0xff] %v3142
      %s3165 = scalar_lea.vmem [#allocation1], 3
      %3166 = vst [vmem:[%s3165] ss:$4 sm:$0xff] %v3146
      %v3167 = vld.sshfl [vmem:[#allocation1] sm:$0xff pattern:$0x73625140]
      %v3176 = vunpack.c.l.b16 %v3148
      %v3177 = vunpack.c.l.b16 %v3149
      %v3178 = vunpack.c.l.b16 %v3150
      %v3179 = vunpack.c.l.b16 %v3151
      %v3180 = vunpack.c.l.b16 %v3152
      %v3181 = vunpack.c.l.b16 %v3153
      %v3182 = vunpack.c.l.b16 %v3154
      %v3183 = vunpack.c.l.b16 %v3155
      %v3184 = vpack.c.b16 %v3177, %v3176
      %v3185 = vpack.c.b16 %v3179, %v3178
      %v3186 = vpack.c.b16 %v3181, %v3180
      %v3187 = vpack.c.b16 %v3183, %v3182
      %v3192 = vsel %vm585, %v3167, 0
      %3194 = vmatpush.bf16.msra.mxu0 0
      %3195 = vmatpush.bf16.msra.mxu0 0
      %3196 = vmatpush.bf16.msra.mxu0 0
      %3197 = vmatpush.bf16.msra.mxu0 0
      %3198 = vmatpush.bf16.msra.mxu0 %v3187
      %3199 = vmatpush.bf16.msra.mxu0 %v3186
      %3200 = vmatpush.bf16.msra.mxu0 %v3185
      %3201 = vmatpush.bf16.msra.mxu0 %v3184
      %3202 = vmatmul.bf16.gmra.mxu0 %v3192
      %v3203 = vpop.f32.mrf.mxu0
      %v3204 = vadd.f32 0.0, %v3203
      %v3205 = vpop.f32.mrf.mxu0
      %v3206 = vadd.f32 0.0, %v3205
      %3207 = vdwg.mxu0
      %v3208 = vadd.f32 %v3089, %v3204
      %v3209 = vadd.f32 %v3090, %v3206
      %s3210 = scalar_lea.vmem [#allocation3], 8
      %v3211 = vld [vmem:[%s3210] sm:$0x3]
      %v3212 = vld [vmem:[%s3210 + $0x4] sm:$0x3]
      %v3213 = vld [vmem:[%s3210 + $0x8] sm:$0x3]
      %v3214 = vld [vmem:[%s3210 + $0xc] sm:$0x3]
      %s3215 = scalar_lea.vmem %s5, 192
      %v3216 = vld [vmem:[%s3215] sm:$0xf]
      %v3217 = vld [vmem:[%s3215 + $0x4] sm:$0xf]
      %v3218 = vld [vmem:[%s3215 + $0x8] sm:$0xf]
      %v3219 = vld [vmem:[%s3215 + $0xc] sm:$0xf]
      %v3220 = vld [vmem:[%s3215 + $0x10] sm:$0xf]
      %v3221 = vld [vmem:[%s3215 + $0x14] sm:$0xf]
      %v3222 = vld [vmem:[%s3215 + $0x18] sm:$0xf]
      %v3223 = vld [vmem:[%s3215 + $0x1c] sm:$0xf]
      %3225 = vst [vmem:[#allocation1] ss:$4 sm:$0xff] %v3211
      %s3227 = scalar_lea.vmem [#allocation1], 1
      %3228 = vst [vmem:[%s3227] ss:$4 sm:$0xff] %v3212
      %s3230 = scalar_lea.vmem [#allocation1], 2
      %3231 = vst [vmem:[%s3230] ss:$4 sm:$0xff] %v3213
      %s3233 = scalar_lea.vmem [#allocation1], 3
      %3234 = vst [vmem:[%s3233] ss:$4 sm:$0xff] %v3214
      %v3235 = vld.sshfl [vmem:[#allocation1] sm:$0xff pattern:$0x73625140]
      %v3244 = vunpack.c.l.b16 %v3216
      %v3245 = vunpack.c.l.b16 %v3217
      %v3246 = vunpack.c.l.b16 %v3218
      %v3247 = vunpack.c.l.b16 %v3219
      %v3248 = vunpack.c.l.b16 %v3220
      %v3249 = vunpack.c.l.b16 %v3221
      %v3250 = vunpack.c.l.b16 %v3222
      %v3251 = vunpack.c.l.b16 %v3223
      %v3252 = vpack.c.b16 %v3245, %v3244
      %v3253 = vpack.c.b16 %v3247, %v3246
      %v3254 = vpack.c.b16 %v3249, %v3248
      %v3255 = vpack.c.b16 %v3251, %v3250
      %v3260 = vsel %vm585, %v3235, 0
      %3262 = vmatpush.bf16.msra.mxu0 0
      %3263 = vmatpush.bf16.msra.mxu0 0
      %3264 = vmatpush.bf16.msra.mxu0 0
      %3265 = vmatpush.bf16.msra.mxu0 0
      %3266 = vmatpush.bf16.msra.mxu0 %v3255
      %3267 = vmatpush.bf16.msra.mxu0 %v3254
      %3268 = vmatpush.bf16.msra.mxu0 %v3253
      %3269 = vmatpush.bf16.msra.mxu0 %v3252
      %3270 = vmatmul.bf16.gmra.mxu0 %v3260
      %v3271 = vpop.f32.mrf.mxu0
      %v3272 = vadd.f32 0.0, %v3271
      %v3273 = vpop.f32.mrf.mxu0
      %v3274 = vadd.f32 0.0, %v3273
      %3275 = vdwg.mxu0
      %v3276 = vadd.f32 %v3208, %v3272
      %v3277 = vadd.f32 %v3209, %v3274
      %v3278 = vld [vmem:[%s3210] sm:$0x7]
      %v3279 = vld [vmem:[%s3210 + $0x4] sm:$0x7]
      %v3280 = vld [vmem:[%s3210 + $0x8] sm:$0x7]
      %v3281 = vld [vmem:[%s3210 + $0xc] sm:$0x7]
      %v3286 = vrot.slane %v3278, 2
      %v3287 = vrot.slane %v3279, 2
      %v3288 = vrot.slane %v3280, 2
      %v3289 = vrot.slane %v3281, 2
      %v3292 = vsel %vm347, %v3278, %v3286
      %v3293 = vsel %vm351, %v3278, %v3286
      %v3295 = vrot.slane %v3293, 2
      %v3298 = vsel %vm347, %v3279, %v3287
      %v3299 = vsel %vm351, %v3279, %v3287
      %v3301 = vrot.slane %v3299, 2
      %v3304 = vsel %vm347, %v3280, %v3288
      %v3305 = vsel %vm351, %v3280, %v3288
      %v3307 = vrot.slane %v3305, 2
      %v3310 = vsel %vm347, %v3281, %v3289
      %v3311 = vsel %vm351, %v3281, %v3289
      %v3313 = vrot.slane %v3311, 2
      %v3314 = vshrl.u32 %v3292, 16
      %v3316 = vrot.slane %v3314, 6
      %v3317 = vshll.u32 %v3292, 16
      %v3319 = vrot.slane %v3317, 7
      %v3320 = vor.u32 %v3316, %v3319
      %v3321 = vrot.slane %v3320, 2
      %v3323 = vshll.u32 %v3295, 16
      %v3325 = vrot.slane %v3323, 7
      %v3326 = vsel %vm379, %v3321, %v3325
      %v3327 = vshrl.u32 %v3298, 16
      %v3329 = vrot.slane %v3327, 6
      %v3330 = vshll.u32 %v3298, 16
      %v3332 = vrot.slane %v3330, 7
      %v3333 = vor.u32 %v3329, %v3332
      %v3334 = vrot.slane %v3333, 2
      %v3336 = vshll.u32 %v3301, 16
      %v3338 = vrot.slane %v3336, 7
      %v3339 = vsel %vm379, %v3334, %v3338
      %v3340 = vshrl.u32 %v3304, 16
      %v3342 = vrot.slane %v3340, 6
      %v3343 = vshll.u32 %v3304, 16
      %v3345 = vrot.slane %v3343, 7
      %v3346 = vor.u32 %v3342, %v3345
      %v3347 = vrot.slane %v3346, 2
      %v3349 = vshll.u32 %v3307, 16
      %v3351 = vrot.slane %v3349, 7
      %v3352 = vsel %vm379, %v3347, %v3351
      %v3353 = vshrl.u32 %v3310, 16
      %v3355 = vrot.slane %v3353, 6
      %v3356 = vshll.u32 %v3310, 16
      %v3358 = vrot.slane %v3356, 7
      %v3359 = vor.u32 %v3355, %v3358
      %v3360 = vrot.slane %v3359, 2
      %v3362 = vshll.u32 %v3313, 16
      %v3364 = vrot.slane %v3362, 7
      %v3365 = vsel %vm379, %v3360, %v3364
      %s3366 = scalar_lea.vmem %s5, 224
      %v3367 = vld [vmem:[%s3366] sm:$0xf]
      %v3368 = vld [vmem:[%s3366 + $0x4] sm:$0xf]
      %v3369 = vld [vmem:[%s3366 + $0x8] sm:$0xf]
      %v3370 = vld [vmem:[%s3366 + $0xc] sm:$0xf]
      %v3371 = vld [vmem:[%s3366 + $0x10] sm:$0xf]
      %v3372 = vld [vmem:[%s3366 + $0x14] sm:$0xf]
      %v3373 = vld [vmem:[%s3366 + $0x18] sm:$0xf]
      %v3374 = vld [vmem:[%s3366 + $0x1c] sm:$0xf]
      %3376 = vst [vmem:[#allocation1] ss:$4 sm:$0xff] %v3326
      %s3378 = scalar_lea.vmem [#allocation1], 1
      %3379 = vst [vmem:[%s3378] ss:$4 sm:$0xff] %v3339
      %s3381 = scalar_lea.vmem [#allocation1], 2
      %3382 = vst [vmem:[%s3381] ss:$4 sm:$0xff] %v3352
      %s3384 = scalar_lea.vmem [#allocation1], 3
      %3385 = vst [vmem:[%s3384] ss:$4 sm:$0xff] %v3365
      %v3386 = vld.sshfl [vmem:[#allocation1] sm:$0xff pattern:$0x73625140]
      %v3395 = vunpack.c.l.b16 %v3367
      %v3396 = vunpack.c.l.b16 %v3368
      %v3397 = vunpack.c.l.b16 %v3369
      %v3398 = vunpack.c.l.b16 %v3370
      %v3399 = vunpack.c.l.b16 %v3371
      %v3400 = vunpack.c.l.b16 %v3372
      %v3401 = vunpack.c.l.b16 %v3373
      %v3402 = vunpack.c.l.b16 %v3374
      %v3403 = vpack.c.b16 %v3396, %v3395
      %v3404 = vpack.c.b16 %v3398, %v3397
      %v3405 = vpack.c.b16 %v3400, %v3399
      %v3406 = vpack.c.b16 %v3402, %v3401
      %v3411 = vsel %vm585, %v3386, 0
      %3413 = vmatpush.bf16.msra.mxu0 0
      %3414 = vmatpush.bf16.msra.mxu0 0
      %3415 = vmatpush.bf16.msra.mxu0 0
      %3416 = vmatpush.bf16.msra.mxu0 0
      %3417 = vmatpush.bf16.msra.mxu0 %v3406
      %3418 = vmatpush.bf16.msra.mxu0 %v3405
      %3419 = vmatpush.bf16.msra.mxu0 %v3404
      %3420 = vmatpush.bf16.msra.mxu0 %v3403
      %3421 = vmatmul.bf16.gmra.mxu0 %v3411
      %v3422 = vpop.f32.mrf.mxu0
      %v3423 = vadd.f32 0.0, %v3422
      %v3424 = vpop.f32.mrf.mxu0
      %v3425 = vadd.f32 0.0, %v3424
      %3426 = vdwg.mxu0
      %v3427 = vadd.f32 %v3276, %v3423
      %v3428 = vadd.f32 %v3277, %v3425
      %v3429 = vld [vmem:[%s3210] sm:$0x6]
      %v3430 = vld [vmem:[%s3210 + $0x4] sm:$0x6]
      %v3431 = vld [vmem:[%s3210 + $0x8] sm:$0x6]
      %v3432 = vld [vmem:[%s3210 + $0xc] sm:$0x6]
      %v3437 = vrot.slane %v3429, 2
      %v3438 = vrot.slane %v3430, 2
      %v3439 = vrot.slane %v3431, 2
      %v3440 = vrot.slane %v3432, 2
      %v3443 = vsel %vm347, %v3429, %v3437
      %v3445 = vsel %vm351, %v3429, %v3437
      %v3447 = vrot.slane %v3445, 2
      %v3450 = vsel %vm347, %v3430, %v3438
      %v3452 = vsel %vm351, %v3430, %v3438
      %v3454 = vrot.slane %v3452, 2
      %v3457 = vsel %vm347, %v3431, %v3439
      %v3459 = vsel %vm351, %v3431, %v3439
      %v3461 = vrot.slane %v3459, 2
      %v3464 = vsel %vm347, %v3432, %v3440
      %v3466 = vsel %vm351, %v3432, %v3440
      %v3468 = vrot.slane %v3466, 2
      %v3469 = vrot.slane %v3443, 7
      %v3470 = vrot.slane %v3469, 2
      %v3471 = vrot.slane %v3447, 7
      %v3472 = vsel %vm700, %v3470, %v3471
      %v3473 = vrot.slane %v3450, 7
      %v3474 = vrot.slane %v3473, 2
      %v3475 = vrot.slane %v3454, 7
      %v3476 = vsel %vm700, %v3474, %v3475
      %v3477 = vrot.slane %v3457, 7
      %v3478 = vrot.slane %v3477, 2
      %v3479 = vrot.slane %v3461, 7
      %v3480 = vsel %vm700, %v3478, %v3479
      %v3481 = vrot.slane %v3464, 7
      %v3482 = vrot.slane %v3481, 2
      %v3483 = vrot.slane %v3468, 7
      %v3484 = vsel %vm700, %v3482, %v3483
      %s3485 = scalar_lea.vmem %s5, 256
      %v3486 = vld [vmem:[%s3485] sm:$0xf]
      %v3487 = vld [vmem:[%s3485 + $0x4] sm:$0xf]
      %v3488 = vld [vmem:[%s3485 + $0x8] sm:$0xf]
      %v3489 = vld [vmem:[%s3485 + $0xc] sm:$0xf]
      %v3490 = vld [vmem:[%s3485 + $0x10] sm:$0xf]
      %v3491 = vld [vmem:[%s3485 + $0x14] sm:$0xf]
      %v3492 = vld [vmem:[%s3485 + $0x18] sm:$0xf]
      %v3493 = vld [vmem:[%s3485 + $0x1c] sm:$0xf]
      %3495 = vst [vmem:[#allocation1] ss:$4 sm:$0xff] %v3472
      %s3497 = scalar_lea.vmem [#allocation1], 1
      %3498 = vst [vmem:[%s3497] ss:$4 sm:$0xff] %v3476
      %s3500 = scalar_lea.vmem [#allocation1], 2
      %3501 = vst [vmem:[%s3500] ss:$4 sm:$0xff] %v3480
      %s3503 = scalar_lea.vmem [#allocation1], 3
      %3504 = vst [vmem:[%s3503] ss:$4 sm:$0xff] %v3484
      %v3505 = vld.sshfl [vmem:[#allocation1] sm:$0xff pattern:$0x73625140]
      %v3514 = vunpack.c.l.b16 %v3486
      %v3515 = vunpack.c.l.b16 %v3487
      %v3516 = vunpack.c.l.b16 %v3488
      %v3517 = vunpack.c.l.b16 %v3489
      %v3518 = vunpack.c.l.b16 %v3490
      %v3519 = vunpack.c.l.b16 %v3491
      %v3520 = vunpack.c.l.b16 %v3492
      %v3521 = vunpack.c.l.b16 %v3493
      %v3522 = vpack.c.b16 %v3515, %v3514
      %v3523 = vpack.c.b16 %v3517, %v3516
      %v3524 = vpack.c.b16 %v3519, %v3518
      %v3525 = vpack.c.b16 %v3521, %v3520
      %v3530 = vsel %vm585, %v3505, 0
      %3532 = vmatpush.bf16.msra.mxu0 0
      %3533 = vmatpush.bf16.msra.mxu0 0
      %3534 = vmatpush.bf16.msra.mxu0 0
      %3535 = vmatpush.bf16.msra.mxu0 0
      %3536 = vmatpush.bf16.msra.mxu0 %v3525
      %3537 = vmatpush.bf16.msra.mxu0 %v3524
      %3538 = vmatpush.bf16.msra.mxu0 %v3523
      %3539 = vmatpush.bf16.msra.mxu0 %v3522
      %3540 = vmatmul.bf16.gmra.mxu0 %v3530
      %v3541 = vpop.f32.mrf.mxu0
      %v3542 = vadd.f32 0.0, %v3541
      %v3543 = vpop.f32.mrf.mxu0
      %v3544 = vadd.f32 0.0, %v3543
      %3545 = vdwg.mxu0
      %v3546 = vadd.f32 %v3427, %v3542
      %v3547 = vadd.f32 %v3428, %v3544
      %v3548 = vld [vmem:[%s6] sm:$0x1]
      %v3550 = vperm.slane %v3548, 0
      %v3552 = vadd.f32 %v3546, %v3550
      %v3553 = vadd.f32 %v3547, %v3550
      %v3554 = vmax.f32 %v3552, 0.0
      %v3555 = vmax.f32 %v3553, 0.0
      %3556 = vst.msk [vmem:[#allocation2] sm:$0x7] %vm1375, 0
      %3557 = vst.msk [vmem:[#allocation2 + $0x4] sm:$0x7] %vm1375, 0
      %3558 = vst.msk [vmem:[#allocation2 + $0x8] sm:$0x7] %vm1375, 0
      %3559 = vst.msk [vmem:[#allocation2 + $0xc] sm:$0x7] %vm1375, 0
      %3560 = vst.msk [vmem:[#allocation2 + $0x10] sm:$0x7] %vm1375, 0
      %3561 = vst.msk [vmem:[#allocation2 + $0x14] sm:$0x7] %vm1375, 0
      %v3564 = vrot.slane %v3554, 4
      %v3565 = vrot.slane %v3555, 4
      %v3568 = vpack.c.bf16 %v3554, %v3554
      %v3569 = vpack.c.bf16 %v3564, %v3564
      %v3570 = vpack.c.bf16 %v3555, %v3555
      %v3571 = vpack.c.bf16 %v3565, %v3565
      %v3573 = vshrl.u32 %v3568, 16
      %v3575 = vrot.slane %v3573, 7
      %v3576 = vshll.u32 %v3568, 16
      %v3578 = vor.u32 %v3575, %v3576
      %v3580 = vshrl.u32 %v3569, 16
      %v3582 = vrot.slane %v3580, 7
      %v3583 = vshll.u32 %v3569, 16
      %v3585 = vor.u32 %v3582, %v3583
      %v3587 = vshrl.u32 %v3570, 16
      %v3589 = vrot.slane %v3587, 7
      %v3590 = vshll.u32 %v3570, 16
      %v3592 = vor.u32 %v3589, %v3590
      %v3594 = vshrl.u32 %v3571, 16
      %v3596 = vrot.slane %v3594, 7
      %v3597 = vshll.u32 %v3571, 16
      %v3599 = vor.u32 %v3596, %v3597
      %v3604 = vld [vmem:[%s1424] sm:$0x7]
      %v3605 = vsel %vm1427, %v3578, %v3604
      %3606 = vst [vmem:[%s1424] sm:$0x7] %v3605
      %v3607 = vld [vmem:[%s1424 + $0x4] sm:$0x7]
      %v3608 = vsel %vm1427, %v3585, %v3607
      %3609 = vst [vmem:[%s1424 + $0x4] sm:$0x7] %v3608
      %v3610 = vld [vmem:[%s1424 + $0x8] sm:$0x7]
      %v3611 = vsel %vm1427, %v3592, %v3610
      %3612 = vst [vmem:[%s1424 + $0x8] sm:$0x7] %v3611
      %v3613 = vld [vmem:[%s1424 + $0xc] sm:$0x7]
      %v3614 = vsel %vm1427, %v3599, %v3613
      %3615 = vst [vmem:[%s1424 + $0xc] sm:$0x7] %v3614
      %v3616 = vld [vmem:[#allocation2] sm:$0x3]
      %v3617 = vld [vmem:[#allocation2 + $0x4] sm:$0x3]
      %v3618 = vld [vmem:[#allocation2 + $0x8] sm:$0x3]
      %v3619 = vld [vmem:[#allocation2 + $0xc] sm:$0x3]
      %v3620 = vld [vmem:[%s7] sm:$0xf]
      %v3621 = vld [vmem:[%s7 + $0x4] sm:$0xf]
      %v3622 = vld [vmem:[%s7 + $0x8] sm:$0xf]
      %v3623 = vld [vmem:[%s7 + $0xc] sm:$0xf]
      %v3624 = vld [vmem:[%s7 + $0x10] sm:$0xf]
      %v3625 = vld [vmem:[%s7 + $0x14] sm:$0xf]
      %v3626 = vld [vmem:[%s7 + $0x18] sm:$0xf]
      %v3627 = vld [vmem:[%s7 + $0x1c] sm:$0xf]
      %v3628 = vld [vmem:[#allocation2] sm:$0x7]
      %v3629 = vld [vmem:[#allocation2 + $0x4] sm:$0x7]
      %v3630 = vld [vmem:[#allocation2 + $0x8] sm:$0x7]
      %v3631 = vld [vmem:[#allocation2 + $0xc] sm:$0x7]
      %v3636 = vrot.slane %v3628, 2
      %v3637 = vrot.slane %v3629, 2
      %v3638 = vrot.slane %v3630, 2
      %v3639 = vrot.slane %v3631, 2
      %v3642 = vsel %vm347, %v3628, %v3636
      %v3643 = vsel %vm351, %v3628, %v3636
      %v3645 = vrot.slane %v3643, 2
      %v3648 = vsel %vm347, %v3629, %v3637
      %v3649 = vsel %vm351, %v3629, %v3637
      %v3651 = vrot.slane %v3649, 2
      %v3654 = vsel %vm347, %v3630, %v3638
      %v3655 = vsel %vm351, %v3630, %v3638
      %v3657 = vrot.slane %v3655, 2
      %v3660 = vsel %vm347, %v3631, %v3639
      %v3661 = vsel %vm351, %v3631, %v3639
      %v3663 = vrot.slane %v3661, 2
      %v3664 = vshrl.u32 %v3642, 16
      %v3666 = vrot.slane %v3664, 6
      %v3667 = vshll.u32 %v3642, 16
      %v3669 = vrot.slane %v3667, 7
      %v3670 = vor.u32 %v3666, %v3669
      %v3671 = vrot.slane %v3670, 2
      %v3673 = vshll.u32 %v3645, 16
      %v3675 = vrot.slane %v3673, 7
      %v3676 = vsel %vm379, %v3671, %v3675
      %v3677 = vshrl.u32 %v3648, 16
      %v3679 = vrot.slane %v3677, 6
      %v3680 = vshll.u32 %v3648, 16
      %v3682 = vrot.slane %v3680, 7
      %v3683 = vor.u32 %v3679, %v3682
      %v3684 = vrot.slane %v3683, 2
      %v3686 = vshll.u32 %v3651, 16
      %v3688 = vrot.slane %v3686, 7
      %v3689 = vsel %vm379, %v3684, %v3688
      %v3690 = vshrl.u32 %v3654, 16
      %v3692 = vrot.slane %v3690, 6
      %v3693 = vshll.u32 %v3654, 16
      %v3695 = vrot.slane %v3693, 7
      %v3696 = vor.u32 %v3692, %v3695
      %v3697 = vrot.slane %v3696, 2
      %v3699 = vshll.u32 %v3657, 16
      %v3701 = vrot.slane %v3699, 7
      %v3702 = vsel %vm379, %v3697, %v3701
      %v3703 = vshrl.u32 %v3660, 16
      %v3705 = vrot.slane %v3703, 6
      %v3706 = vshll.u32 %v3660, 16
      %v3708 = vrot.slane %v3706, 7
      %v3709 = vor.u32 %v3705, %v3708
      %v3710 = vrot.slane %v3709, 2
      %v3712 = vshll.u32 %v3663, 16
      %v3714 = vrot.slane %v3712, 7
      %v3715 = vsel %vm379, %v3710, %v3714
      %s3716 = scalar_lea.vmem %s7, 32
      %v3717 = vld [vmem:[%s3716] sm:$0xf]
      %v3718 = vld [vmem:[%s3716 + $0x4] sm:$0xf]
      %v3719 = vld [vmem:[%s3716 + $0x8] sm:$0xf]
      %v3720 = vld [vmem:[%s3716 + $0xc] sm:$0xf]
      %v3721 = vld [vmem:[%s3716 + $0x10] sm:$0xf]
      %v3722 = vld [vmem:[%s3716 + $0x14] sm:$0xf]
      %v3723 = vld [vmem:[%s3716 + $0x18] sm:$0xf]
      %v3724 = vld [vmem:[%s3716 + $0x1c] sm:$0xf]
      %3726 = vst [vmem:[#allocation1] ss:$4 sm:$0xff] %v3676
      %s3728 = scalar_lea.vmem [#allocation1], 1
      %3729 = vst [vmem:[%s3728] ss:$4 sm:$0xff] %v3689
      %s3731 = scalar_lea.vmem [#allocation1], 2
      %3732 = vst [vmem:[%s3731] ss:$4 sm:$0xff] %v3702
      %s3734 = scalar_lea.vmem [#allocation1], 3
      %3735 = vst [vmem:[%s3734] ss:$4 sm:$0xff] %v3715
      %v3736 = vld.sshfl [vmem:[#allocation1] sm:$0xff pattern:$0x73625140]
      %v3745 = vunpack.c.l.b16 %v3717
      %v3746 = vunpack.c.l.b16 %v3718
      %v3747 = vunpack.c.l.b16 %v3719
      %v3748 = vunpack.c.l.b16 %v3720
      %v3749 = vunpack.c.l.b16 %v3721
      %v3750 = vunpack.c.l.b16 %v3722
      %v3751 = vunpack.c.l.b16 %v3723
      %v3752 = vunpack.c.l.b16 %v3724
      %v3753 = vpack.c.b16 %v3746, %v3745
      %v3754 = vpack.c.b16 %v3748, %v3747
      %v3755 = vpack.c.b16 %v3750, %v3749
      %v3756 = vpack.c.b16 %v3752, %v3751
      %v3761 = vsel %vm585, %v3736, 0
      %3763 = vmatpush.bf16.msra.mxu0 0
      %3764 = vmatpush.bf16.msra.mxu0 0
      %3765 = vmatpush.bf16.msra.mxu0 0
      %3766 = vmatpush.bf16.msra.mxu0 0
      %3767 = vmatpush.bf16.msra.mxu0 %v3756
      %3768 = vmatpush.bf16.msra.mxu0 %v3755
      %3769 = vmatpush.bf16.msra.mxu0 %v3754
      %3770 = vmatpush.bf16.msra.mxu0 %v3753
      %3771 = vmatmul.bf16.gmra.mxu0 %v3761
      %v3772 = vpop.f32.mrf.mxu0
      %v3773 = vadd.f32 0.0, %v3772
      %v3774 = vpop.f32.mrf.mxu0
      %v3775 = vadd.f32 0.0, %v3774
      %3776 = vdwg.mxu0
      %3778 = vst [vmem:[#allocation1] ss:$4 sm:$0xff] %v3616
      %s3780 = scalar_lea.vmem [#allocation1], 1
      %3781 = vst [vmem:[%s3780] ss:$4 sm:$0xff] %v3617
      %s3783 = scalar_lea.vmem [#allocation1], 2
      %3784 = vst [vmem:[%s3783] ss:$4 sm:$0xff] %v3618
      %s3786 = scalar_lea.vmem [#allocation1], 3
      %3787 = vst [vmem:[%s3786] ss:$4 sm:$0xff] %v3619
      %v3788 = vld.sshfl [vmem:[#allocation1] sm:$0xff pattern:$0x73625140]
      %v3797 = vunpack.c.l.b16 %v3620
      %v3798 = vunpack.c.l.b16 %v3621
      %v3799 = vunpack.c.l.b16 %v3622
      %v3800 = vunpack.c.l.b16 %v3623
      %v3801 = vunpack.c.l.b16 %v3624
      %v3802 = vunpack.c.l.b16 %v3625
      %v3803 = vunpack.c.l.b16 %v3626
      %v3804 = vunpack.c.l.b16 %v3627
      %v3805 = vpack.c.b16 %v3798, %v3797
      %v3806 = vpack.c.b16 %v3800, %v3799
      %v3807 = vpack.c.b16 %v3802, %v3801
      %v3808 = vpack.c.b16 %v3804, %v3803
      %v3813 = vsel %vm585, %v3788, 0
      %3815 = vmatpush.bf16.msra.mxu0 0
      %3816 = vmatpush.bf16.msra.mxu0 0
      %3817 = vmatpush.bf16.msra.mxu0 0
      %3818 = vmatpush.bf16.msra.mxu0 0
      %3819 = vmatpush.bf16.msra.mxu0 %v3808
      %3820 = vmatpush.bf16.msra.mxu0 %v3807
      %3821 = vmatpush.bf16.msra.mxu0 %v3806
      %3822 = vmatpush.bf16.msra.mxu0 %v3805
      %3823 = vmatmul.bf16.gmra.mxu0 %v3813
      %v3824 = vpop.f32.mrf.mxu0
      %v3825 = vadd.f32 %v3773, %v3824
      %v3826 = vpop.f32.mrf.mxu0
      %v3827 = vadd.f32 %v3775, %v3826
      %3828 = vdwg.mxu0
      %v3829 = vld [vmem:[#allocation2] sm:$0x6]
      %v3830 = vld [vmem:[#allocation2 + $0x4] sm:$0x6]
      %v3831 = vld [vmem:[#allocation2 + $0x8] sm:$0x6]
      %v3832 = vld [vmem:[#allocation2 + $0xc] sm:$0x6]
      %v3837 = vrot.slane %v3829, 2
      %v3838 = vrot.slane %v3830, 2
      %v3839 = vrot.slane %v3831, 2
      %v3840 = vrot.slane %v3832, 2
      %v3843 = vsel %vm347, %v3829, %v3837
      %v3845 = vsel %vm351, %v3829, %v3837
      %v3847 = vrot.slane %v3845, 2
      %v3850 = vsel %vm347, %v3830, %v3838
      %v3852 = vsel %vm351, %v3830, %v3838
      %v3854 = vrot.slane %v3852, 2
      %v3857 = vsel %vm347, %v3831, %v3839
      %v3859 = vsel %vm351, %v3831, %v3839
      %v3861 = vrot.slane %v3859, 2
      %v3864 = vsel %vm347, %v3832, %v3840
      %v3866 = vsel %vm351, %v3832, %v3840
      %v3868 = vrot.slane %v3866, 2
      %v3869 = vrot.slane %v3843, 7
      %v3870 = vrot.slane %v3869, 2
      %v3871 = vrot.slane %v3847, 7
      %v3872 = vsel %vm700, %v3870, %v3871
      %v3873 = vrot.slane %v3850, 7
      %v3874 = vrot.slane %v3873, 2
      %v3875 = vrot.slane %v3854, 7
      %v3876 = vsel %vm700, %v3874, %v3875
      %v3877 = vrot.slane %v3857, 7
      %v3878 = vrot.slane %v3877, 2
      %v3879 = vrot.slane %v3861, 7
      %v3880 = vsel %vm700, %v3878, %v3879
      %v3881 = vrot.slane %v3864, 7
      %v3882 = vrot.slane %v3881, 2
      %v3883 = vrot.slane %v3868, 7
      %v3884 = vsel %vm700, %v3882, %v3883
      %s3885 = scalar_lea.vmem %s7, 64
      %v3886 = vld [vmem:[%s3885] sm:$0xf]
      %v3887 = vld [vmem:[%s3885 + $0x4] sm:$0xf]
      %v3888 = vld [vmem:[%s3885 + $0x8] sm:$0xf]
      %v3889 = vld [vmem:[%s3885 + $0xc] sm:$0xf]
      %v3890 = vld [vmem:[%s3885 + $0x10] sm:$0xf]
      %v3891 = vld [vmem:[%s3885 + $0x14] sm:$0xf]
      %v3892 = vld [vmem:[%s3885 + $0x18] sm:$0xf]
      %v3893 = vld [vmem:[%s3885 + $0x1c] sm:$0xf]
      %3895 = vst [vmem:[#allocation1] ss:$4 sm:$0xff] %v3872
      %s3897 = scalar_lea.vmem [#allocation1], 1
      %3898 = vst [vmem:[%s3897] ss:$4 sm:$0xff] %v3876
      %s3900 = scalar_lea.vmem [#allocation1], 2
      %3901 = vst [vmem:[%s3900] ss:$4 sm:$0xff] %v3880
      %s3903 = scalar_lea.vmem [#allocation1], 3
      %3904 = vst [vmem:[%s3903] ss:$4 sm:$0xff] %v3884
      %v3905 = vld.sshfl [vmem:[#allocation1] sm:$0xff pattern:$0x73625140]
      %v3914 = vunpack.c.l.b16 %v3886
      %v3915 = vunpack.c.l.b16 %v3887
      %v3916 = vunpack.c.l.b16 %v3888
      %v3917 = vunpack.c.l.b16 %v3889
      %v3918 = vunpack.c.l.b16 %v3890
      %v3919 = vunpack.c.l.b16 %v3891
      %v3920 = vunpack.c.l.b16 %v3892
      %v3921 = vunpack.c.l.b16 %v3893
      %v3922 = vpack.c.b16 %v3915, %v3914
      %v3923 = vpack.c.b16 %v3917, %v3916
      %v3924 = vpack.c.b16 %v3919, %v3918
      %v3925 = vpack.c.b16 %v3921, %v3920
      %v3930 = vsel %vm585, %v3905, 0
      %3932 = vmatpush.bf16.msra.mxu0 0
      %3933 = vmatpush.bf16.msra.mxu0 0
      %3934 = vmatpush.bf16.msra.mxu0 0
      %3935 = vmatpush.bf16.msra.mxu0 0
      %3936 = vmatpush.bf16.msra.mxu0 %v3925
      %3937 = vmatpush.bf16.msra.mxu0 %v3924
      %3938 = vmatpush.bf16.msra.mxu0 %v3923
      %3939 = vmatpush.bf16.msra.mxu0 %v3922
      %3940 = vmatmul.bf16.gmra.mxu0 %v3930
      %v3941 = vpop.f32.mrf.mxu0
      %v3942 = vadd.f32 0.0, %v3941
      %v3943 = vpop.f32.mrf.mxu0
      %v3944 = vadd.f32 0.0, %v3943
      %3945 = vdwg.mxu0
      %v3946 = vadd.f32 %v3825, %v3942
      %v3947 = vadd.f32 %v3827, %v3944
      %v3948 = vld [vmem:[%s1424] sm:$0x3]
      %v3949 = vld [vmem:[%s1424 + $0x4] sm:$0x3]
      %v3950 = vld [vmem:[%s1424 + $0x8] sm:$0x3]
      %v3951 = vld [vmem:[%s1424 + $0xc] sm:$0x3]
      %s3952 = scalar_lea.vmem %s7, 96
      %v3953 = vld [vmem:[%s3952] sm:$0xf]
      %v3954 = vld [vmem:[%s3952 + $0x4] sm:$0xf]
      %v3955 = vld [vmem:[%s3952 + $0x8] sm:$0xf]
      %v3956 = vld [vmem:[%s3952 + $0xc] sm:$0xf]
      %v3957 = vld [vmem:[%s3952 + $0x10] sm:$0xf]
      %v3958 = vld [vmem:[%s3952 + $0x14] sm:$0xf]
      %v3959 = vld [vmem:[%s3952 + $0x18] sm:$0xf]
      %v3960 = vld [vmem:[%s3952 + $0x1c] sm:$0xf]
      %3962 = vst [vmem:[#allocation1] ss:$4 sm:$0xff] %v3948
      %s3964 = scalar_lea.vmem [#allocation1], 1
      %3965 = vst [vmem:[%s3964] ss:$4 sm:$0xff] %v3949
      %s3967 = scalar_lea.vmem [#allocation1], 2
      %3968 = vst [vmem:[%s3967] ss:$4 sm:$0xff] %v3950
      %s3970 = scalar_lea.vmem [#allocation1], 3
      %3971 = vst [vmem:[%s3970] ss:$4 sm:$0xff] %v3951
      %v3972 = vld.sshfl [vmem:[#allocation1] sm:$0xff pattern:$0x73625140]
      %v3981 = vunpack.c.l.b16 %v3953
      %v3982 = vunpack.c.l.b16 %v3954
      %v3983 = vunpack.c.l.b16 %v3955
      %v3984 = vunpack.c.l.b16 %v3956
      %v3985 = vunpack.c.l.b16 %v3957
      %v3986 = vunpack.c.l.b16 %v3958
      %v3987 = vunpack.c.l.b16 %v3959
      %v3988 = vunpack.c.l.b16 %v3960
      %v3989 = vpack.c.b16 %v3982, %v3981
      %v3990 = vpack.c.b16 %v3984, %v3983
      %v3991 = vpack.c.b16 %v3986, %v3985
      %v3992 = vpack.c.b16 %v3988, %v3987
      %v3997 = vsel %vm585, %v3972, 0
      %3999 = vmatpush.bf16.msra.mxu0 0
      %4000 = vmatpush.bf16.msra.mxu0 0
      %4001 = vmatpush.bf16.msra.mxu0 0
      %4002 = vmatpush.bf16.msra.mxu0 0
      %4003 = vmatpush.bf16.msra.mxu0 %v3992
      %4004 = vmatpush.bf16.msra.mxu0 %v3991
      %4005 = vmatpush.bf16.msra.mxu0 %v3990
      %4006 = vmatpush.bf16.msra.mxu0 %v3989
      %4007 = vmatmul.bf16.gmra.mxu0 %v3997
      %v4008 = vpop.f32.mrf.mxu0
      %v4009 = vadd.f32 0.0, %v4008
      %v4010 = vpop.f32.mrf.mxu0
      %v4011 = vadd.f32 0.0, %v4010
      %4012 = vdwg.mxu0
      %v4013 = vadd.f32 %v3946, %v4009
      %v4014 = vadd.f32 %v3947, %v4011
      %v4015 = vld [vmem:[%s1424] sm:$0x7]
      %v4016 = vld [vmem:[%s1424 + $0x4] sm:$0x7]
      %v4017 = vld [vmem:[%s1424 + $0x8] sm:$0x7]
      %v4018 = vld [vmem:[%s1424 + $0xc] sm:$0x7]
      %v4023 = vrot.slane %v4015, 2
      %v4024 = vrot.slane %v4016, 2
      %v4025 = vrot.slane %v4017, 2
      %v4026 = vrot.slane %v4018, 2
      %v4029 = vsel %vm347, %v4015, %v4023
      %v4030 = vsel %vm351, %v4015, %v4023
      %v4032 = vrot.slane %v4030, 2
      %v4035 = vsel %vm347, %v4016, %v4024
      %v4036 = vsel %vm351, %v4016, %v4024
      %v4038 = vrot.slane %v4036, 2
      %v4041 = vsel %vm347, %v4017, %v4025
      %v4042 = vsel %vm351, %v4017, %v4025
      %v4044 = vrot.slane %v4042, 2
      %v4047 = vsel %vm347, %v4018, %v4026
      %v4048 = vsel %vm351, %v4018, %v4026
      %v4050 = vrot.slane %v4048, 2
      %v4051 = vshrl.u32 %v4029, 16
      %v4053 = vrot.slane %v4051, 6
      %v4054 = vshll.u32 %v4029, 16
      %v4056 = vrot.slane %v4054, 7
      %v4057 = vor.u32 %v4053, %v4056
      %v4058 = vrot.slane %v4057, 2
      %v4060 = vshll.u32 %v4032, 16
      %v4062 = vrot.slane %v4060, 7
      %v4063 = vsel %vm379, %v4058, %v4062
      %v4064 = vshrl.u32 %v4035, 16
      %v4066 = vrot.slane %v4064, 6
      %v4067 = vshll.u32 %v4035, 16
      %v4069 = vrot.slane %v4067, 7
      %v4070 = vor.u32 %v4066, %v4069
      %v4071 = vrot.slane %v4070, 2
      %v4073 = vshll.u32 %v4038, 16
      %v4075 = vrot.slane %v4073, 7
      %v4076 = vsel %vm379, %v4071, %v4075
      %v4077 = vshrl.u32 %v4041, 16
      %v4079 = vrot.slane %v4077, 6
      %v4080 = vshll.u32 %v4041, 16
      %v4082 = vrot.slane %v4080, 7
      %v4083 = vor.u32 %v4079, %v4082
      %v4084 = vrot.slane %v4083, 2
      %v4086 = vshll.u32 %v4044, 16
      %v4088 = vrot.slane %v4086, 7
      %v4089 = vsel %vm379, %v4084, %v4088
      %v4090 = vshrl.u32 %v4047, 16
      %v4092 = vrot.slane %v4090, 6
      %v4093 = vshll.u32 %v4047, 16
      %v4095 = vrot.slane %v4093, 7
      %v4096 = vor.u32 %v4092, %v4095
      %v4097 = vrot.slane %v4096, 2
      %v4099 = vshll.u32 %v4050, 16
      %v4101 = vrot.slane %v4099, 7
      %v4102 = vsel %vm379, %v4097, %v4101
      %s4103 = scalar_lea.vmem %s7, 128
      %v4104 = vld [vmem:[%s4103] sm:$0xf]
      %v4105 = vld [vmem:[%s4103 + $0x4] sm:$0xf]
      %v4106 = vld [vmem:[%s4103 + $0x8] sm:$0xf]
      %v4107 = vld [vmem:[%s4103 + $0xc] sm:$0xf]
      %v4108 = vld [vmem:[%s4103 + $0x10] sm:$0xf]
      %v4109 = vld [vmem:[%s4103 + $0x14] sm:$0xf]
      %v4110 = vld [vmem:[%s4103 + $0x18] sm:$0xf]
      %v4111 = vld [vmem:[%s4103 + $0x1c] sm:$0xf]
      %4113 = vst [vmem:[#allocation1] ss:$4 sm:$0xff] %v4063
      %s4115 = scalar_lea.vmem [#allocation1], 1
      %4116 = vst [vmem:[%s4115] ss:$4 sm:$0xff] %v4076
      %s4118 = scalar_lea.vmem [#allocation1], 2
      %4119 = vst [vmem:[%s4118] ss:$4 sm:$0xff] %v4089
      %s4121 = scalar_lea.vmem [#allocation1], 3
      %4122 = vst [vmem:[%s4121] ss:$4 sm:$0xff] %v4102
      %v4123 = vld.sshfl [vmem:[#allocation1] sm:$0xff pattern:$0x73625140]
      %v4132 = vunpack.c.l.b16 %v4104
      %v4133 = vunpack.c.l.b16 %v4105
      %v4134 = vunpack.c.l.b16 %v4106
      %v4135 = vunpack.c.l.b16 %v4107
      %v4136 = vunpack.c.l.b16 %v4108
      %v4137 = vunpack.c.l.b16 %v4109
      %v4138 = vunpack.c.l.b16 %v4110
      %v4139 = vunpack.c.l.b16 %v4111
      %v4140 = vpack.c.b16 %v4133, %v4132
      %v4141 = vpack.c.b16 %v4135, %v4134
      %v4142 = vpack.c.b16 %v4137, %v4136
      %v4143 = vpack.c.b16 %v4139, %v4138
      %v4148 = vsel %vm585, %v4123, 0
      %4150 = vmatpush.bf16.msra.mxu0 0
      %4151 = vmatpush.bf16.msra.mxu0 0
      %4152 = vmatpush.bf16.msra.mxu0 0
      %4153 = vmatpush.bf16.msra.mxu0 0
      %4154 = vmatpush.bf16.msra.mxu0 %v4143
      %4155 = vmatpush.bf16.msra.mxu0 %v4142
      %4156 = vmatpush.bf16.msra.mxu0 %v4141
      %4157 = vmatpush.bf16.msra.mxu0 %v4140
      %4158 = vmatmul.bf16.gmra.mxu0 %v4148
      %v4159 = vpop.f32.mrf.mxu0
      %v4160 = vadd.f32 0.0, %v4159
      %v4161 = vpop.f32.mrf.mxu0
      %v4162 = vadd.f32 0.0, %v4161
      %4163 = vdwg.mxu0
      %v4164 = vadd.f32 %v4013, %v4160
      %v4165 = vadd.f32 %v4014, %v4162
      %v4166 = vld [vmem:[%s1424] sm:$0x6]
      %v4167 = vld [vmem:[%s1424 + $0x4] sm:$0x6]
      %v4168 = vld [vmem:[%s1424 + $0x8] sm:$0x6]
      %v4169 = vld [vmem:[%s1424 + $0xc] sm:$0x6]
      %v4174 = vrot.slane %v4166, 2
      %v4175 = vrot.slane %v4167, 2
      %v4176 = vrot.slane %v4168, 2
      %v4177 = vrot.slane %v4169, 2
      %v4180 = vsel %vm347, %v4166, %v4174
      %v4182 = vsel %vm351, %v4166, %v4174
      %v4184 = vrot.slane %v4182, 2
      %v4187 = vsel %vm347, %v4167, %v4175
      %v4189 = vsel %vm351, %v4167, %v4175
      %v4191 = vrot.slane %v4189, 2
      %v4194 = vsel %vm347, %v4168, %v4176
      %v4196 = vsel %vm351, %v4168, %v4176
      %v4198 = vrot.slane %v4196, 2
      %v4201 = vsel %vm347, %v4169, %v4177
      %v4203 = vsel %vm351, %v4169, %v4177
      %v4205 = vrot.slane %v4203, 2
      %v4206 = vrot.slane %v4180, 7
      %v4207 = vrot.slane %v4206, 2
      %v4208 = vrot.slane %v4184, 7
      %v4209 = vsel %vm700, %v4207, %v4208
      %v4210 = vrot.slane %v4187, 7
      %v4211 = vrot.slane %v4210, 2
      %v4212 = vrot.slane %v4191, 7
      %v4213 = vsel %vm700, %v4211, %v4212
      %v4214 = vrot.slane %v4194, 7
      %v4215 = vrot.slane %v4214, 2
      %v4216 = vrot.slane %v4198, 7
      %v4217 = vsel %vm700, %v4215, %v4216
      %v4218 = vrot.slane %v4201, 7
      %v4219 = vrot.slane %v4218, 2
      %v4220 = vrot.slane %v4205, 7
      %v4221 = vsel %vm700, %v4219, %v4220
      %s4222 = scalar_lea.vmem %s7, 160
      %v4223 = vld [vmem:[%s4222] sm:$0xf]
      %v4224 = vld [vmem:[%s4222 + $0x4] sm:$0xf]
      %v4225 = vld [vmem:[%s4222 + $0x8] sm:$0xf]
      %v4226 = vld [vmem:[%s4222 + $0xc] sm:$0xf]
      %v4227 = vld [vmem:[%s4222 + $0x10] sm:$0xf]
      %v4228 = vld [vmem:[%s4222 + $0x14] sm:$0xf]
      %v4229 = vld [vmem:[%s4222 + $0x18] sm:$0xf]
      %v4230 = vld [vmem:[%s4222 + $0x1c] sm:$0xf]
      %4232 = vst [vmem:[#allocation1] ss:$4 sm:$0xff] %v4209
      %s4234 = scalar_lea.vmem [#allocation1], 1
      %4235 = vst [vmem:[%s4234] ss:$4 sm:$0xff] %v4213
      %s4237 = scalar_lea.vmem [#allocation1], 2
      %4238 = vst [vmem:[%s4237] ss:$4 sm:$0xff] %v4217
      %s4240 = scalar_lea.vmem [#allocation1], 3
      %4241 = vst [vmem:[%s4240] ss:$4 sm:$0xff] %v4221
      %v4242 = vld.sshfl [vmem:[#allocation1] sm:$0xff pattern:$0x73625140]
      %v4251 = vunpack.c.l.b16 %v4223
      %v4252 = vunpack.c.l.b16 %v4224
      %v4253 = vunpack.c.l.b16 %v4225
      %v4254 = vunpack.c.l.b16 %v4226
      %v4255 = vunpack.c.l.b16 %v4227
      %v4256 = vunpack.c.l.b16 %v4228
      %v4257 = vunpack.c.l.b16 %v4229
      %v4258 = vunpack.c.l.b16 %v4230
      %v4259 = vpack.c.b16 %v4252, %v4251
      %v4260 = vpack.c.b16 %v4254, %v4253
      %v4261 = vpack.c.b16 %v4256, %v4255
      %v4262 = vpack.c.b16 %v4258, %v4257
      %v4267 = vsel %vm585, %v4242, 0
      %4269 = vmatpush.bf16.msra.mxu0 0
      %4270 = vmatpush.bf16.msra.mxu0 0
      %4271 = vmatpush.bf16.msra.mxu0 0
      %4272 = vmatpush.bf16.msra.mxu0 0
      %4273 = vmatpush.bf16.msra.mxu0 %v4262
      %4274 = vmatpush.bf16.msra.mxu0 %v4261
      %4275 = vmatpush.bf16.msra.mxu0 %v4260
      %4276 = vmatpush.bf16.msra.mxu0 %v4259
      %4277 = vmatmul.bf16.gmra.mxu0 %v4267
      %v4278 = vpop.f32.mrf.mxu0
      %v4279 = vadd.f32 0.0, %v4278
      %v4280 = vpop.f32.mrf.mxu0
      %v4281 = vadd.f32 0.0, %v4280
      %4282 = vdwg.mxu0
      %v4283 = vadd.f32 %v4164, %v4279
      %v4284 = vadd.f32 %v4165, %v4281
      %v4285 = vld [vmem:[%s2109] sm:$0x3]
      %v4286 = vld [vmem:[%s2109 + $0x4] sm:$0x3]
      %v4287 = vld [vmem:[%s2109 + $0x8] sm:$0x3]
      %v4288 = vld [vmem:[%s2109 + $0xc] sm:$0x3]
      %s4289 = scalar_lea.vmem %s7, 192
      %v4290 = vld [vmem:[%s4289] sm:$0xf]
      %v4291 = vld [vmem:[%s4289 + $0x4] sm:$0xf]
      %v4292 = vld [vmem:[%s4289 + $0x8] sm:$0xf]
      %v4293 = vld [vmem:[%s4289 + $0xc] sm:$0xf]
      %v4294 = vld [vmem:[%s4289 + $0x10] sm:$0xf]
      %v4295 = vld [vmem:[%s4289 + $0x14] sm:$0xf]
      %v4296 = vld [vmem:[%s4289 + $0x18] sm:$0xf]
      %v4297 = vld [vmem:[%s4289 + $0x1c] sm:$0xf]
      %4299 = vst [vmem:[#allocation1] ss:$4 sm:$0xff] %v4285
      %s4301 = scalar_lea.vmem [#allocation1], 1
      %4302 = vst [vmem:[%s4301] ss:$4 sm:$0xff] %v4286
      %s4304 = scalar_lea.vmem [#allocation1], 2
      %4305 = vst [vmem:[%s4304] ss:$4 sm:$0xff] %v4287
      %s4307 = scalar_lea.vmem [#allocation1], 3
      %4308 = vst [vmem:[%s4307] ss:$4 sm:$0xff] %v4288
      %v4309 = vld.sshfl [vmem:[#allocation1] sm:$0xff pattern:$0x73625140]
      %v4318 = vunpack.c.l.b16 %v4290
      %v4319 = vunpack.c.l.b16 %v4291
      %v4320 = vunpack.c.l.b16 %v4292
      %v4321 = vunpack.c.l.b16 %v4293
      %v4322 = vunpack.c.l.b16 %v4294
      %v4323 = vunpack.c.l.b16 %v4295
      %v4324 = vunpack.c.l.b16 %v4296
      %v4325 = vunpack.c.l.b16 %v4297
      %v4326 = vpack.c.b16 %v4319, %v4318
      %v4327 = vpack.c.b16 %v4321, %v4320
      %v4328 = vpack.c.b16 %v4323, %v4322
      %v4329 = vpack.c.b16 %v4325, %v4324
      %v4334 = vsel %vm585, %v4309, 0
      %4336 = vmatpush.bf16.msra.mxu0 0
      %4337 = vmatpush.bf16.msra.mxu0 0
      %4338 = vmatpush.bf16.msra.mxu0 0
      %4339 = vmatpush.bf16.msra.mxu0 0
      %4340 = vmatpush.bf16.msra.mxu0 %v4329
      %4341 = vmatpush.bf16.msra.mxu0 %v4328
      %4342 = vmatpush.bf16.msra.mxu0 %v4327
      %4343 = vmatpush.bf16.msra.mxu0 %v4326
      %4344 = vmatmul.bf16.gmra.mxu0 %v4334
      %v4345 = vpop.f32.mrf.mxu0
      %v4346 = vadd.f32 0.0, %v4345
      %v4347 = vpop.f32.mrf.mxu0
      %v4348 = vadd.f32 0.0, %v4347
      %4349 = vdwg.mxu0
      %v4350 = vadd.f32 %v4283, %v4346
      %v4351 = vadd.f32 %v4284, %v4348
      %v4352 = vld [vmem:[%s2109] sm:$0x7]
      %v4353 = vld [vmem:[%s2109 + $0x4] sm:$0x7]
      %v4354 = vld [vmem:[%s2109 + $0x8] sm:$0x7]
      %v4355 = vld [vmem:[%s2109 + $0xc] sm:$0x7]
      %v4360 = vrot.slane %v4352, 2
      %v4361 = vrot.slane %v4353, 2
      %v4362 = vrot.slane %v4354, 2
      %v4363 = vrot.slane %v4355, 2
      %v4366 = vsel %vm347, %v4352, %v4360
      %v4367 = vsel %vm351, %v4352, %v4360
      %v4369 = vrot.slane %v4367, 2
      %v4372 = vsel %vm347, %v4353, %v4361
      %v4373 = vsel %vm351, %v4353, %v4361
      %v4375 = vrot.slane %v4373, 2
      %v4378 = vsel %vm347, %v4354, %v4362
      %v4379 = vsel %vm351, %v4354, %v4362
      %v4381 = vrot.slane %v4379, 2
      %v4384 = vsel %vm347, %v4355, %v4363
      %v4385 = vsel %vm351, %v4355, %v4363
      %v4387 = vrot.slane %v4385, 2
      %v4388 = vshrl.u32 %v4366, 16
      %v4390 = vrot.slane %v4388, 6
      %v4391 = vshll.u32 %v4366, 16
      %v4393 = vrot.slane %v4391, 7
      %v4394 = vor.u32 %v4390, %v4393
      %v4395 = vrot.slane %v4394, 2
      %v4397 = vshll.u32 %v4369, 16
      %v4399 = vrot.slane %v4397, 7
      %v4400 = vsel %vm379, %v4395, %v4399
      %v4401 = vshrl.u32 %v4372, 16
      %v4403 = vrot.slane %v4401, 6
      %v4404 = vshll.u32 %v4372, 16
      %v4406 = vrot.slane %v4404, 7
      %v4407 = vor.u32 %v4403, %v4406
      %v4408 = vrot.slane %v4407, 2
      %v4410 = vshll.u32 %v4375, 16
      %v4412 = vrot.slane %v4410, 7
      %v4413 = vsel %vm379, %v4408, %v4412
      %v4414 = vshrl.u32 %v4378, 16
      %v4416 = vrot.slane %v4414, 6
      %v4417 = vshll.u32 %v4378, 16
      %v4419 = vrot.slane %v4417, 7
      %v4420 = vor.u32 %v4416, %v4419
      %v4421 = vrot.slane %v4420, 2
      %v4423 = vshll.u32 %v4381, 16
      %v4425 = vrot.slane %v4423, 7
      %v4426 = vsel %vm379, %v4421, %v4425
      %v4427 = vshrl.u32 %v4384, 16
      %v4429 = vrot.slane %v4427, 6
      %v4430 = vshll.u32 %v4384, 16
      %v4432 = vrot.slane %v4430, 7
      %v4433 = vor.u32 %v4429, %v4432
      %v4434 = vrot.slane %v4433, 2
      %v4436 = vshll.u32 %v4387, 16
      %v4438 = vrot.slane %v4436, 7
      %v4439 = vsel %vm379, %v4434, %v4438
      %s4440 = scalar_lea.vmem %s7, 224
      %v4441 = vld [vmem:[%s4440] sm:$0xf]
      %v4442 = vld [vmem:[%s4440 + $0x4] sm:$0xf]
      %v4443 = vld [vmem:[%s4440 + $0x8] sm:$0xf]
      %v4444 = vld [vmem:[%s4440 + $0xc] sm:$0xf]
      %v4445 = vld [vmem:[%s4440 + $0x10] sm:$0xf]
      %v4446 = vld [vmem:[%s4440 + $0x14] sm:$0xf]
      %v4447 = vld [vmem:[%s4440 + $0x18] sm:$0xf]
      %v4448 = vld [vmem:[%s4440 + $0x1c] sm:$0xf]
      %4450 = vst [vmem:[#allocation1] ss:$4 sm:$0xff] %v4400
      %s4452 = scalar_lea.vmem [#allocation1], 1
      %4453 = vst [vmem:[%s4452] ss:$4 sm:$0xff] %v4413
      %s4455 = scalar_lea.vmem [#allocation1], 2
      %4456 = vst [vmem:[%s4455] ss:$4 sm:$0xff] %v4426
      %s4458 = scalar_lea.vmem [#allocation1], 3
      %4459 = vst [vmem:[%s4458] ss:$4 sm:$0xff] %v4439
      %v4460 = vld.sshfl [vmem:[#allocation1] sm:$0xff pattern:$0x73625140]
      %v4469 = vunpack.c.l.b16 %v4441
      %v4470 = vunpack.c.l.b16 %v4442
      %v4471 = vunpack.c.l.b16 %v4443
      %v4472 = vunpack.c.l.b16 %v4444
      %v4473 = vunpack.c.l.b16 %v4445
      %v4474 = vunpack.c.l.b16 %v4446
      %v4475 = vunpack.c.l.b16 %v4447
      %v4476 = vunpack.c.l.b16 %v4448
      %v4477 = vpack.c.b16 %v4470, %v4469
      %v4478 = vpack.c.b16 %v4472, %v4471
      %v4479 = vpack.c.b16 %v4474, %v4473
      %v4480 = vpack.c.b16 %v4476, %v4475
      %v4485 = vsel %vm585, %v4460, 0
      %4487 = vmatpush.bf16.msra.mxu0 0
      %4488 = vmatpush.bf16.msra.mxu0 0
      %4489 = vmatpush.bf16.msra.mxu0 0
      %4490 = vmatpush.bf16.msra.mxu0 0
      %4491 = vmatpush.bf16.msra.mxu0 %v4480
      %4492 = vmatpush.bf16.msra.mxu0 %v4479
      %4493 = vmatpush.bf16.msra.mxu0 %v4478
      %4494 = vmatpush.bf16.msra.mxu0 %v4477
      %4495 = vmatmul.bf16.gmra.mxu0 %v4485
      %v4496 = vpop.f32.mrf.mxu0
      %v4497 = vadd.f32 0.0, %v4496
      %v4498 = vpop.f32.mrf.mxu0
      %v4499 = vadd.f32 0.0, %v4498
      %4500 = vdwg.mxu0
      %v4501 = vadd.f32 %v4350, %v4497
      %v4502 = vadd.f32 %v4351, %v4499
      %v4503 = vld [vmem:[%s2109] sm:$0x6]
      %v4504 = vld [vmem:[%s2109 + $0x4] sm:$0x6]
      %v4505 = vld [vmem:[%s2109 + $0x8] sm:$0x6]
      %v4506 = vld [vmem:[%s2109 + $0xc] sm:$0x6]
      %v4511 = vrot.slane %v4503, 2
      %v4512 = vrot.slane %v4504, 2
      %v4513 = vrot.slane %v4505, 2
      %v4514 = vrot.slane %v4506, 2
      %v4517 = vsel %vm347, %v4503, %v4511
      %v4519 = vsel %vm351, %v4503, %v4511
      %v4521 = vrot.slane %v4519, 2
      %v4524 = vsel %vm347, %v4504, %v4512
      %v4526 = vsel %vm351, %v4504, %v4512
      %v4528 = vrot.slane %v4526, 2
      %v4531 = vsel %vm347, %v4505, %v4513
      %v4533 = vsel %vm351, %v4505, %v4513
      %v4535 = vrot.slane %v4533, 2
      %v4538 = vsel %vm347, %v4506, %v4514
      %v4540 = vsel %vm351, %v4506, %v4514
      %v4542 = vrot.slane %v4540, 2
      %v4543 = vrot.slane %v4517, 7
      %v4544 = vrot.slane %v4543, 2
      %v4545 = vrot.slane %v4521, 7
      %v4546 = vsel %vm700, %v4544, %v4545
      %v4547 = vrot.slane %v4524, 7
      %v4548 = vrot.slane %v4547, 2
      %v4549 = vrot.slane %v4528, 7
      %v4550 = vsel %vm700, %v4548, %v4549
      %v4551 = vrot.slane %v4531, 7
      %v4552 = vrot.slane %v4551, 2
      %v4553 = vrot.slane %v4535, 7
      %v4554 = vsel %vm700, %v4552, %v4553
      %v4555 = vrot.slane %v4538, 7
      %v4556 = vrot.slane %v4555, 2
      %v4557 = vrot.slane %v4542, 7
      %v4558 = vsel %vm700, %v4556, %v4557
      %s4559 = scalar_lea.vmem %s7, 256
      %v4560 = vld [vmem:[%s4559] sm:$0xf]
      %v4561 = vld [vmem:[%s4559 + $0x4] sm:$0xf]
      %v4562 = vld [vmem:[%s4559 + $0x8] sm:$0xf]
      %v4563 = vld [vmem:[%s4559 + $0xc] sm:$0xf]
      %v4564 = vld [vmem:[%s4559 + $0x10] sm:$0xf]
      %v4565 = vld [vmem:[%s4559 + $0x14] sm:$0xf]
      %v4566 = vld [vmem:[%s4559 + $0x18] sm:$0xf]
      %v4567 = vld [vmem:[%s4559 + $0x1c] sm:$0xf]
      %4569 = vst [vmem:[#allocation1] ss:$4 sm:$0xff] %v4546
      %s4571 = scalar_lea.vmem [#allocation1], 1
      %4572 = vst [vmem:[%s4571] ss:$4 sm:$0xff] %v4550
      %s4574 = scalar_lea.vmem [#allocation1], 2
      %4575 = vst [vmem:[%s4574] ss:$4 sm:$0xff] %v4554
      %s4577 = scalar_lea.vmem [#allocation1], 3
      %4578 = vst [vmem:[%s4577] ss:$4 sm:$0xff] %v4558
      %v4579 = vld.sshfl [vmem:[#allocation1] sm:$0xff pattern:$0x73625140]
      %v4588 = vunpack.c.l.b16 %v4560
      %v4589 = vunpack.c.l.b16 %v4561
      %v4590 = vunpack.c.l.b16 %v4562
      %v4591 = vunpack.c.l.b16 %v4563
      %v4592 = vunpack.c.l.b16 %v4564
      %v4593 = vunpack.c.l.b16 %v4565
      %v4594 = vunpack.c.l.b16 %v4566
      %v4595 = vunpack.c.l.b16 %v4567
      %v4596 = vpack.c.b16 %v4589, %v4588
      %v4597 = vpack.c.b16 %v4591, %v4590
      %v4598 = vpack.c.b16 %v4593, %v4592
      %v4599 = vpack.c.b16 %v4595, %v4594
      %v4604 = vsel %vm585, %v4579, 0
      %4606 = vmatpush.bf16.msra.mxu0 0
      %4607 = vmatpush.bf16.msra.mxu0 0
      %4608 = vmatpush.bf16.msra.mxu0 0
      %4609 = vmatpush.bf16.msra.mxu0 0
      %4610 = vmatpush.bf16.msra.mxu0 %v4599
      %4611 = vmatpush.bf16.msra.mxu0 %v4598
      %4612 = vmatpush.bf16.msra.mxu0 %v4597
      %4613 = vmatpush.bf16.msra.mxu0 %v4596
      %4614 = vmatmul.bf16.gmra.mxu0 %v4604
      %v4615 = vpop.f32.mrf.mxu0
      %v4616 = vadd.f32 0.0, %v4615
      %v4617 = vpop.f32.mrf.mxu0
      %v4618 = vadd.f32 0.0, %v4617
      %4619 = vdwg.mxu0
      %v4620 = vadd.f32 %v4501, %v4616
      %v4621 = vadd.f32 %v4502, %v4618
      %v4622 = vld [vmem:[%s8] sm:$0x1]
      %v4624 = vperm.slane %v4622, 0
      %v4626 = vadd.f32 %v4620, %v4624
      %v4627 = vadd.f32 %v4621, %v4624
      %4632 = vst [vmem:[#allocation1] ss:$2 sm:$0xff] %v2625
      %s4633 = scalar_lea.vmem [#allocation1], 1
      %4634 = vst [vmem:[%s4633] ss:$2 sm:$0xff] %v2626
      %s4635 = scalar_lea.vmem [#allocation1], 16
      %4636 = vst [vmem:[%s4635] ss:$2 sm:$0xff] %v2627
      %s4637 = scalar_lea.vmem [#allocation1], 17
      %4638 = vst [vmem:[%s4637] ss:$2 sm:$0xff] %v2628
      %v4639 = vld.sshfl [vmem:[#allocation1] sm:$0xff pattern:$0x75316420]
      %v4640 = vld.sshfl [vmem:[#allocation1 + $0x10] sm:$0xff pattern:$0x75316420]
      %v4643 = vadd.f32 %v4626, %v4639
      %v4644 = vadd.f32 %v4627, %v4640
      %v4645 = vmax.f32 %v4643, 0.0
      %v4646 = vmax.f32 %v4644, 0.0
      %4647 = vst.msk [vmem:[%s332] sm:$0x7] %vm1375, 0
      %4648 = vst.msk [vmem:[%s332 + $0x4] sm:$0x7] %vm1375, 0
      %4649 = vst.msk [vmem:[%s332 + $0x8] sm:$0x7] %vm1375, 0
      %4650 = vst.msk [vmem:[%s332 + $0xc] sm:$0x7] %vm1375, 0
      %4651 = vst.msk [vmem:[%s332 + $0x10] sm:$0x7] %vm1375, 0
      %4652 = vst.msk [vmem:[%s332 + $0x14] sm:$0x7] %vm1375, 0
      %v4655 = vrot.slane %v4645, 4
      %v4656 = vrot.slane %v4646, 4
      %v4659 = vpack.c.bf16 %v4645, %v4645
      %v4660 = vpack.c.bf16 %v4655, %v4655
      %v4661 = vpack.c.bf16 %v4646, %v4646
      %v4662 = vpack.c.bf16 %v4656, %v4656
      %v4664 = vshrl.u32 %v4659, 16
      %v4666 = vrot.slane %v4664, 7
      %v4667 = vshll.u32 %v4659, 16
      %v4669 = vor.u32 %v4666, %v4667
      %v4671 = vshrl.u32 %v4660, 16
      %v4673 = vrot.slane %v4671, 7
      %v4674 = vshll.u32 %v4660, 16
      %v4676 = vor.u32 %v4673, %v4674
      %v4678 = vshrl.u32 %v4661, 16
      %v4680 = vrot.slane %v4678, 7
      %v4681 = vshll.u32 %v4661, 16
      %v4683 = vor.u32 %v4680, %v4681
      %v4685 = vshrl.u32 %v4662, 16
      %v4687 = vrot.slane %v4685, 7
      %v4688 = vshll.u32 %v4662, 16
      %v4690 = vor.u32 %v4687, %v4688
      %s4695 = scalar_lea.vmem %s332, 4
      %v4696 = vld [vmem:[%s4695] sm:$0x7]
      %v4697 = vsel %vm1427, %v4669, %v4696
      %4698 = vst [vmem:[%s4695] sm:$0x7] %v4697
      %v4699 = vld [vmem:[%s4695 + $0x4] sm:$0x7]
      %v4700 = vsel %vm1427, %v4676, %v4699
      %4701 = vst [vmem:[%s4695 + $0x4] sm:$0x7] %v4700
      %v4702 = vld [vmem:[%s4695 + $0x8] sm:$0x7]
      %v4703 = vsel %vm1427, %v4683, %v4702
      %4704 = vst [vmem:[%s4695 + $0x8] sm:$0x7] %v4703
      %v4705 = vld [vmem:[%s4695 + $0xc] sm:$0x7]
      %v4706 = vsel %vm1427, %v4690, %v4705
      %4707 = vst [vmem:[%s4695 + $0xc] sm:$0x7] %v4706
      %p4708 = scmp.lt.s32.totalorder %s20, 1
      %s4709 = scalar_select %p4708, %s20, 1
      %s4710 = smul.addr %s4709, 6
      %s4711 = smul.addr %s4710, 4
      %s4712 = scalar_lea.vmem %s9, %s4711
      // Predicated region
      $region57: #{sresnet_forward.4} parent=55 // pred_check
        %p4713 = pneg %p232
      $region58: #{sresnet_forward.4} parent=55 // pred_check_branch
        %4715 = sbr.rel (%p4713) target = $region60
      $region59: #{sresnet_forward.4} parent=55 // pred_region
        _
      $region60: #{sresnet_forward.4} parent=55 // pred_fallthru
        _
    $region56: #{sresnet_forward.4} parent=5 // pred_fallthru
      _
    %p4716 = scmp.le.s32.totalorder 2, %s15
    // Predicated region
    $region61: #{sresnet_forward.4} parent=5 // pred_check
      %p4717 = pneg %p4716
    $region62: #{sresnet_forward.4} parent=5 // pred_check_branch
      %4719 = sbr.rel (%p4717) target = $region64
    $region63: #{sresnet_forward.4} parent=5 // pred_region
      %s4720 = ssub.s32 %s15, 2
      // Predicated region
      $region65: #{sresnet_forward.4} parent=63 // pred_check
        %p4721 = pneg %p238
      $region66: #{sresnet_forward.4} parent=63 // pred_check_branch
        %4723 = sbr.rel (%p4721) target = $region68
      $region67: #{sresnet_forward.4} parent=63 // pred_region
        %p4724 = scmp.lt.s32.totalorder %s21, 1
        %s4725 = scalar_select %p4724, %s21, 1
        %s4726 = smul.addr %s4725, 6
        %s4727 = smul.addr %s4726, 4
        %s4728 = scalar_lea.vmem %s9, %s4727
      $region68: #{sresnet_forward.4} parent=63 // pred_fallthru
        _
    $region64: #{sresnet_forward.4} parent=5 // pred_fallthru
      _
  $region6: #{sresnet_forward.4} parent=0 // loop_footer
    %s19 = sadd.s32 1, %s15
  $region7: #{sresnet_forward.4} parent=0 // loop_footer_branch
    %14 = sbr.rel target = $region3
  $region8: #{sresnet_forward.4} parent=0 // loop_exit
    _

</llo_original>
